<compile_context>
chip_gen: v6e
topology: v6e:2x2x1
jax: 0.10.0
libtpu: 0.0.40
codegen_flags: <defaults>
</compile_context>

<pallas_src>
import jax
import jax.numpy as jnp
from jax.experimental import pallas as pl
from jax.experimental.pallas import tpu as pltpu


def _round_up(v, m):
    return ((v + m - 1) // m) * m


def _pick_batch_tile(B, max_tile=256):
    """Batch rows per grid step.

    Prefer 2 steps (one per v7x TensorCore) when both halves keep an 8-row-aligned
    output store; otherwise one full-batch step (v5e/v6e: zero pipeline overhead).
    For very large batches, fall back to the largest 8-aligned divisor <= max_tile.
    """
    if B % 2 == 0 and (B // 2) % 8 == 0 and (B // 2) <= max_tile:
        return B // 2
    if B <= max_tile:
        return B
    for bt in range(max_tile - (max_tile % 8), 7, -8):
        if B % bt == 0:
            return bt
    return B  # single full-batch step as a safe fallback


def _make_cnn_cutted_kernel(kernel_sizes, co_pads, seq_len):
    """Fused conv + bias + ReLU + max-over-time + fc kernel for one batch tile."""
    n = len(kernel_sizes)

    def kernel(*refs):
        # refs layout: x, conv_w[0..n), bias_pack, fc_w, fc_b, out
        x_ref = refs[0]
        conv_w_refs = refs[1:1 + n]       # each (D, k_i * Co_pad_i), bf16
        bpack_ref = refs[1 + n]           # (n, Co_pad_max), f32
        fcw_ref = refs[2 + n]             # (F_pad, C_pad), bf16
        fcb_ref = refs[3 + n]             # (1, C_pad), f32
        o_ref = refs[4 + n]               # (Bt, C_pad), f32

        Bt, S, D = x_ref.shape
        M = Bt * S
        xf = x_ref[...].reshape(M, D)     # bf16, (Bt*S, D) -- M rows fill MXU sublanes

        # Row index within each sequence, for masking conv rows past L = S - k + 1.
        row_in_seq = jax.lax.broadcasted_iota(jnp.int32, (M, 1), 0) % seq_len

        pooled = []
        for i, (k, cop) in enumerate(zip(kernel_sizes, co_pads)):
            L = seq_len - k + 1
            # All k taps in ONE MXU matmul: (M, D) @ (D, k*cop) -> (M, k*cop), f32 acc.
            y = jnp.dot(xf, conv_w_refs[i][...], preferred_element_type=jnp.float32)

            # Tap alignment via XLU rolls on lane-aligned slices (no sublane-offset
            # loads).  Wrap-around / cross-sequence rows all land in l >= L and are
            # masked below.
            acc = y[:, :cop]
            for j in range(1, k):
                acc = acc + pltpu.roll(y[:, j * cop:(j + 1) * cop],
                                       shift=M - j, axis=0)

            act = jnp.maximum(acc + bpack_ref[i:i + 1, :cop], 0.0)   # bias + ReLU (f32)
            act = jnp.where(row_in_seq < L, act, 0.0)                # invalid rows -> 0
            # max-over-time per batch row (ReLU output >= 0, so the 0 rows are neutral).
            pooled.append(jnp.max(act.reshape(Bt, seq_len, cop), axis=1))  # (Bt, cop)

        feats = pooled[0] if n == 1 else jnp.concatenate(pooled, axis=-1)  # (Bt, F_pad)

        # Single deferred fc matmul; padded channel rows / class columns are zero.
        logits = fcb_ref[...] + jnp.dot(feats.astype(fcw_ref.dtype), fcw_ref[...],
                                        preferred_element_type=jnp.float32)
        o_ref[...] = logits.astype(o_ref.dtype)                      # (Bt, C_pad) vst

    return kernel


def cnn_cutted_forward(x, conv_weights, conv_biases, fc_weight, fc_bias):
    """Fused Pallas forward of CNN_cutted.

    Args:
      x:            (B, 1, S, D)  bottleneck activation (post-embedding, unsqueezed).
      conv_weights: list of (Co_i, 1, k_i, D) arrays (PyTorch Conv2d layout).
      conv_biases:  list of (Co_i,) arrays.
      fc_weight:    (C, sum(Co_i)) array (PyTorch Linear layout).
      fc_bias:      (C,) array.
    Returns:
      logits (B, C), float32.
    """
    B, in_ch, S, D = x.shape
    assert in_ch == 1, "Conv2d in_channels must be 1 for this text-CNN tail"
    n = len(conv_weights)
    kernel_sizes = tuple(int(w.shape[2]) for w in conv_weights)
    cos = tuple(int(w.shape[0]) for w in conv_weights)          # per-branch Co
    co_pads = tuple(max(128, _round_up(c, 128)) for c in cos)   # lane-dense per branch
    C = int(fc_weight.shape[0])
    F = sum(cos)
    assert int(fc_weight.shape[1]) == F
    C_pad = max(128, _round_up(C, 128))
    F_pad = sum(co_pads)
    co_pad_max = max(co_pads)

    # bf16 activations (halves DMA bytes / VMEM, MXU-native); f32 accumulation in-kernel.
    x3 = x[:, 0].astype(jnp.bfloat16)                            # (B, S, D)

    # One-time plain-JAX parameter re-layout (no in-kernel transposes):
    #   conv (Co,1,k,D) -> (D, k*Co_pad) bf16, tap j in lane block [j*Co_pad, (j+1)*Co_pad)
    conv_w_packed = []
    for w, k, co, cop in zip(conv_weights, kernel_sizes, cos, co_pads):
        wt = jnp.transpose(w[:, 0], (1, 2, 0)).astype(jnp.float32)          # (k, D, Co)
        wp = jnp.zeros((k, D, cop), jnp.float32).at[:, :, :co].set(wt)
        wp = jnp.transpose(wp, (1, 0, 2)).reshape(D, k * cop)               # (D, k*Co_pad)
        conv_w_packed.append(wp.astype(jnp.bfloat16))

    # Biases packed into a single input ref (fewer per-step DMA descriptors).
    b_pack = jnp.zeros((n, co_pad_max), jnp.float32)
    for i, (b, co) in enumerate(zip(conv_biases, cos)):
        b_pack = b_pack.at[i, :co].set(b.astype(jnp.float32))

    # fc (C, F) -> (F_pad, C_pad); row blocks follow the padded branch layout.
    fc_w_p = jnp.zeros((F_pad, C_pad), jnp.float32)
    src_off = dst_off = 0
    for co, cop in zip(cos, co_pads):
        fc_w_p = fc_w_p.at[dst_off:dst_off + co, :C].set(
            fc_weight[:, src_off:src_off + co].T.astype(jnp.float32))
        src_off += co
        dst_off += cop
    fc_w_p = fc_w_p.astype(jnp.bfloat16)
    fc_b_p = jnp.zeros((1, C_pad), jnp.float32).at[0, :C].set(fc_bias.astype(jnp.float32))

    Bt = _pick_batch_tile(B)
    assert B % Bt == 0
    num_tiles = B // Bt

    kernel = _make_cnn_cutted_kernel(kernel_sizes, co_pads, S)

    flops = int(2 * B * sum(S * D * k * cop for k, cop in zip(kernel_sizes, co_pads))
                + 2 * B * F_pad * C_pad)
    bytes_accessed = int(x3.size * 2
                         + sum(w.size for w in conv_w_packed) * 2
                         + b_pack.size * 4 + fc_w_p.size * 2 + fc_b_p.size * 4
                         + B * C_pad * 4)

    in_specs = (
        [pl.BlockSpec((Bt, S, D), lambda b: (b, 0, 0))]
        + [pl.BlockSpec(w.shape, lambda b: (0, 0)) for w in conv_w_packed]
        + [pl.BlockSpec((n, co_pad_max), lambda b: (0, 0)),
           pl.BlockSpec((F_pad, C_pad), lambda b: (0, 0)),
           pl.BlockSpec((1, C_pad), lambda b: (0, 0))]
    )

    out = pl.pallas_call(
        kernel,
        out_shape=jax.ShapeDtypeStruct((B, C_pad), jnp.float32),
        grid_spec=pltpu.PrefetchScalarGridSpec(
            num_scalar_prefetch=0,
            grid=(num_tiles,),
            in_specs=in_specs,
            out_specs=pl.BlockSpec((Bt, C_pad), lambda b: (b, 0)),
        ),
        compiler_params=pltpu.CompilerParams(
            # Batch tiles are independent -> megacore/parallel sharding (v7x: 2 TCs).
            dimension_semantics=("parallel",),
        ),
        cost_estimate=pl.CostEstimate(flops=flops, transcendentals=0,
                                      bytes_accessed=bytes_accessed),
    )(x3, *conv_w_packed, b_pack, fc_w_p, fc_b_p)

    return out[:, :C]


def reference_forward(x, conv_weights, conv_biases, fc_weight, fc_bias):
    """Pure-JAX f32 reference matching the PyTorch forward exactly."""
    feats = []
    for w, b in zip(conv_weights, conv_biases):
        y = jax.lax.conv_general_dilated(
            x, w, window_strides=(1, 1), padding="VALID",
            dimension_numbers=("NCHW", "OIHW", "NCHW"))              # (B, Co, L, 1)
        y = jnp.maximum(y + b[None, :, None, None], 0.0)[:, :, :, 0]  # relu + squeeze(3)
        feats.append(jnp.max(y, axis=2))                              # max_pool1d + squeeze(2)
    h = jnp.concatenate(feats, axis=1)                                # cat(x, 1)
    # dropout -> identity (eval mode)
    return h @ fc_weight.T + fc_bias                                  # fc -> logits


if __name__ == "__main__":
    # Small Kim-CNN tail shapes; Co=100 deliberately exercises the lane-padding path.
    B, S, D = 16, 16, 128           # batch, seq_len, embed_dim
    kernel_sizes = (3, 4, 5)        # conv kernel heights
    Co = 100                        # filters per kernel size (padded to 128 internally)
    C = 10                          # num classes (padded to 128 internally)

    key = jax.random.PRNGKey(0)
    keys = jax.random.split(key, 3 + 2 * len(kernel_sizes))

    x = jax.random.normal(keys[0], (B, 1, S, D), dtype=jnp.float32)
    conv_weights, conv_biases = [], []
    for i, k in enumerate(kernel_sizes):
        conv_weights.append(
            jax.random.normal(keys[1 + 2 * i], (Co, 1, k, D), dtype=jnp.float32) * 0.05)
        conv_biases.append(
            jax.random.normal(keys[2 + 2 * i], (Co,), dtype=jnp.float32) * 0.1)
    fc_weight = jax.random.normal(keys[-2], (C, len(kernel_sizes) * Co), dtype=jnp.float32) * 0.05
    fc_bias = jax.random.normal(keys[-1], (C,), dtype=jnp.float32) * 0.1

    logits = cnn_cutted_forward(x, conv_weights, conv_biases, fc_weight, fc_bias)
    jax.block_until_ready(logits)

    ref = reference_forward(x, conv_weights, conv_biases, fc_weight, fc_bias)
    assert logits.shape == (B, C)
    max_err = float(jnp.max(jnp.abs(logits - ref)))
    # Tolerance covers bf16 MXU operands (f32 accumulation) vs the f32 XLA reference.
    assert jnp.allclose(logits, ref, atol=5e-2, rtol=5e-2), f"max abs err = {max_err}"

    print("KERNEL_OK")
</pallas_src>

<mosaic_0001>
module attributes {stable_mosaic.version = 11 : i64} {
  func.func @kernel(%arg0: i32, %arg1: memref<8x16x128xbf16, #tpu.memory_space<vmem>>, %arg2: memref<128x384xbf16, #tpu.memory_space<vmem>>, %arg3: memref<128x512xbf16, #tpu.memory_space<vmem>>, %arg4: memref<128x640xbf16, #tpu.memory_space<vmem>>, %arg5: memref<3x128xf32, #tpu.memory_space<vmem>>, %arg6: memref<384x128xbf16, #tpu.memory_space<vmem>>, %arg7: memref<1x128xf32, #tpu.memory_space<vmem>>, %arg8: memref<8x128xf32, #tpu.memory_space<vmem>>) attributes {dimension_semantics = [#tpu.dimension_semantics<parallel>], iteration_bounds = array<i64: 2>, scalar_prefetch = 0 : i64, scratch_operands = 0 : i64, tpu.core_type = #tpu.core_type<tc>, window_params = [{transform_indices = @transform_0, window_bounds = array<i64: 8, 16, 128>}, {pipeline_mode = #tpu.pipeline_mode<synchronous>, transform_indices = @transform_1, window_bounds = array<i64: 128, 384>}, {pipeline_mode = #tpu.pipeline_mode<synchronous>, transform_indices = @transform_2, window_bounds = array<i64: 128, 512>}, {pipeline_mode = #tpu.pipeline_mode<synchronous>, transform_indices = @transform_3, window_bounds = array<i64: 128, 640>}, {pipeline_mode = #tpu.pipeline_mode<synchronous>, transform_indices = @transform_4, window_bounds = array<i64: 3, 128>}, {pipeline_mode = #tpu.pipeline_mode<synchronous>, transform_indices = @transform_5, window_bounds = array<i64: 384, 128>}, {pipeline_mode = #tpu.pipeline_mode<synchronous>, transform_indices = @transform_6, window_bounds = array<i64: 1, 128>}, {transform_indices = @transform_7, window_bounds = array<i64: 8, 128>}]} {
    %c0 = arith.constant 0 : index
    %c0_0 = arith.constant 0 : index
    %c0_1 = arith.constant 0 : index
    %0 = vector.load %arg1[%c0, %c0_0, %c0_1] : memref<8x16x128xbf16, #tpu.memory_space<vmem>>, vector<8x16x128xbf16>
    %1 = vector.shape_cast %0 : vector<8x16x128xbf16> to vector<128x128xbf16>
    %2 = tpu.iota {dimensions = array<i32: 0>} : vector<128x1xi32>
    %c16_i32 = arith.constant 16 : i32
    %c0_i32 = arith.constant 0 : i32
    %3 = arith.cmpi eq, %c16_i32, %c0_i32 : i32
    %c1_i32 = arith.constant 1 : i32
    %4 = arith.select %3, %c1_i32, %c16_i32 : i32
    %5 = vector.broadcast %4 : i32 to vector<128x1xi32>
    %6 = arith.remsi %2, %5 : vector<128x1xi32>
    %c0_i32_2 = arith.constant 0 : i32
    %7 = vector.broadcast %c0_i32_2 : i32 to vector<128x1xi32>
    %8 = arith.cmpi ne, %6, %7 : vector<128x1xi32>
    %c0_i32_3 = arith.constant 0 : i32
    %9 = vector.broadcast %c0_i32_3 : i32 to vector<128x1xi32>
    %10 = arith.cmpi slt, %6, %9 : vector<128x1xi32>
    %c0_i32_4 = arith.constant 0 : i32
    %11 = arith.cmpi slt, %4, %c0_i32_4 : i32
    %12 = vector.broadcast %11 : i1 to vector<128x1xi1>
    %13 = vector.broadcast %12 : vector<128x1xi1> to vector<128x1xi1>
    %14 = arith.xori %10, %13 : vector<128x1xi1>
    %15 = arith.andi %14, %8 : vector<128x1xi1>
    %16 = vector.broadcast %4 : i32 to vector<128x1xi32>
    %17 = arith.addi %6, %16 : vector<128x1xi32>
    %18 = arith.select %15, %17, %6 : vector<128x1xi1>, vector<128x1xi32>
    %c0_5 = arith.constant 0 : index
    %c0_6 = arith.constant 0 : index
    %19 = vector.load %arg2[%c0_5, %c0_6] : memref<128x384xbf16, #tpu.memory_space<vmem>>, vector<128x384xbf16>
    %cst = arith.constant dense<0.000000e+00> : vector<128x384xf32>
    %20 = tpu.matmul %1, %19, %cst {dimension_numbers = #tpu.dot_dimension_numbers<[1], [0], [0], [1], [0, 0, 1, 1], [], []>} : vector<128x128xbf16>, vector<128x384xbf16>, vector<128x384xf32> -> vector<128x384xf32>
    %21 = vector.extract_strided_slice %20 {offsets = [0, 0], sizes = [128, 128], strides = [1, 1]} : vector<128x384xf32> to vector<128x128xf32>
    %22 = vector.extract_strided_slice %20 {offsets = [0, 128], sizes = [128, 128], strides = [1, 1]} : vector<128x384xf32> to vector<128x128xf32>
    %c127_i32 = arith.constant 127 : i32
    %23 = tpu.dynamic_rotate %22 by %c127_i32 dim 0 : vector<128x128xf32>, i32 -> vector<128x128xf32>
    %24 = arith.addf %21, %23 : vector<128x128xf32>
    %25 = vector.extract_strided_slice %20 {offsets = [0, 256], sizes = [128, 128], strides = [1, 1]} : vector<128x384xf32> to vector<128x128xf32>
    %c126_i32 = arith.constant 126 : i32
    %26 = tpu.dynamic_rotate %25 by %c126_i32 dim 0 : vector<128x128xf32>, i32 -> vector<128x128xf32>
    %27 = arith.addf %24, %26 : vector<128x128xf32>
    %c0_7 = arith.constant 0 : index
    %c0_8 = arith.constant 0 : index
    %28 = vector.load %arg5[%c0_7, %c0_8] : memref<3x128xf32, #tpu.memory_space<vmem>>, vector<1x128xf32>
    %29 = vector.broadcast %28 : vector<1x128xf32> to vector<128x128xf32>
    %30 = arith.addf %27, %29 : vector<128x128xf32>
    %cst_9 = arith.constant 0.000000e+00 : f32
    %31 = vector.broadcast %cst_9 : f32 to vector<128x128xf32>
    %32 = arith.maximumf %30, %31 : vector<128x128xf32>
    %c14_i32 = arith.constant 14 : i32
    %33 = vector.broadcast %c14_i32 : i32 to vector<128x1xi32>
    %34 = arith.cmpi slt, %18, %33 : vector<128x1xi32>
    %cst_10 = arith.constant 0.000000e+00 : f32
    %35 = vector.shape_cast %34 : vector<128x1xi1> to vector<128x1xi1>
    %36 = vector.broadcast %35 : vector<128x1xi1> to vector<128x128xi1>
    %37 = vector.broadcast %cst_10 : f32 to vector<128x128xf32>
    %38 = arith.select %36, %32, %37 : vector<128x128xi1>, vector<128x128xf32>
    %39 = vector.shape_cast %38 : vector<128x128xf32> to vector<8x16x128xf32>
    %cst_11 = arith.constant dense<0xFF800000> : vector<8x128xf32>
    %40 = vector.multi_reduction <maximumf>, %39, %cst_11 [1] : vector<8x16x128xf32> to vector<8x128xf32>
    %c0_12 = arith.constant 0 : index
    %c0_13 = arith.constant 0 : index
    %41 = vector.load %arg3[%c0_12, %c0_13] : memref<128x512xbf16, #tpu.memory_space<vmem>>, vector<128x512xbf16>
    %cst_14 = arith.constant dense<0.000000e+00> : vector<128x512xf32>
    %42 = tpu.matmul %1, %41, %cst_14 {dimension_numbers = #tpu.dot_dimension_numbers<[1], [0], [0], [1], [0, 0, 1, 1], [], []>} : vector<128x128xbf16>, vector<128x512xbf16>, vector<128x512xf32> -> vector<128x512xf32>
    %43 = vector.extract_strided_slice %42 {offsets = [0, 0], sizes = [128, 128], strides = [1, 1]} : vector<128x512xf32> to vector<128x128xf32>
    %44 = vector.extract_strided_slice %42 {offsets = [0, 128], sizes = [128, 128], strides = [1, 1]} : vector<128x512xf32> to vector<128x128xf32>
    %c127_i32_15 = arith.constant 127 : i32
    %45 = tpu.dynamic_rotate %44 by %c127_i32_15 dim 0 : vector<128x128xf32>, i32 -> vector<128x128xf32>
    %46 = arith.addf %43, %45 : vector<128x128xf32>
    %47 = vector.extract_strided_slice %42 {offsets = [0, 256], sizes = [128, 128], strides = [1, 1]} : vector<128x512xf32> to vector<128x128xf32>
    %c126_i32_16 = arith.constant 126 : i32
    %48 = tpu.dynamic_rotate %47 by %c126_i32_16 dim 0 : vector<128x128xf32>, i32 -> vector<128x128xf32>
    %49 = arith.addf %46, %48 : vector<128x128xf32>
    %50 = vector.extract_strided_slice %42 {offsets = [0, 384], sizes = [128, 128], strides = [1, 1]} : vector<128x512xf32> to vector<128x128xf32>
    %c125_i32 = arith.constant 125 : i32
    %51 = tpu.dynamic_rotate %50 by %c125_i32 dim 0 : vector<128x128xf32>, i32 -> vector<128x128xf32>
    %52 = arith.addf %49, %51 : vector<128x128xf32>
    %c1 = arith.constant 1 : index
    %c0_17 = arith.constant 0 : index
    %53 = vector.load %arg5[%c1, %c0_17] : memref<3x128xf32, #tpu.memory_space<vmem>>, vector<1x128xf32>
    %54 = vector.broadcast %53 : vector<1x128xf32> to vector<128x128xf32>
    %55 = arith.addf %52, %54 : vector<128x128xf32>
    %cst_18 = arith.constant 0.000000e+00 : f32
    %56 = vector.broadcast %cst_18 : f32 to vector<128x128xf32>
    %57 = arith.maximumf %55, %56 : vector<128x128xf32>
    %c13_i32 = arith.constant 13 : i32
    %58 = vector.broadcast %c13_i32 : i32 to vector<128x1xi32>
    %59 = arith.cmpi slt, %18, %58 : vector<128x1xi32>
    %cst_19 = arith.constant 0.000000e+00 : f32
    %60 = vector.shape_cast %59 : vector<128x1xi1> to vector<128x1xi1>
    %61 = vector.broadcast %60 : vector<128x1xi1> to vector<128x128xi1>
    %62 = vector.broadcast %cst_19 : f32 to vector<128x128xf32>
    %63 = arith.select %61, %57, %62 : vector<128x128xi1>, vector<128x128xf32>
    %64 = vector.shape_cast %63 : vector<128x128xf32> to vector<8x16x128xf32>
    %cst_20 = arith.constant dense<0xFF800000> : vector<8x128xf32>
    %65 = vector.multi_reduction <maximumf>, %64, %cst_20 [1] : vector<8x16x128xf32> to vector<8x128xf32>
    %c0_21 = arith.constant 0 : index
    %c0_22 = arith.constant 0 : index
    %66 = vector.load %arg4[%c0_21, %c0_22] : memref<128x640xbf16, #tpu.memory_space<vmem>>, vector<128x640xbf16>
    %cst_23 = arith.constant dense<0.000000e+00> : vector<128x640xf32>
    %67 = tpu.matmul %1, %66, %cst_23 {dimension_numbers = #tpu.dot_dimension_numbers<[1], [0], [0], [1], [0, 0, 1, 1], [], []>} : vector<128x128xbf16>, vector<128x640xbf16>, vector<128x640xf32> -> vector<128x640xf32>
    %68 = vector.extract_strided_slice %67 {offsets = [0, 0], sizes = [128, 128], strides = [1, 1]} : vector<128x640xf32> to vector<128x128xf32>
    %69 = vector.extract_strided_slice %67 {offsets = [0, 128], sizes = [128, 128], strides = [1, 1]} : vector<128x640xf32> to vector<128x128xf32>
    %c127_i32_24 = arith.constant 127 : i32
    %70 = tpu.dynamic_rotate %69 by %c127_i32_24 dim 0 : vector<128x128xf32>, i32 -> vector<128x128xf32>
    %71 = arith.addf %68, %70 : vector<128x128xf32>
    %72 = vector.extract_strided_slice %67 {offsets = [0, 256], sizes = [128, 128], strides = [1, 1]} : vector<128x640xf32> to vector<128x128xf32>
    %c126_i32_25 = arith.constant 126 : i32
    %73 = tpu.dynamic_rotate %72 by %c126_i32_25 dim 0 : vector<128x128xf32>, i32 -> vector<128x128xf32>
    %74 = arith.addf %71, %73 : vector<128x128xf32>
    %75 = vector.extract_strided_slice %67 {offsets = [0, 384], sizes = [128, 128], strides = [1, 1]} : vector<128x640xf32> to vector<128x128xf32>
    %c125_i32_26 = arith.constant 125 : i32
    %76 = tpu.dynamic_rotate %75 by %c125_i32_26 dim 0 : vector<128x128xf32>, i32 -> vector<128x128xf32>
    %77 = arith.addf %74, %76 : vector<128x128xf32>
    %78 = vector.extract_strided_slice %67 {offsets = [0, 512], sizes = [128, 128], strides = [1, 1]} : vector<128x640xf32> to vector<128x128xf32>
    %c124_i32 = arith.constant 124 : i32
    %79 = tpu.dynamic_rotate %78 by %c124_i32 dim 0 : vector<128x128xf32>, i32 -> vector<128x128xf32>
    %80 = arith.addf %77, %79 : vector<128x128xf32>
    %c2 = arith.constant 2 : index
    %c0_27 = arith.constant 0 : index
    %81 = vector.load %arg5[%c2, %c0_27] : memref<3x128xf32, #tpu.memory_space<vmem>>, vector<1x128xf32>
    %82 = vector.broadcast %81 : vector<1x128xf32> to vector<128x128xf32>
    %83 = arith.addf %80, %82 : vector<128x128xf32>
    %cst_28 = arith.constant 0.000000e+00 : f32
    %84 = vector.broadcast %cst_28 : f32 to vector<128x128xf32>
    %85 = arith.maximumf %83, %84 : vector<128x128xf32>
    %c12_i32 = arith.constant 12 : i32
    %86 = vector.broadcast %c12_i32 : i32 to vector<128x1xi32>
    %87 = arith.cmpi slt, %18, %86 : vector<128x1xi32>
    %cst_29 = arith.constant 0.000000e+00 : f32
    %88 = vector.shape_cast %87 : vector<128x1xi1> to vector<128x1xi1>
    %89 = vector.broadcast %88 : vector<128x1xi1> to vector<128x128xi1>
    %90 = vector.broadcast %cst_29 : f32 to vector<128x128xf32>
    %91 = arith.select %89, %85, %90 : vector<128x128xi1>, vector<128x128xf32>
    %92 = vector.shape_cast %91 : vector<128x128xf32> to vector<8x16x128xf32>
    %cst_30 = arith.constant dense<0xFF800000> : vector<8x128xf32>
    %93 = vector.multi_reduction <maximumf>, %92, %cst_30 [1] : vector<8x16x128xf32> to vector<8x128xf32>
    %94 = tpu.concatenate %40, %65, %93 in 1 : vector<8x128xf32>, vector<8x128xf32>, vector<8x128xf32> -> vector<8x384xf32>
    %c0_31 = arith.constant 0 : index
    %c0_32 = arith.constant 0 : index
    %95 = vector.load %arg7[%c0_31, %c0_32] : memref<1x128xf32, #tpu.memory_space<vmem>>, vector<1x128xf32>
    %96 = arith.truncf %94 : vector<8x384xf32> to vector<8x384xbf16>
    %c0_33 = arith.constant 0 : index
    %c0_34 = arith.constant 0 : index
    %97 = vector.load %arg6[%c0_33, %c0_34] : memref<384x128xbf16, #tpu.memory_space<vmem>>, vector<384x128xbf16>
    %cst_35 = arith.constant dense<0.000000e+00> : vector<8x128xf32>
    %98 = tpu.matmul %96, %97, %cst_35 {dimension_numbers = #tpu.dot_dimension_numbers<[1], [0], [0], [1], [0, 0, 1, 1], [], []>} : vector<8x384xbf16>, vector<384x128xbf16>, vector<8x128xf32> -> vector<8x128xf32>
    %99 = vector.broadcast %95 : vector<1x128xf32> to vector<8x128xf32>
    %100 = arith.addf %99, %98 : vector<8x128xf32>
    %c0_36 = arith.constant 0 : index
    %c0_37 = arith.constant 0 : index
    %101 = vector.load %arg8[%c0_36, %c0_37] : memref<8x128xf32, #tpu.memory_space<vmem>>, vector<8x128xf32>
    tpu.vector_store %arg8[%c0_36, %c0_37], %100 {strides = array<i32>} : memref<8x128xf32, #tpu.memory_space<vmem>>, vector<8x128xf32>,
    return
  }
  func.func @transform_0(%arg0: i32) -> (i32, i32, i32) {
    %c0_i32 = arith.constant 0 : i32
    %c0_i32_0 = arith.constant 0 : i32
    %c0_i32_1 = arith.constant 0 : i32
    return %arg0, %c0_i32, %c0_i32_0 : i32, i32, i32
  }
  func.func @transform_1(%arg0: i32) -> (i32, i32) {
    %c0_i32 = arith.constant 0 : i32
    %c0_i32_0 = arith.constant 0 : i32
    %c0_i32_1 = arith.constant 0 : i32
    return %c0_i32, %c0_i32_0 : i32, i32
  }
  func.func @transform_2(%arg0: i32) -> (i32, i32) {
    %c0_i32 = arith.constant 0 : i32
    %c0_i32_0 = arith.constant 0 : i32
    %c0_i32_1 = arith.constant 0 : i32
    return %c0_i32, %c0_i32_0 : i32, i32
  }
  func.func @transform_3(%arg0: i32) -> (i32, i32) {
    %c0_i32 = arith.constant 0 : i32
    %c0_i32_0 = arith.constant 0 : i32
    %c0_i32_1 = arith.constant 0 : i32
    return %c0_i32, %c0_i32_0 : i32, i32
  }
  func.func @transform_4(%arg0: i32) -> (i32, i32) {
    %c0_i32 = arith.constant 0 : i32
    %c0_i32_0 = arith.constant 0 : i32
    %c0_i32_1 = arith.constant 0 : i32
    return %c0_i32, %c0_i32_0 : i32, i32
  }
  func.func @transform_5(%arg0: i32) -> (i32, i32) {
    %c0_i32 = arith.constant 0 : i32
    %c0_i32_0 = arith.constant 0 : i32
    %c0_i32_1 = arith.constant 0 : i32
    return %c0_i32, %c0_i32_0 : i32, i32
  }
  func.func @transform_6(%arg0: i32) -> (i32, i32) {
    %c0_i32 = arith.constant 0 : i32
    %c0_i32_0 = arith.constant 0 : i32
    %c0_i32_1 = arith.constant 0 : i32
    return %c0_i32, %c0_i32_0 : i32, i32
  }
  func.func @transform_7(%arg0: i32) -> (i32, i32) {
    %c0_i32 = arith.constant 0 : i32
    %c0_i32_0 = arith.constant 0 : i32
    return %arg0, %c0_i32 : i32, i32
  }
}

</mosaic_0001>

<llo_original>
// kernel: tpu_custom_call.1
$region0: #{tpu_custom_call.1}
  #allocation0 [shape = 'u32[]', space=smem, size = 0x4, offset = 0x4, fixed_abs, tag = 'smem constant byte address 0x4 - core index']
  #allocation1 [shape = 'u32[144,128]{1,0:T(1,128)}', space=vmem, size = 0x12000, scoped, tag = 'internal scratch']
  %s0 = inlined_call_operand.hbm [shape: bf16[16,16,128], index: 0, kind: input, shape index: {}]
  %s1 = inlined_call_operand.hbm [shape: bf16[128,384], index: 1, kind: input, shape index: {}]
  %s2 = inlined_call_operand.hbm [shape: bf16[128,512], index: 2, kind: input, shape index: {}]
  %s3 = inlined_call_operand.hbm [shape: bf16[128,640], index: 3, kind: input, shape index: {}]
  %s4 = inlined_call_operand.vmem [shape: f32[3,128], index: 4, kind: input, shape index: {}]
  %s5 = inlined_call_operand.hbm [shape: bf16[384,128], index: 5, kind: input, shape index: {}]
  %s6 = inlined_call_operand.vmem [shape: f32[1,128], index: 6, kind: input, shape index: {}]
  %s7 = inlined_call_operand.hbm [shape: f32[16,128], index: 7, kind: output, shape index: {}]
  %s8 = sld [smem:[#allocation0]]
  $region81: #{tpu_custom_call.1} parent=0
    _
  %s10 = ssub.s32 1, %s8
  %s11 = scalar_select 0, %s10, %s8
  $region1: #{tpu_custom_call.1} parent=0
    #allocation2 [shape = 'u8[65536]{0}', space=vmem, size = 0x10000, scoped, tag = 'input window, operand 0']
    #allocation3 [shape = 's32[2]{0}', space=sflag, size = 0x8, scoped, tag = 'scoped memory for tpu_custom_call.1']
    #allocation4 [shape = 's32[2]{0}', space=sflag, size = 0x8, scoped, tag = 'scoped memory for tpu_custom_call.1']
    #allocation5 [shape = 'u8[98304]{0}', space=vmem, size = 0x18000, scoped, tag = 'input window, operand 1, single buffered']
    #allocation6 [shape = 's32[1]{0}', space=sflag, size = 0x4, scoped, tag = 'scoped memory for tpu_custom_call.1']
    #allocation7 [shape = 'u8[131072]{0}', space=vmem, size = 0x20000, scoped, tag = 'input window, operand 2, single buffered']
    #allocation8 [shape = 'u8[163840]{0}', space=vmem, size = 0x28000, scoped, tag = 'input window, operand 3, single buffered']
    #allocation9 [shape = 's32[1]{0}', space=sflag, size = 0x4, scoped, tag = 'scoped memory for tpu_custom_call.1']
    #allocation10 [shape = 'u8[98304]{0}', space=vmem, size = 0x18000, scoped, tag = 'input window, operand 5, single buffered']
    #allocation11 [shape = 'u8[8192]{0}', space=vmem, size = 0x2000, scoped, tag = 'output window, operand 0']
    %12 = vsyncpa [#allocation3], 0
    %s13 = scalar_lea.sflag [#allocation3], 1
    %14 = vsyncpa %s13, 0
    %15 = vsyncpa [#allocation6], 0
    %16 = vsyncpa [#allocation9], 0
    %17 = vsyncpa [#allocation4], 0
    %s18 = scalar_lea.sflag [#allocation4], 1
    %19 = vsyncpa %s18, 0
    loop: start=0, step=1, limit=4
    $region2: #{tpu_custom_call.1} parent=1 // loop_pre_header
      _
    $region3: #{tpu_custom_call.1} parent=1 // loop_header
      %s21 = sphi 0, %s25
      %p22 = scmp.ge.s32.totalorder %s21, 4
      %s31 = sphi 0, %s33
      %s34 = sphi 0, %s31
      %s35 = sphi 0, %s34
      %s51 = sphi 0, %s35
      %s55 = sphi 0, %s55
      %s57 = sphi 0, %s55
      %s58 = sphi 0, %s57
      %s72 = sphi 0, %s58
      %s76 = sphi 0, %s76
      %s78 = sphi 0, %s76
      %s79 = sphi 0, %s78
      %s93 = sphi 0, %s79
      %s97 = sphi 0, %s97
      %s99 = sphi 0, %s97
      %s100 = sphi 0, %s99
      %s114 = sphi 0, %s100
      %s118 = sphi 0, %s118
      %s120 = sphi 0, %s118
      %s121 = sphi 0, %s120
      %s135 = sphi 0, %s121
      %s139 = sphi 0, %s139
      %s141 = sphi 0, %s139
      %s142 = sphi 0, %s141
      %s156 = sphi 0, %s142
      %s160 = sphi 0, %s160
      %s162 = sphi 0, %s160
      %s163 = sphi 0, %s162
      %s177 = sphi 0, %s163
      %s183 = sphi 0, %s185
      %s186 = sphi 0, %s183
      %s187 = sphi 0, %s186
      %s203 = sphi 0, %s187
    $region4: #{tpu_custom_call.1} parent=1 // loop_header_branch
      %24 = sbr.rel (%p22) target = $region8
    $region5: #{tpu_custom_call.1} parent=1 // loop_body
      %s26 = ssub.s32 %s21, 1
      %s27 = ssub.s32 %s21, 2
      %s28 = sadd.s32 %s21, 1
      %s29 = ssub.s32 %s21, %s28
      %p30 = scmp.eq.s32.totalorder %s29, 0
      %s32 = sadd.s32 %s31, 1
      %s33 = scalar_select %p30, %s31, %s32
      %p36 = pneg %p30
      %p37 = scmp.eq.s32.totalorder %s21, 1
      %p38 = por %p36, %p37
      %p39 = scmp.ne.s32.totalorder %s31, %s34
      %p40 = scmp.eq.s32.totalorder %s21, 0
      %p41 = por %p39, %p40
      %p42 = scmp.ne.s32.totalorder %s31, %s34
      %p43 = scmp.eq.s32.totalorder %s26, 1
      %p44 = por %p42, %p43
      %p45 = scmp.ne.s32.totalorder %s34, %s35
      %p46 = scmp.eq.s32.totalorder %s26, 0
      %p47 = por %p45, %p46
      %p48 = scmp.ne.s32.totalorder %s34, %s35
      %p49 = scmp.eq.s32.totalorder %s27, 1
      %p50 = por %p48, %p49
      %p52 = scmp.ne.s32.totalorder %s35, %s51
      %p53 = scmp.eq.s32.totalorder %s27, 0
      %p54 = por %p52, %p53
      %s56 = sadd.s32 %s55, 1
      %p59 = scmp.eq.s32.totalorder %s21, 1
      %p60 = scmp.ne.s32.totalorder %s55, %s57
      %p61 = scmp.eq.s32.totalorder %s21, 0
      %p62 = por %p60, %p61
      %p63 = scmp.ne.s32.totalorder %s55, %s57
      %p64 = scmp.eq.s32.totalorder %s26, 1
      %p65 = por %p63, %p64
      %p66 = scmp.ne.s32.totalorder %s57, %s58
      %p67 = scmp.eq.s32.totalorder %s26, 0
      %p68 = por %p66, %p67
      %p69 = scmp.ne.s32.totalorder %s57, %s58
      %p70 = scmp.eq.s32.totalorder %s27, 1
      %p71 = por %p69, %p70
      %p73 = scmp.ne.s32.totalorder %s58, %s72
      %p74 = scmp.eq.s32.totalorder %s27, 0
      %p75 = por %p73, %p74
      %s77 = sadd.s32 %s76, 1
      %p80 = scmp.eq.s32.totalorder %s21, 1
      %p81 = scmp.ne.s32.totalorder %s76, %s78
      %p82 = scmp.eq.s32.totalorder %s21, 0
      %p83 = por %p81, %p82
      %p84 = scmp.ne.s32.totalorder %s76, %s78
      %p85 = scmp.eq.s32.totalorder %s26, 1
      %p86 = por %p84, %p85
      %p87 = scmp.ne.s32.totalorder %s78, %s79
      %p88 = scmp.eq.s32.totalorder %s26, 0
      %p89 = por %p87, %p88
      %p90 = scmp.ne.s32.totalorder %s78, %s79
      %p91 = scmp.eq.s32.totalorder %s27, 1
      %p92 = por %p90, %p91
      %p94 = scmp.ne.s32.totalorder %s79, %s93
      %p95 = scmp.eq.s32.totalorder %s27, 0
      %p96 = por %p94, %p95
      %s98 = sadd.s32 %s97, 1
      %p101 = scmp.eq.s32.totalorder %s21, 1
      %p102 = scmp.ne.s32.totalorder %s97, %s99
      %p103 = scmp.eq.s32.totalorder %s21, 0
      %p104 = por %p102, %p103
      %p105 = scmp.ne.s32.totalorder %s97, %s99
      %p106 = scmp.eq.s32.totalorder %s26, 1
      %p107 = por %p105, %p106
      %p108 = scmp.ne.s32.totalorder %s99, %s100
      %p109 = scmp.eq.s32.totalorder %s26, 0
      %p110 = por %p108, %p109
      %p111 = scmp.ne.s32.totalorder %s99, %s100
      %p112 = scmp.eq.s32.totalorder %s27, 1
      %p113 = por %p111, %p112
      %p115 = scmp.ne.s32.totalorder %s100, %s114
      %p116 = scmp.eq.s32.totalorder %s27, 0
      %p117 = por %p115, %p116
      %s119 = sadd.s32 %s118, 1
      %p122 = scmp.eq.s32.totalorder %s21, 1
      %p123 = scmp.ne.s32.totalorder %s118, %s120
      %p124 = scmp.eq.s32.totalorder %s21, 0
      %p125 = por %p123, %p124
      %p126 = scmp.ne.s32.totalorder %s118, %s120
      %p127 = scmp.eq.s32.totalorder %s26, 1
      %p128 = por %p126, %p127
      %p129 = scmp.ne.s32.totalorder %s120, %s121
      %p130 = scmp.eq.s32.totalorder %s26, 0
      %p131 = por %p129, %p130
      %p132 = scmp.ne.s32.totalorder %s120, %s121
      %p133 = scmp.eq.s32.totalorder %s27, 1
      %p134 = por %p132, %p133
      %p136 = scmp.ne.s32.totalorder %s121, %s135
      %p137 = scmp.eq.s32.totalorder %s27, 0
      %p138 = por %p136, %p137
      %s140 = sadd.s32 %s139, 1
      %p143 = scmp.eq.s32.totalorder %s21, 1
      %p144 = scmp.ne.s32.totalorder %s139, %s141
      %p145 = scmp.eq.s32.totalorder %s21, 0
      %p146 = por %p144, %p145
      %p147 = scmp.ne.s32.totalorder %s139, %s141
      %p148 = scmp.eq.s32.totalorder %s26, 1
      %p149 = por %p147, %p148
      %p150 = scmp.ne.s32.totalorder %s141, %s142
      %p151 = scmp.eq.s32.totalorder %s26, 0
      %p152 = por %p150, %p151
      %p153 = scmp.ne.s32.totalorder %s141, %s142
      %p154 = scmp.eq.s32.totalorder %s27, 1
      %p155 = por %p153, %p154
      %p157 = scmp.ne.s32.totalorder %s142, %s156
      %p158 = scmp.eq.s32.totalorder %s27, 0
      %p159 = por %p157, %p158
      %s161 = sadd.s32 %s160, 1
      %p164 = scmp.eq.s32.totalorder %s21, 1
      %p165 = scmp.ne.s32.totalorder %s160, %s162
      %p166 = scmp.eq.s32.totalorder %s21, 0
      %p167 = por %p165, %p166
      %p168 = scmp.ne.s32.totalorder %s160, %s162
      %p169 = scmp.eq.s32.totalorder %s26, 1
      %p170 = por %p168, %p169
      %p171 = scmp.ne.s32.totalorder %s162, %s163
      %p172 = scmp.eq.s32.totalorder %s26, 0
      %p173 = por %p171, %p172
      %p174 = scmp.ne.s32.totalorder %s162, %s163
      %p175 = scmp.eq.s32.totalorder %s27, 1
      %p176 = por %p174, %p175
      %p178 = scmp.ne.s32.totalorder %s163, %s177
      %p179 = scmp.eq.s32.totalorder %s27, 0
      %p180 = por %p178, %p179
      %s181 = ssub.s32 %s21, %s28
      %p182 = scmp.eq.s32.totalorder %s181, 0
      %s184 = sadd.s32 %s183, 1
      %s185 = scalar_select %p182, %s183, %s184
      %p188 = pneg %p182
      %p189 = scmp.eq.s32.totalorder %s21, 1
      %p190 = por %p188, %p189
      %p191 = scmp.ne.s32.totalorder %s183, %s186
      %p192 = scmp.eq.s32.totalorder %s21, 0
      %p193 = por %p191, %p192
      %p194 = scmp.ne.s32.totalorder %s183, %s186
      %p195 = scmp.eq.s32.totalorder %s26, 1
      %p196 = por %p194, %p195
      %p197 = scmp.ne.s32.totalorder %s186, %s187
      %p198 = scmp.eq.s32.totalorder %s26, 0
      %p199 = por %p197, %p198
      %p200 = scmp.ne.s32.totalorder %s186, %s187
      %p201 = scmp.eq.s32.totalorder %s27, 1
      %p202 = por %p200, %p201
      %p204 = scmp.ne.s32.totalorder %s187, %s203
      %p205 = scmp.eq.s32.totalorder %s27, 0
      %p206 = por %p204, %p205
      %p207 = scmp.le.s32.totalorder 1, %s21
      %p208 = scmp.lt.s32.totalorder %s21, 3
      %p209 = pnand %p207, %p208
      %p210 = pneg %p209
      // Predicated region
      $region9: #{tpu_custom_call.1} parent=5 // pred_check
        _
      $region10: #{tpu_custom_call.1} parent=5 // pred_check_branch
        %212 = sbr.rel (%p209) target = $region12
      $region11: #{tpu_custom_call.1} parent=5 // pred_region
        %s213 = ssub.s32 %s21, 1
        // Predicated region
        $region13: #{tpu_custom_call.1} parent=11 // pred_check
          %p214 = pneg %p68
        $region14: #{tpu_custom_call.1} parent=11 // pred_check_branch
          %216 = sbr.rel (%p214) target = $region16
        $region15: #{tpu_custom_call.1} parent=11 // pred_region
          %s218 = ssub.s32 3072, 3072
          %219 = vsyncadd [#allocation6], %s218
          %s220 = sshll.u32 [#allocation5], 4
          %s221 = int_to_ptr.vmem [resolvable:$true] %s220
          %226 = dma.hbm_to_vmem [thread:$0]  %s1, 3072, %s221, [#allocation6], 192, 192, 12
        $region16: #{tpu_custom_call.1} parent=11 // pred_fallthru
          _
        // Predicated region
        $region17: #{tpu_custom_call.1} parent=11 // pred_check
          %p227 = pneg %p89
        $region18: #{tpu_custom_call.1} parent=11 // pred_check_branch
          %229 = sbr.rel (%p227) target = $region20
        $region19: #{tpu_custom_call.1} parent=11 // pred_region
          %s231 = ssub.s32 4096, 4096
          %232 = vsyncadd [#allocation6], %s231
          %s233 = sshll.u32 [#allocation7], 4
          %s234 = int_to_ptr.vmem [resolvable:$true] %s233
          %239 = dma.hbm_to_vmem [thread:$0]  %s2, 4096, %s234, [#allocation6], 256, 256, 16
        $region20: #{tpu_custom_call.1} parent=11 // pred_fallthru
          _
        // Predicated region
        $region21: #{tpu_custom_call.1} parent=11 // pred_check
          %p240 = pneg %p110
        $region22: #{tpu_custom_call.1} parent=11 // pred_check_branch
          %242 = sbr.rel (%p240) target = $region24
        $region23: #{tpu_custom_call.1} parent=11 // pred_region
          %s244 = ssub.s32 5120, 5120
          %245 = vsyncadd [#allocation9], %s244
          %s246 = sshll.u32 [#allocation8], 4
          %s247 = int_to_ptr.vmem [resolvable:$true] %s246
          %252 = dma.hbm_to_vmem [thread:$0]  %s3, 5120, %s247, [#allocation9], 320, 320, 20
        $region24: #{tpu_custom_call.1} parent=11 // pred_fallthru
          _
        // Predicated region
        $region25: #{tpu_custom_call.1} parent=11 // pred_check
          %p253 = pneg %p131
        $region26: #{tpu_custom_call.1} parent=11 // pred_check_branch
          %255 = sbr.rel (%p253) target = $region28
        $region27: #{tpu_custom_call.1} parent=11 // pred_region
          _
        $region28: #{tpu_custom_call.1} parent=11 // pred_fallthru
          _
        // Predicated region
        $region29: #{tpu_custom_call.1} parent=11 // pred_check
          %p256 = pneg %p152
        $region30: #{tpu_custom_call.1} parent=11 // pred_check_branch
          %258 = sbr.rel (%p256) target = $region32
        $region31: #{tpu_custom_call.1} parent=11 // pred_region
          %s260 = ssub.s32 3072, 3072
          %261 = vsyncadd [#allocation9], %s260
          %s262 = sshll.u32 [#allocation10], 4
          %s263 = int_to_ptr.vmem [resolvable:$true] %s262
          %268 = dma.hbm_to_vmem [thread:$0]  %s5, 3072, %s263, [#allocation9], 64, 64, 4
        $region32: #{tpu_custom_call.1} parent=11 // pred_fallthru
          _
        // Predicated region
        $region33: #{tpu_custom_call.1} parent=11 // pred_check
          %p269 = pneg %p173
        $region34: #{tpu_custom_call.1} parent=11 // pred_check_branch
          %271 = sbr.rel (%p269) target = $region36
        $region35: #{tpu_custom_call.1} parent=11 // pred_region
          _
        $region36: #{tpu_custom_call.1} parent=11 // pred_fallthru
          _
      $region12: #{tpu_custom_call.1} parent=5 // pred_fallthru
        _
      %p272 = scmp.lt.s32.totalorder %s21, 2
      // Predicated region
      $region37: #{tpu_custom_call.1} parent=5 // pred_check
        %p273 = pneg %p272
      $region38: #{tpu_custom_call.1} parent=5 // pred_check_branch
        %275 = sbr.rel (%p273) target = $region40
      $region39: #{tpu_custom_call.1} parent=5 // pred_region
        // Predicated region
        $region41: #{tpu_custom_call.1} parent=39 // pred_check
          %p276 = pneg %p41
        $region42: #{tpu_custom_call.1} parent=39 // pred_check_branch
          %278 = sbr.rel (%p276) target = $region44
        $region43: #{tpu_custom_call.1} parent=39 // pred_region
          %s279 = sand.u32 %s31, 1
          %s280 = scalar_lea.sflag [#allocation3], %s279
          %s281 = sand.u32 %s31, 1
          %s282 = smul.addr %s281, 64
          %s283 = scalar_lea.vmem [#allocation2], %s282
          %s284 = smul.u32 8, %s21
          %s286 = ssub.s32 1024, 1024
          %287 = vsyncadd %s280, %s286
          %s288 = smul.addr %s284, 2
          %s289 = smul.addr %s288, 64
          %s290 = scalar_lea.hbm %s0, %s289
          %s291 = sshll.u32 %s283, 4
          %s292 = int_to_ptr.vmem [resolvable:$true] %s291
          %297 = dma.hbm_to_vmem [thread:$0]  %s290, 1024, %s292, %s280, 64, 64, 4
        $region44: #{tpu_custom_call.1} parent=39 // pred_fallthru
          _
      $region40: #{tpu_custom_call.1} parent=5 // pred_fallthru
        _
      %p298 = scmp.le.s32.totalorder 1, %s21
      %p299 = scmp.lt.s32.totalorder %s21, 3
      %p300 = pnand %p298, %p299
      %p301 = pneg %p300
      // Predicated region
      $region45: #{tpu_custom_call.1} parent=5 // pred_check
        _
      $region46: #{tpu_custom_call.1} parent=5 // pred_check_branch
        %303 = sbr.rel (%p300) target = $region48
      $region47: #{tpu_custom_call.1} parent=5 // pred_region
        %s304 = ssub.s32 %s21, 1
        %s305 = sand.u32 %s34, 1
        %s306 = scalar_lea.sflag [#allocation3], %s305
        %s307 = sand.u32 %s34, 1
        %s308 = smul.addr %s307, 64
        %s309 = scalar_lea.vmem [#allocation2], %s308
        // Predicated region
        $region49: #{tpu_custom_call.1} parent=47 // pred_check
          %p310 = pneg %p47
        $region50: #{tpu_custom_call.1} parent=47 // pred_check_branch
          %312 = sbr.rel (%p310) target = $region52
        $region51: #{tpu_custom_call.1} parent=47 // pred_region
          %313 = dma.done %s306, 1024
        $region52: #{tpu_custom_call.1} parent=47 // pred_fallthru
          _
        // Predicated region
        $region53: #{tpu_custom_call.1} parent=47 // pred_check
          %p314 = pneg %p68
        $region54: #{tpu_custom_call.1} parent=47 // pred_check_branch
          %316 = sbr.rel (%p314) target = $region56
        $region55: #{tpu_custom_call.1} parent=47 // pred_region
          %317 = dma.done [#allocation6], 3072
        $region56: #{tpu_custom_call.1} parent=47 // pred_fallthru
          _
        // Predicated region
        $region57: #{tpu_custom_call.1} parent=47 // pred_check
          %p318 = pneg %p89
        $region58: #{tpu_custom_call.1} parent=47 // pred_check_branch
          %320 = sbr.rel (%p318) target = $region60
        $region59: #{tpu_custom_call.1} parent=47 // pred_region
          %321 = dma.done [#allocation6], 4096
        $region60: #{tpu_custom_call.1} parent=47 // pred_fallthru
          _
        // Predicated region
        $region61: #{tpu_custom_call.1} parent=47 // pred_check
          %p322 = pneg %p110
        $region62: #{tpu_custom_call.1} parent=47 // pred_check_branch
          %324 = sbr.rel (%p322) target = $region64
        $region63: #{tpu_custom_call.1} parent=47 // pred_region
          %325 = dma.done [#allocation9], 5120
        $region64: #{tpu_custom_call.1} parent=47 // pred_fallthru
          _
        // Predicated region
        $region65: #{tpu_custom_call.1} parent=47 // pred_check
          %p326 = pneg %p152
        $region66: #{tpu_custom_call.1} parent=47 // pred_check_branch
          %328 = sbr.rel (%p326) target = $region68
        $region67: #{tpu_custom_call.1} parent=47 // pred_region
          %329 = dma.done [#allocation9], 3072
        $region68: #{tpu_custom_call.1} parent=47 // pred_fallthru
          _
        %s330 = sand.u32 %s34, 1
        %s331 = scalar_lea.sflag [#allocation3], %s330
        %s332 = sand.u32 %s34, 1
        %s333 = smul.addr %s332, 64
        %s334 = scalar_lea.vmem [#allocation2], %s333
        %p335 = pneg %p47
        %p336 = pneg %p44
        %p337 = pneg %p68
        %p338 = pneg %p65
        %p339 = pneg %p89
        %p340 = pneg %p86
        %p341 = pneg %p110
        %p342 = pneg %p107
        %p343 = pneg %p131
        %p344 = pneg %p128
        %p345 = pneg %p152
        %p346 = pneg %p149
        %p347 = pneg %p173
        %p348 = pneg %p170
        %p349 = pneg %p199
        %p350 = pneg %p196
        %s351 = sand.u32 %s186, 1
        %s352 = scalar_lea.sflag [#allocation4], %s351
        %s353 = sand.u32 %s186, 1
        %s354 = smul.addr %s353, 8
        %s355 = scalar_lea.vmem [#allocation11], %s354
        %s356 = smul.u32 8, %s26
        %v358 = vld [vmem:[%s309] sm:$0xf]
        %v359 = vld [vmem:[%s309 + $0x4] sm:$0xf]
        %v360 = vld [vmem:[%s309 + $0x8] sm:$0xf]
        %v361 = vld [vmem:[%s309 + $0xc] sm:$0xf]
        %v362 = vld [vmem:[%s309 + $0x10] sm:$0xf]
        %v363 = vld [vmem:[%s309 + $0x14] sm:$0xf]
        %v364 = vld [vmem:[%s309 + $0x18] sm:$0xf]
        %v365 = vld [vmem:[%s309 + $0x1c] sm:$0xf]
        %v366 = vld [vmem:[%s309 + $0x20] sm:$0xf]
        %v367 = vld [vmem:[%s309 + $0x24] sm:$0xf]
        %v368 = vld [vmem:[%s309 + $0x28] sm:$0xf]
        %v369 = vld [vmem:[%s309 + $0x2c] sm:$0xf]
        %v370 = vld [vmem:[%s309 + $0x30] sm:$0xf]
        %v371 = vld [vmem:[%s309 + $0x34] sm:$0xf]
        %v372 = vld [vmem:[%s309 + $0x38] sm:$0xf]
        %v373 = vld [vmem:[%s309 + $0x3c] sm:$0xf]
        %v374 = vlaneseq
        %v375 = vshrl.u32 %v374, 7
        %v376 = vadd.s32 %v375, 8
        %v377 = vadd.s32 %v375, 16
        %v378 = vadd.s32 %v375, 24
        %v379 = vadd.s32 %v375, 32
        %v380 = vadd.s32 %v375, 40
        %v381 = vadd.s32 %v375, 48
        %v382 = vadd.s32 %v375, 56
        %v383 = vadd.s32 %v375, 64
        %v384 = vadd.s32 %v375, 72
        %v385 = vadd.s32 %v375, 80
        %v386 = vadd.s32 %v375, 88
        %v387 = vadd.s32 %v375, 96
        %v388 = vadd.s32 %v375, 104
        %v389 = vadd.s32 %v375, 112
        %v390 = vadd.s32 %v375, 120
        %vm391 = vcmp.lt.s32.totalorder %v375, 0
        %v392 = vsub.s32 0, %v375
        %v393 = vsel %vm391, %v392, %v375
        %v394 = vshrl.u32 %v393, 4
        %v395 = vand.u32 %v393, 15
        %v396 = vsub.s32 0, %v395
        %v397 = vsel %vm391, %v396, %v395
        %vm398 = vcmp.lt.s32.totalorder %v376, 0
        %v399 = vsub.s32 0, %v376
        %v400 = vsel %vm398, %v399, %v376
        %v401 = vshrl.u32 %v400, 4
        %v402 = vand.u32 %v400, 15
        %v403 = vsub.s32 0, %v402
        %v404 = vsel %vm398, %v403, %v402
        %vm405 = vcmp.lt.s32.totalorder %v377, 0
        %v406 = vsub.s32 0, %v377
        %v407 = vsel %vm405, %v406, %v377
        %v408 = vshrl.u32 %v407, 4
        %v409 = vand.u32 %v407, 15
        %v410 = vsub.s32 0, %v409
        %v411 = vsel %vm405, %v410, %v409
        %vm412 = vcmp.lt.s32.totalorder %v378, 0
        %v413 = vsub.s32 0, %v378
        %v414 = vsel %vm412, %v413, %v378
        %v415 = vshrl.u32 %v414, 4
        %v416 = vand.u32 %v414, 15
        %v417 = vsub.s32 0, %v416
        %v418 = vsel %vm412, %v417, %v416
        %vm419 = vcmp.lt.s32.totalorder %v379, 0
        %v420 = vsub.s32 0, %v379
        %v421 = vsel %vm419, %v420, %v379
        %v422 = vshrl.u32 %v421, 4
        %v423 = vand.u32 %v421, 15
        %v424 = vsub.s32 0, %v423
        %v425 = vsel %vm419, %v424, %v423
        %vm426 = vcmp.lt.s32.totalorder %v380, 0
        %v427 = vsub.s32 0, %v380
        %v428 = vsel %vm426, %v427, %v380
        %v429 = vshrl.u32 %v428, 4
        %v430 = vand.u32 %v428, 15
        %v431 = vsub.s32 0, %v430
        %v432 = vsel %vm426, %v431, %v430
        %vm433 = vcmp.lt.s32.totalorder %v381, 0
        %v434 = vsub.s32 0, %v381
        %v435 = vsel %vm433, %v434, %v381
        %v436 = vshrl.u32 %v435, 4
        %v437 = vand.u32 %v435, 15
        %v438 = vsub.s32 0, %v437
        %v439 = vsel %vm433, %v438, %v437
        %vm440 = vcmp.lt.s32.totalorder %v382, 0
        %v441 = vsub.s32 0, %v382
        %v442 = vsel %vm440, %v441, %v382
        %v443 = vshrl.u32 %v442, 4
        %v444 = vand.u32 %v442, 15
        %v445 = vsub.s32 0, %v444
        %v446 = vsel %vm440, %v445, %v444
        %vm447 = vcmp.lt.s32.totalorder %v383, 0
        %v448 = vsub.s32 0, %v383
        %v449 = vsel %vm447, %v448, %v383
        %v450 = vshrl.u32 %v449, 4
        %v451 = vand.u32 %v449, 15
        %v452 = vsub.s32 0, %v451
        %v453 = vsel %vm447, %v452, %v451
        %vm454 = vcmp.lt.s32.totalorder %v384, 0
        %v455 = vsub.s32 0, %v384
        %v456 = vsel %vm454, %v455, %v384
        %v457 = vshrl.u32 %v456, 4
        %v458 = vand.u32 %v456, 15
        %v459 = vsub.s32 0, %v458
        %v460 = vsel %vm454, %v459, %v458
        %vm461 = vcmp.lt.s32.totalorder %v385, 0
        %v462 = vsub.s32 0, %v385
        %v463 = vsel %vm461, %v462, %v385
        %v464 = vshrl.u32 %v463, 4
        %v465 = vand.u32 %v463, 15
        %v466 = vsub.s32 0, %v465
        %v467 = vsel %vm461, %v466, %v465
        %vm468 = vcmp.lt.s32.totalorder %v386, 0
        %v469 = vsub.s32 0, %v386
        %v470 = vsel %vm468, %v469, %v386
        %v471 = vshrl.u32 %v470, 4
        %v472 = vand.u32 %v470, 15
        %v473 = vsub.s32 0, %v472
        %v474 = vsel %vm468, %v473, %v472
        %vm475 = vcmp.lt.s32.totalorder %v387, 0
        %v476 = vsub.s32 0, %v387
        %v477 = vsel %vm475, %v476, %v387
        %v478 = vshrl.u32 %v477, 4
        %v479 = vand.u32 %v477, 15
        %v480 = vsub.s32 0, %v479
        %v481 = vsel %vm475, %v480, %v479
        %vm482 = vcmp.lt.s32.totalorder %v388, 0
        %v483 = vsub.s32 0, %v388
        %v484 = vsel %vm482, %v483, %v388
        %v485 = vshrl.u32 %v484, 4
        %v486 = vand.u32 %v484, 15
        %v487 = vsub.s32 0, %v486
        %v488 = vsel %vm482, %v487, %v486
        %vm489 = vcmp.lt.s32.totalorder %v389, 0
        %v490 = vsub.s32 0, %v389
        %v491 = vsel %vm489, %v490, %v389
        %v492 = vshrl.u32 %v491, 4
        %v493 = vand.u32 %v491, 15
        %v494 = vsub.s32 0, %v493
        %v495 = vsel %vm489, %v494, %v493
        %vm496 = vcmp.lt.s32.totalorder %v390, 0
        %v497 = vsub.s32 0, %v390
        %v498 = vsel %vm496, %v497, %v390
        %v499 = vshrl.u32 %v498, 4
        %v500 = vand.u32 %v498, 15
        %v501 = vsub.s32 0, %v500
        %v502 = vsel %vm496, %v501, %v500
        %vm503 = vcmp.ne.s32.totalorder %v397, 0
        %vm504 = vcmp.ne.s32.totalorder %v404, 0
        %vm505 = vcmp.ne.s32.totalorder %v411, 0
        %vm506 = vcmp.ne.s32.totalorder %v418, 0
        %vm507 = vcmp.ne.s32.totalorder %v425, 0
        %vm508 = vcmp.ne.s32.totalorder %v432, 0
        %vm509 = vcmp.ne.s32.totalorder %v439, 0
        %vm510 = vcmp.ne.s32.totalorder %v446, 0
        %vm511 = vcmp.ne.s32.totalorder %v453, 0
        %vm512 = vcmp.ne.s32.totalorder %v460, 0
        %vm513 = vcmp.ne.s32.totalorder %v467, 0
        %vm514 = vcmp.ne.s32.totalorder %v474, 0
        %vm515 = vcmp.ne.s32.totalorder %v481, 0
        %vm516 = vcmp.ne.s32.totalorder %v488, 0
        %vm517 = vcmp.ne.s32.totalorder %v495, 0
        %vm518 = vcmp.ne.s32.totalorder %v502, 0
        %vm519 = vcmp.lt.s32.totalorder %v397, 0
        %vm520 = vcmp.lt.s32.totalorder %v404, 0
        %vm521 = vcmp.lt.s32.totalorder %v411, 0
        %vm522 = vcmp.lt.s32.totalorder %v418, 0
        %vm523 = vcmp.lt.s32.totalorder %v425, 0
        %vm524 = vcmp.lt.s32.totalorder %v432, 0
        %vm525 = vcmp.lt.s32.totalorder %v439, 0
        %vm526 = vcmp.lt.s32.totalorder %v446, 0
        %vm527 = vcmp.lt.s32.totalorder %v453, 0
        %vm528 = vcmp.lt.s32.totalorder %v460, 0
        %vm529 = vcmp.lt.s32.totalorder %v467, 0
        %vm530 = vcmp.lt.s32.totalorder %v474, 0
        %vm531 = vcmp.lt.s32.totalorder %v481, 0
        %vm532 = vcmp.lt.s32.totalorder %v488, 0
        %vm533 = vcmp.lt.s32.totalorder %v495, 0
        %vm534 = vcmp.lt.s32.totalorder %v502, 0
        %vm535 = vmand %vm519, %vm503
        %vm536 = vmand %vm520, %vm504
        %vm537 = vmand %vm521, %vm505
        %vm538 = vmand %vm522, %vm506
        %vm539 = vmand %vm523, %vm507
        %vm540 = vmand %vm524, %vm508
        %vm541 = vmand %vm525, %vm509
        %vm542 = vmand %vm526, %vm510
        %vm543 = vmand %vm527, %vm511
        %vm544 = vmand %vm528, %vm512
        %vm545 = vmand %vm529, %vm513
        %vm546 = vmand %vm530, %vm514
        %vm547 = vmand %vm531, %vm515
        %vm548 = vmand %vm532, %vm516
        %vm549 = vmand %vm533, %vm517
        %vm550 = vmand %vm534, %vm518
        %v551 = vadd.s32 %v397, 16
        %v552 = vadd.s32 %v404, 16
        %v553 = vadd.s32 %v411, 16
        %v554 = vadd.s32 %v418, 16
        %v555 = vadd.s32 %v425, 16
        %v556 = vadd.s32 %v432, 16
        %v557 = vadd.s32 %v439, 16
        %v558 = vadd.s32 %v446, 16
        %v559 = vadd.s32 %v453, 16
        %v560 = vadd.s32 %v460, 16
        %v561 = vadd.s32 %v467, 16
        %v562 = vadd.s32 %v474, 16
        %v563 = vadd.s32 %v481, 16
        %v564 = vadd.s32 %v488, 16
        %v565 = vadd.s32 %v495, 16
        %v566 = vadd.s32 %v502, 16
        %v567 = vsel %vm535, %v551, %v397
        %v568 = vsel %vm536, %v552, %v404
        %v569 = vsel %vm537, %v553, %v411
        %v570 = vsel %vm538, %v554, %v418
        %v571 = vsel %vm539, %v555, %v425
        %v572 = vsel %vm540, %v556, %v432
        %v573 = vsel %vm541, %v557, %v439
        %v574 = vsel %vm542, %v558, %v446
        %v575 = vsel %vm543, %v559, %v453
        %v576 = vsel %vm544, %v560, %v460
        %v577 = vsel %vm545, %v561, %v467
        %v578 = vsel %vm546, %v562, %v474
        %v579 = vsel %vm547, %v563, %v481
        %v580 = vsel %vm548, %v564, %v488
        %v581 = vsel %vm549, %v565, %v495
        %v582 = vsel %vm550, %v566, %v502
        %v583 = vld [vmem:[#allocation5] sm:$0xff]
        %v584 = vld [vmem:[#allocation5 + $0x8] sm:$0xf]
        %v585 = vld [vmem:[#allocation5 + $0xc] sm:$0xff]
        %v586 = vld [vmem:[#allocation5 + $0x14] sm:$0xf]
        %v587 = vld [vmem:[#allocation5 + $0x18] sm:$0xff]
        %v588 = vld [vmem:[#allocation5 + $0x20] sm:$0xf]
        %v589 = vld [vmem:[#allocation5 + $0x24] sm:$0xff]
        %v590 = vld [vmem:[#allocation5 + $0x2c] sm:$0xf]
        %v591 = vld [vmem:[#allocation5 + $0x30] sm:$0xff]
        %v592 = vld [vmem:[#allocation5 + $0x38] sm:$0xf]
        %v593 = vld [vmem:[#allocation5 + $0x3c] sm:$0xff]
        %v594 = vld [vmem:[#allocation5 + $0x44] sm:$0xf]
        %v595 = vld [vmem:[#allocation5 + $0x48] sm:$0xff]
        %v596 = vld [vmem:[#allocation5 + $0x50] sm:$0xf]
        %v597 = vld [vmem:[#allocation5 + $0x54] sm:$0xff]
        %v598 = vld [vmem:[#allocation5 + $0x5c] sm:$0xf]
        %v599 = vld [vmem:[#allocation5 + $0x60] sm:$0xff]
        %v600 = vld [vmem:[#allocation5 + $0x68] sm:$0xf]
        %v601 = vld [vmem:[#allocation5 + $0x6c] sm:$0xff]
        %v602 = vld [vmem:[#allocation5 + $0x74] sm:$0xf]
        %v603 = vld [vmem:[#allocation5 + $0x78] sm:$0xff]
        %v604 = vld [vmem:[#allocation5 + $0x80] sm:$0xf]
        %v605 = vld [vmem:[#allocation5 + $0x84] sm:$0xff]
        %v606 = vld [vmem:[#allocation5 + $0x8c] sm:$0xf]
        %v607 = vld [vmem:[#allocation5 + $0x90] sm:$0xff]
        %v608 = vld [vmem:[#allocation5 + $0x98] sm:$0xf]
        %v609 = vld [vmem:[#allocation5 + $0x9c] sm:$0xff]
        %v610 = vld [vmem:[#allocation5 + $0xa4] sm:$0xf]
        %v611 = vld [vmem:[#allocation5 + $0xa8] sm:$0xff]
        %v612 = vld [vmem:[#allocation5 + $0xb0] sm:$0xf]
        %v613 = vld [vmem:[#allocation5 + $0xb4] sm:$0xff]
        %v614 = vld [vmem:[#allocation5 + $0xbc] sm:$0xf]
        %v631 = vunpack.c.l.b16 %v358
        %v632 = vunpack.c.l.b16 %v359
        %v633 = vunpack.c.l.b16 %v360
        %v634 = vunpack.c.l.b16 %v361
        %v635 = vunpack.c.l.b16 %v362
        %v636 = vunpack.c.l.b16 %v363
        %v637 = vunpack.c.l.b16 %v364
        %v638 = vunpack.c.l.b16 %v365
        %v639 = vunpack.c.l.b16 %v366
        %v640 = vunpack.c.l.b16 %v367
        %v641 = vunpack.c.l.b16 %v368
        %v642 = vunpack.c.l.b16 %v369
        %v643 = vunpack.c.l.b16 %v370
        %v644 = vunpack.c.l.b16 %v371
        %v645 = vunpack.c.l.b16 %v372
        %v646 = vunpack.c.l.b16 %v373
        %v647 = vpack.c.b16 %v632, %v631
        %v648 = vpack.c.b16 %v634, %v633
        %v649 = vpack.c.b16 %v636, %v635
        %v650 = vpack.c.b16 %v638, %v637
        %v651 = vpack.c.b16 %v640, %v639
        %v652 = vpack.c.b16 %v642, %v641
        %v653 = vpack.c.b16 %v644, %v643
        %v654 = vpack.c.b16 %v646, %v645
        %v695 = vunpack.c.l.b16 %v583
        %v696 = vunpack.c.h.b16 %v583
        %v697 = vunpack.c.l.b16 %v584
        %v698 = vunpack.c.l.b16 %v585
        %v699 = vunpack.c.h.b16 %v585
        %v700 = vunpack.c.l.b16 %v586
        %v701 = vunpack.c.l.b16 %v587
        %v702 = vunpack.c.h.b16 %v587
        %v703 = vunpack.c.l.b16 %v588
        %v704 = vunpack.c.l.b16 %v589
        %v705 = vunpack.c.h.b16 %v589
        %v706 = vunpack.c.l.b16 %v590
        %v707 = vunpack.c.l.b16 %v591
        %v708 = vunpack.c.h.b16 %v591
        %v709 = vunpack.c.l.b16 %v592
        %v710 = vunpack.c.l.b16 %v593
        %v711 = vunpack.c.h.b16 %v593
        %v712 = vunpack.c.l.b16 %v594
        %v713 = vunpack.c.l.b16 %v595
        %v714 = vunpack.c.h.b16 %v595
        %v715 = vunpack.c.l.b16 %v596
        %v716 = vunpack.c.l.b16 %v597
        %v717 = vunpack.c.h.b16 %v597
        %v718 = vunpack.c.l.b16 %v598
        %v719 = vunpack.c.l.b16 %v599
        %v720 = vunpack.c.h.b16 %v599
        %v721 = vunpack.c.l.b16 %v600
        %v722 = vunpack.c.l.b16 %v601
        %v723 = vunpack.c.h.b16 %v601
        %v724 = vunpack.c.l.b16 %v602
        %v725 = vunpack.c.l.b16 %v603
        %v726 = vunpack.c.h.b16 %v603
        %v727 = vunpack.c.l.b16 %v604
        %v728 = vunpack.c.l.b16 %v605
        %v729 = vunpack.c.h.b16 %v605
        %v730 = vunpack.c.l.b16 %v606
        %v731 = vunpack.c.l.b16 %v607
        %v732 = vunpack.c.h.b16 %v607
        %v733 = vunpack.c.l.b16 %v608
        %v734 = vunpack.c.l.b16 %v609
        %v735 = vunpack.c.h.b16 %v609
        %v736 = vunpack.c.l.b16 %v610
        %v737 = vunpack.c.l.b16 %v611
        %v738 = vunpack.c.h.b16 %v611
        %v739 = vunpack.c.l.b16 %v612
        %v740 = vunpack.c.l.b16 %v613
        %v741 = vunpack.c.h.b16 %v613
        %v742 = vunpack.c.l.b16 %v614
        %v743 = vpack.c.b16 %v698, %v695
        %v744 = vpack.c.b16 %v699, %v696
        %v745 = vpack.c.b16 %v700, %v697
        %v746 = vpack.c.b16 %v704, %v701
        %v747 = vpack.c.b16 %v705, %v702
        %v748 = vpack.c.b16 %v706, %v703
        %v749 = vpack.c.b16 %v710, %v707
        %v750 = vpack.c.b16 %v711, %v708
        %v751 = vpack.c.b16 %v712, %v709
        %v752 = vpack.c.b16 %v716, %v713
        %v753 = vpack.c.b16 %v717, %v714
        %v754 = vpack.c.b16 %v718, %v715
        %v755 = vpack.c.b16 %v722, %v719
        %v756 = vpack.c.b16 %v723, %v720
        %v757 = vpack.c.b16 %v724, %v721
        %v758 = vpack.c.b16 %v728, %v725
        %v759 = vpack.c.b16 %v729, %v726
        %v760 = vpack.c.b16 %v730, %v727
        %v761 = vpack.c.b16 %v734, %v731
        %v762 = vpack.c.b16 %v735, %v732
        %v763 = vpack.c.b16 %v736, %v733
        %v764 = vpack.c.b16 %v740, %v737
        %v765 = vpack.c.b16 %v741, %v738
        %v766 = vpack.c.b16 %v742, %v739
        %791 = vmatprep.subr.bf16.mxu0 %v765
        %792 = vmatpush1.bf16.msra.mxu0 %v764
        %793 = vmatprep.subr.bf16.mxu0 %v762
        %794 = vmatpush1.bf16.msra.mxu0 %v761
        %795 = vmatprep.subr.bf16.mxu0 %v759
        %796 = vmatpush1.bf16.msra.mxu0 %v758
        %797 = vmatprep.subr.bf16.mxu0 %v756
        %798 = vmatpush1.bf16.msra.mxu0 %v755
        %799 = vmatprep.subr.bf16.mxu0 %v753
        %800 = vmatpush1.bf16.msra.mxu0 %v752
        %801 = vmatprep.subr.bf16.mxu0 %v750
        %802 = vmatpush1.bf16.msra.mxu0 %v749
        %803 = vmatprep.subr.bf16.mxu0 %v747
        %804 = vmatpush1.bf16.msra.mxu0 %v746
        %805 = vmatprep.subr.bf16.mxu0 %v744
        %806 = vmatpush1.bf16.msra.mxu0 %v743
        %807 = vmatprep.subr.bf16.mxu0 0
        %808 = vmatpush2.bf16.msra.mxu0 0
        %809 = vmatprep.subr.bf16.mxu0 0
        %810 = vmatpush2.bf16.msra.mxu0 0
        %811 = vmatprep.subr.bf16.mxu0 0
        %812 = vmatpush2.bf16.msra.mxu0 0
        %813 = vmatprep.subr.bf16.mxu0 0
        %814 = vmatpush2.bf16.msra.mxu0 0
        %815 = vmatprep.subr.bf16.mxu0 0
        %816 = vmatpush2.bf16.msra.mxu0 0
        %817 = vmatprep.subr.bf16.mxu0 0
        %818 = vmatpush2.bf16.msra.mxu0 0
        %819 = vmatprep.subr.bf16.mxu0 0
        %820 = vmatpush2.bf16.msra.mxu0 0
        %821 = vmatprep.subr.bf16.mxu0 0
        %822 = vmatpush2.bf16.msra.mxu0 0
        %823 = vmatprep.mubr.bf16.mxu0 0
        %824 = vmatmul.mubr.bf16.gmra.mxu0 %v647
        %v825 = vpop.f32.mrf.mxu0
        %v826 = vadd.f32 0.0, %v825
        %v827 = vpop.f32.mrf.mxu0
        %v828 = vadd.f32 0.0, %v827
        %v829 = vpop.f32.mrf.mxu0
        %v830 = vadd.f32 0.0, %v829
        %v831 = vpop.f32.mrf.mxu0
        %v832 = vadd.f32 0.0, %v831
        %833 = vmatprep.mubr.bf16.mxu0 0
        %834 = vmatmul.mubr.bf16.gmra.mxu0 %v648
        %v835 = vpop.f32.mrf.mxu0
        %v836 = vadd.f32 0.0, %v835
        %v837 = vpop.f32.mrf.mxu0
        %v838 = vadd.f32 0.0, %v837
        %v839 = vpop.f32.mrf.mxu0
        %v840 = vadd.f32 0.0, %v839
        %v841 = vpop.f32.mrf.mxu0
        %v842 = vadd.f32 0.0, %v841
        %843 = vmatprep.mubr.bf16.mxu0 0
        %844 = vmatmul.mubr.bf16.gmra.mxu0 %v649
        %v845 = vpop.f32.mrf.mxu0
        %v846 = vadd.f32 0.0, %v845
        %v847 = vpop.f32.mrf.mxu0
        %v848 = vadd.f32 0.0, %v847
        %v849 = vpop.f32.mrf.mxu0
        %v850 = vadd.f32 0.0, %v849
        %v851 = vpop.f32.mrf.mxu0
        %v852 = vadd.f32 0.0, %v851
        %853 = vmatprep.mubr.bf16.mxu0 0
        %854 = vmatmul.mubr.bf16.gmra.mxu0 %v650
        %v855 = vpop.f32.mrf.mxu0
        %v856 = vadd.f32 0.0, %v855
        %v857 = vpop.f32.mrf.mxu0
        %v858 = vadd.f32 0.0, %v857
        %v859 = vpop.f32.mrf.mxu0
        %v860 = vadd.f32 0.0, %v859
        %v861 = vpop.f32.mrf.mxu0
        %v862 = vadd.f32 0.0, %v861
        %863 = vmatprep.mubr.bf16.mxu0 0
        %864 = vmatmul.mubr.bf16.gmra.mxu0 %v651
        %v865 = vpop.f32.mrf.mxu0
        %v866 = vadd.f32 0.0, %v865
        %v867 = vpop.f32.mrf.mxu0
        %v868 = vadd.f32 0.0, %v867
        %v869 = vpop.f32.mrf.mxu0
        %v870 = vadd.f32 0.0, %v869
        %v871 = vpop.f32.mrf.mxu0
        %v872 = vadd.f32 0.0, %v871
        %873 = vmatprep.mubr.bf16.mxu0 0
        %874 = vmatmul.mubr.bf16.gmra.mxu0 %v652
        %v875 = vpop.f32.mrf.mxu0
        %v876 = vadd.f32 0.0, %v875
        %v877 = vpop.f32.mrf.mxu0
        %v878 = vadd.f32 0.0, %v877
        %v879 = vpop.f32.mrf.mxu0
        %v880 = vadd.f32 0.0, %v879
        %v881 = vpop.f32.mrf.mxu0
        %v882 = vadd.f32 0.0, %v881
        %883 = vmatprep.mubr.bf16.mxu0 0
        %884 = vmatmul.mubr.bf16.gmra.mxu0 %v653
        %v885 = vpop.f32.mrf.mxu0
        %v886 = vadd.f32 0.0, %v885
        %v887 = vpop.f32.mrf.mxu0
        %v888 = vadd.f32 0.0, %v887
        %v889 = vpop.f32.mrf.mxu0
        %v890 = vadd.f32 0.0, %v889
        %v891 = vpop.f32.mrf.mxu0
        %v892 = vadd.f32 0.0, %v891
        %893 = vmatprep.mubr.bf16.mxu0 0
        %894 = vmatmul.mubr.bf16.gmra.mxu0 %v654
        %v895 = vpop.f32.mrf.mxu0
        %v896 = vadd.f32 0.0, %v895
        %v897 = vpop.f32.mrf.mxu0
        %v898 = vadd.f32 0.0, %v897
        %v899 = vpop.f32.mrf.mxu0
        %v900 = vadd.f32 0.0, %v899
        %v901 = vpop.f32.mrf.mxu0
        %v902 = vadd.f32 0.0, %v901
        %903 = vdwg.mxu0
        %904 = vmatprep.subr.bf16.mxu0 0
        %905 = vmatpush1.bf16.msra.mxu0 %v766
        %906 = vmatprep.subr.bf16.mxu0 0
        %907 = vmatpush1.bf16.msra.mxu0 %v763
        %908 = vmatprep.subr.bf16.mxu0 0
        %909 = vmatpush1.bf16.msra.mxu0 %v760
        %910 = vmatprep.subr.bf16.mxu0 0
        %911 = vmatpush1.bf16.msra.mxu0 %v757
        %912 = vmatprep.subr.bf16.mxu0 0
        %913 = vmatpush1.bf16.msra.mxu0 %v754
        %914 = vmatprep.subr.bf16.mxu0 0
        %915 = vmatpush1.bf16.msra.mxu0 %v751
        %916 = vmatprep.subr.bf16.mxu0 0
        %917 = vmatpush1.bf16.msra.mxu0 %v748
        %918 = vmatprep.subr.bf16.mxu0 0
        %919 = vmatpush1.bf16.msra.mxu0 %v745
        %920 = vmatprep.subr.bf16.mxu0 0
        %921 = vmatpush2.bf16.msra.mxu0 0
        %922 = vmatprep.subr.bf16.mxu0 0
        %923 = vmatpush2.bf16.msra.mxu0 0
        %924 = vmatprep.subr.bf16.mxu0 0
        %925 = vmatpush2.bf16.msra.mxu0 0
        %926 = vmatprep.subr.bf16.mxu0 0
        %927 = vmatpush2.bf16.msra.mxu0 0
        %928 = vmatprep.subr.bf16.mxu0 0
        %929 = vmatpush2.bf16.msra.mxu0 0
        %930 = vmatprep.subr.bf16.mxu0 0
        %931 = vmatpush2.bf16.msra.mxu0 0
        %932 = vmatprep.subr.bf16.mxu0 0
        %933 = vmatpush2.bf16.msra.mxu0 0
        %934 = vmatprep.subr.bf16.mxu0 0
        %935 = vmatpush2.bf16.msra.mxu0 0
        %936 = vmatprep.mubr.bf16.mxu0 0
        %937 = vmatmul.mubr.bf16.gmra.mxu0 %v647
        %v938 = vpop.f32.mrf.mxu0
        %v939 = vadd.f32 0.0, %v938
        %v940 = vpop.f32.mrf.mxu0
        %v941 = vpop.f32.mrf.mxu0
        %v942 = vadd.f32 0.0, %v941
        %v943 = vpop.f32.mrf.mxu0
        %944 = vmatprep.mubr.bf16.mxu0 0
        %945 = vmatmul.mubr.bf16.gmra.mxu0 %v648
        %v946 = vpop.f32.mrf.mxu0
        %v947 = vadd.f32 0.0, %v946
        %v948 = vpop.f32.mrf.mxu0
        %v949 = vpop.f32.mrf.mxu0
        %v950 = vadd.f32 0.0, %v949
        %v951 = vpop.f32.mrf.mxu0
        %952 = vmatprep.mubr.bf16.mxu0 0
        %953 = vmatmul.mubr.bf16.gmra.mxu0 %v649
        %v954 = vpop.f32.mrf.mxu0
        %v955 = vadd.f32 0.0, %v954
        %v956 = vpop.f32.mrf.mxu0
        %v957 = vpop.f32.mrf.mxu0
        %v958 = vadd.f32 0.0, %v957
        %v959 = vpop.f32.mrf.mxu0
        %960 = vmatprep.mubr.bf16.mxu0 0
        %961 = vmatmul.mubr.bf16.gmra.mxu0 %v650
        %v962 = vpop.f32.mrf.mxu0
        %v963 = vadd.f32 0.0, %v962
        %v964 = vpop.f32.mrf.mxu0
        %v965 = vpop.f32.mrf.mxu0
        %v966 = vadd.f32 0.0, %v965
        %v967 = vpop.f32.mrf.mxu0
        %968 = vmatprep.mubr.bf16.mxu0 0
        %969 = vmatmul.mubr.bf16.gmra.mxu0 %v651
        %v970 = vpop.f32.mrf.mxu0
        %v971 = vadd.f32 0.0, %v970
        %v972 = vpop.f32.mrf.mxu0
        %v973 = vpop.f32.mrf.mxu0
        %v974 = vadd.f32 0.0, %v973
        %v975 = vpop.f32.mrf.mxu0
        %976 = vmatprep.mubr.bf16.mxu0 0
        %977 = vmatmul.mubr.bf16.gmra.mxu0 %v652
        %v978 = vpop.f32.mrf.mxu0
        %v979 = vadd.f32 0.0, %v978
        %v980 = vpop.f32.mrf.mxu0
        %v981 = vpop.f32.mrf.mxu0
        %v982 = vadd.f32 0.0, %v981
        %v983 = vpop.f32.mrf.mxu0
        %984 = vmatprep.mubr.bf16.mxu0 0
        %985 = vmatmul.mubr.bf16.gmra.mxu0 %v653
        %v986 = vpop.f32.mrf.mxu0
        %v987 = vadd.f32 0.0, %v986
        %v988 = vpop.f32.mrf.mxu0
        %v989 = vpop.f32.mrf.mxu0
        %v990 = vadd.f32 0.0, %v989
        %v991 = vpop.f32.mrf.mxu0
        %992 = vmatprep.mubr.bf16.mxu0 0
        %993 = vmatmul.mubr.bf16.gmra.mxu0 %v654
        %v994 = vpop.f32.mrf.mxu0
        %v995 = vadd.f32 0.0, %v994
        %v996 = vpop.f32.mrf.mxu0
        %v997 = vpop.f32.mrf.mxu0
        %v998 = vadd.f32 0.0, %v997
        %v999 = vpop.f32.mrf.mxu0
        %1000 = vdwg.mxu0
        %v1001 = vrot.slane %v828, 1
        %v1002 = vrot.slane %v832, 1
        %v1003 = vrot.slane %v838, 1
        %v1004 = vrot.slane %v842, 1
        %v1005 = vrot.slane %v848, 1
        %v1006 = vrot.slane %v852, 1
        %v1007 = vrot.slane %v858, 1
        %v1008 = vrot.slane %v862, 1
        %v1009 = vrot.slane %v868, 1
        %v1010 = vrot.slane %v872, 1
        %v1011 = vrot.slane %v878, 1
        %v1012 = vrot.slane %v882, 1
        %v1013 = vrot.slane %v888, 1
        %v1014 = vrot.slane %v892, 1
        %v1015 = vrot.slane %v898, 1
        %v1016 = vrot.slane %v902, 1
        %vm1017 = vcmp.lt.s32.totalorder %v375, 7
        %v1018 = vsel %vm1017, %v1015, %v1016
        %v1019 = vsel %vm1017, %v1014, %v1015
        %v1020 = vsel %vm1017, %v1013, %v1014
        %v1021 = vsel %vm1017, %v1012, %v1013
        %v1022 = vsel %vm1017, %v1011, %v1012
        %v1023 = vsel %vm1017, %v1010, %v1011
        %v1024 = vsel %vm1017, %v1009, %v1010
        %v1025 = vsel %vm1017, %v1008, %v1009
        %v1026 = vsel %vm1017, %v1007, %v1008
        %v1027 = vsel %vm1017, %v1006, %v1007
        %v1028 = vsel %vm1017, %v1005, %v1006
        %v1029 = vsel %vm1017, %v1004, %v1005
        %v1030 = vsel %vm1017, %v1003, %v1004
        %v1031 = vsel %vm1017, %v1002, %v1003
        %v1032 = vsel %vm1017, %v1001, %v1002
        %v1033 = vsel %vm1017, %v1016, %v1001
        %v1034 = vadd.f32 %v826, %v1032
        %v1035 = vadd.f32 %v830, %v1031
        %v1036 = vadd.f32 %v836, %v1030
        %v1037 = vadd.f32 %v840, %v1029
        %v1038 = vadd.f32 %v846, %v1028
        %v1039 = vadd.f32 %v850, %v1027
        %v1040 = vadd.f32 %v856, %v1026
        %v1041 = vadd.f32 %v860, %v1025
        %v1042 = vadd.f32 %v866, %v1024
        %v1043 = vadd.f32 %v870, %v1023
        %v1044 = vadd.f32 %v876, %v1022
        %v1045 = vadd.f32 %v880, %v1021
        %v1046 = vadd.f32 %v886, %v1020
        %v1047 = vadd.f32 %v890, %v1019
        %v1048 = vadd.f32 %v896, %v1018
        %v1049 = vadd.f32 %v900, %v1033
        %v1050 = vrot.slane %v939, 2
        %v1051 = vrot.slane %v942, 2
        %v1052 = vrot.slane %v947, 2
        %v1053 = vrot.slane %v950, 2
        %v1054 = vrot.slane %v955, 2
        %v1055 = vrot.slane %v958, 2
        %v1056 = vrot.slane %v963, 2
        %v1057 = vrot.slane %v966, 2
        %v1058 = vrot.slane %v971, 2
        %v1059 = vrot.slane %v974, 2
        %v1060 = vrot.slane %v979, 2
        %v1061 = vrot.slane %v982, 2
        %v1062 = vrot.slane %v987, 2
        %v1063 = vrot.slane %v990, 2
        %v1064 = vrot.slane %v995, 2
        %v1065 = vrot.slane %v998, 2
        %vm1066 = vcmp.lt.s32.totalorder %v375, 6
        %v1067 = vsel %vm1066, %v1064, %v1065
        %v1068 = vsel %vm1066, %v1063, %v1064
        %v1069 = vsel %vm1066, %v1062, %v1063
        %v1070 = vsel %vm1066, %v1061, %v1062
        %v1071 = vsel %vm1066, %v1060, %v1061
        %v1072 = vsel %vm1066, %v1059, %v1060
        %v1073 = vsel %vm1066, %v1058, %v1059
        %v1074 = vsel %vm1066, %v1057, %v1058
        %v1075 = vsel %vm1066, %v1056, %v1057
        %v1076 = vsel %vm1066, %v1055, %v1056
        %v1077 = vsel %vm1066, %v1054, %v1055
        %v1078 = vsel %vm1066, %v1053, %v1054
        %v1079 = vsel %vm1066, %v1052, %v1053
        %v1080 = vsel %vm1066, %v1051, %v1052
        %v1081 = vsel %vm1066, %v1050, %v1051
        %v1082 = vsel %vm1066, %v1065, %v1050
        %v1083 = vadd.f32 %v1034, %v1081
        %v1084 = vadd.f32 %v1035, %v1080
        %v1085 = vadd.f32 %v1036, %v1079
        %v1086 = vadd.f32 %v1037, %v1078
        %v1087 = vadd.f32 %v1038, %v1077
        %v1088 = vadd.f32 %v1039, %v1076
        %v1089 = vadd.f32 %v1040, %v1075
        %v1090 = vadd.f32 %v1041, %v1074
        %v1091 = vadd.f32 %v1042, %v1073
        %v1092 = vadd.f32 %v1043, %v1072
        %v1093 = vadd.f32 %v1044, %v1071
        %v1094 = vadd.f32 %v1045, %v1070
        %v1095 = vadd.f32 %v1046, %v1069
        %v1096 = vadd.f32 %v1047, %v1068
        %v1097 = vadd.f32 %v1048, %v1067
        %v1098 = vadd.f32 %v1049, %v1082
        %v1099 = vld [vmem:[%s4] sm:$0x1]
        %v1100 = vlaneseq
        %v1101 = vshrl.u32 %v1100, 7
        %v1102 = vsub.s32 0, %v1101
        %v1103 = vrot.slane %v1099, %v1102
        %v1104 = vadd.f32 %v1083, %v1103
        %v1105 = vadd.f32 %v1084, %v1103
        %v1106 = vadd.f32 %v1085, %v1103
        %v1107 = vadd.f32 %v1086, %v1103
        %v1108 = vadd.f32 %v1087, %v1103
        %v1109 = vadd.f32 %v1088, %v1103
        %v1110 = vadd.f32 %v1089, %v1103
        %v1111 = vadd.f32 %v1090, %v1103
        %v1112 = vadd.f32 %v1091, %v1103
        %v1113 = vadd.f32 %v1092, %v1103
        %v1114 = vadd.f32 %v1093, %v1103
        %v1115 = vadd.f32 %v1094, %v1103
        %v1116 = vadd.f32 %v1095, %v1103
        %v1117 = vadd.f32 %v1096, %v1103
        %v1118 = vadd.f32 %v1097, %v1103
        %v1119 = vadd.f32 %v1098, %v1103
        %v1120 = vmax.f32 %v1104, 0.0
        %v1121 = vmax.f32 %v1105, 0.0
        %v1122 = vmax.f32 %v1106, 0.0
        %v1123 = vmax.f32 %v1107, 0.0
        %v1124 = vmax.f32 %v1108, 0.0
        %v1125 = vmax.f32 %v1109, 0.0
        %v1126 = vmax.f32 %v1110, 0.0
        %v1127 = vmax.f32 %v1111, 0.0
        %v1128 = vmax.f32 %v1112, 0.0
        %v1129 = vmax.f32 %v1113, 0.0
        %v1130 = vmax.f32 %v1114, 0.0
        %v1131 = vmax.f32 %v1115, 0.0
        %v1132 = vmax.f32 %v1116, 0.0
        %v1133 = vmax.f32 %v1117, 0.0
        %v1134 = vmax.f32 %v1118, 0.0
        %v1135 = vmax.f32 %v1119, 0.0
        %vm1136 = vcmp.lt.s32.totalorder %v567, 14
        %vm1137 = vcmp.lt.s32.totalorder %v568, 14
        %vm1138 = vcmp.lt.s32.totalorder %v569, 14
        %vm1139 = vcmp.lt.s32.totalorder %v570, 14
        %vm1140 = vcmp.lt.s32.totalorder %v571, 14
        %vm1141 = vcmp.lt.s32.totalorder %v572, 14
        %vm1142 = vcmp.lt.s32.totalorder %v573, 14
        %vm1143 = vcmp.lt.s32.totalorder %v574, 14
        %vm1144 = vcmp.lt.s32.totalorder %v575, 14
        %vm1145 = vcmp.lt.s32.totalorder %v576, 14
        %vm1146 = vcmp.lt.s32.totalorder %v577, 14
        %vm1147 = vcmp.lt.s32.totalorder %v578, 14
        %vm1148 = vcmp.lt.s32.totalorder %v579, 14
        %vm1149 = vcmp.lt.s32.totalorder %v580, 14
        %vm1150 = vcmp.lt.s32.totalorder %v581, 14
        %vm1151 = vcmp.lt.s32.totalorder %v582, 14
        %v1152 = vsel %vm1136, 1, 0
        %v1153 = vsel %vm1137, 1, 0
        %v1154 = vsel %vm1138, 1, 0
        %v1155 = vsel %vm1139, 1, 0
        %v1156 = vsel %vm1140, 1, 0
        %v1157 = vsel %vm1141, 1, 0
        %v1158 = vsel %vm1142, 1, 0
        %v1159 = vsel %vm1143, 1, 0
        %v1160 = vsel %vm1144, 1, 0
        %v1161 = vsel %vm1145, 1, 0
        %v1162 = vsel %vm1146, 1, 0
        %v1163 = vsel %vm1147, 1, 0
        %v1164 = vsel %vm1148, 1, 0
        %v1165 = vsel %vm1149, 1, 0
        %v1166 = vsel %vm1150, 1, 0
        %v1167 = vsel %vm1151, 1, 0
        %vm1168 = vcmp.eq.s32.totalorder %v1152, 1
        %vm1169 = vcmp.eq.s32.totalorder %v1153, 1
        %vm1170 = vcmp.eq.s32.totalorder %v1154, 1
        %vm1171 = vcmp.eq.s32.totalorder %v1155, 1
        %vm1172 = vcmp.eq.s32.totalorder %v1156, 1
        %vm1173 = vcmp.eq.s32.totalorder %v1157, 1
        %vm1174 = vcmp.eq.s32.totalorder %v1158, 1
        %vm1175 = vcmp.eq.s32.totalorder %v1159, 1
        %vm1176 = vcmp.eq.s32.totalorder %v1160, 1
        %vm1177 = vcmp.eq.s32.totalorder %v1161, 1
        %vm1178 = vcmp.eq.s32.totalorder %v1162, 1
        %vm1179 = vcmp.eq.s32.totalorder %v1163, 1
        %vm1180 = vcmp.eq.s32.totalorder %v1164, 1
        %vm1181 = vcmp.eq.s32.totalorder %v1165, 1
        %vm1182 = vcmp.eq.s32.totalorder %v1166, 1
        %vm1183 = vcmp.eq.s32.totalorder %v1167, 1
        %v1184 = vsel %vm1168, %v1120, 0.0
        %v1185 = vsel %vm1169, %v1121, 0.0
        %v1186 = vsel %vm1170, %v1122, 0.0
        %v1187 = vsel %vm1171, %v1123, 0.0
        %v1188 = vsel %vm1172, %v1124, 0.0
        %v1189 = vsel %vm1173, %v1125, 0.0
        %v1190 = vsel %vm1174, %v1126, 0.0
        %v1191 = vsel %vm1175, %v1127, 0.0
        %v1192 = vsel %vm1176, %v1128, 0.0
        %v1193 = vsel %vm1177, %v1129, 0.0
        %v1194 = vsel %vm1178, %v1130, 0.0
        %v1195 = vsel %vm1179, %v1131, 0.0
        %v1196 = vsel %vm1180, %v1132, 0.0
        %v1197 = vsel %vm1181, %v1133, 0.0
        %v1198 = vsel %vm1182, %v1134, 0.0
        %v1199 = vsel %vm1183, %v1135, 0.0
        %v1200 = vmax.f32 %v1184, %v1185
        %v1201 = vrot.slane %v1200, 4
        %v1202 = vmax.f32 %v1200, %v1201
        %v1203 = vrot.slane %v1202, 2
        %v1204 = vmax.f32 %v1202, %v1203
        %v1205 = vrot.slane %v1204, 1
        %v1206 = vmax.f32 %v1204, %v1205
        %v1207 = vmax.f32 %v1186, %v1187
        %v1208 = vrot.slane %v1207, 4
        %v1209 = vmax.f32 %v1207, %v1208
        %v1210 = vrot.slane %v1209, 2
        %v1211 = vmax.f32 %v1209, %v1210
        %v1212 = vrot.slane %v1211, 1
        %v1213 = vmax.f32 %v1211, %v1212
        %v1214 = vmax.f32 %v1188, %v1189
        %v1215 = vrot.slane %v1214, 4
        %v1216 = vmax.f32 %v1214, %v1215
        %v1217 = vrot.slane %v1216, 2
        %v1218 = vmax.f32 %v1216, %v1217
        %v1219 = vrot.slane %v1218, 1
        %v1220 = vmax.f32 %v1218, %v1219
        %v1221 = vmax.f32 %v1190, %v1191
        %v1222 = vrot.slane %v1221, 4
        %v1223 = vmax.f32 %v1221, %v1222
        %v1224 = vrot.slane %v1223, 2
        %v1225 = vmax.f32 %v1223, %v1224
        %v1226 = vrot.slane %v1225, 1
        %v1227 = vmax.f32 %v1225, %v1226
        %v1228 = vmax.f32 %v1192, %v1193
        %v1229 = vrot.slane %v1228, 4
        %v1230 = vmax.f32 %v1228, %v1229
        %v1231 = vrot.slane %v1230, 2
        %v1232 = vmax.f32 %v1230, %v1231
        %v1233 = vrot.slane %v1232, 1
        %v1234 = vmax.f32 %v1232, %v1233
        %v1235 = vmax.f32 %v1194, %v1195
        %v1236 = vrot.slane %v1235, 4
        %v1237 = vmax.f32 %v1235, %v1236
        %v1238 = vrot.slane %v1237, 2
        %v1239 = vmax.f32 %v1237, %v1238
        %v1240 = vrot.slane %v1239, 1
        %v1241 = vmax.f32 %v1239, %v1240
        %v1242 = vmax.f32 %v1196, %v1197
        %v1243 = vrot.slane %v1242, 4
        %v1244 = vmax.f32 %v1242, %v1243
        %v1245 = vrot.slane %v1244, 2
        %v1246 = vmax.f32 %v1244, %v1245
        %v1247 = vrot.slane %v1246, 1
        %v1248 = vmax.f32 %v1246, %v1247
        %v1249 = vmax.f32 %v1198, %v1199
        %v1250 = vrot.slane %v1249, 4
        %v1251 = vmax.f32 %v1249, %v1250
        %v1252 = vrot.slane %v1251, 2
        %v1253 = vmax.f32 %v1251, %v1252
        %v1254 = vrot.slane %v1253, 1
        %v1255 = vmax.f32 %v1253, %v1254
        %v1256 = vld [vmem:[#allocation7] sm:$0xff]
        %v1257 = vld [vmem:[#allocation7 + $0x8] sm:$0xff]
        %v1258 = vld [vmem:[#allocation7 + $0x10] sm:$0xff]
        %v1259 = vld [vmem:[#allocation7 + $0x18] sm:$0xff]
        %v1260 = vld [vmem:[#allocation7 + $0x20] sm:$0xff]
        %v1261 = vld [vmem:[#allocation7 + $0x28] sm:$0xff]
        %v1262 = vld [vmem:[#allocation7 + $0x30] sm:$0xff]
        %v1263 = vld [vmem:[#allocation7 + $0x38] sm:$0xff]
        %v1264 = vld [vmem:[#allocation7 + $0x40] sm:$0xff]
        %v1265 = vld [vmem:[#allocation7 + $0x48] sm:$0xff]
        %v1266 = vld [vmem:[#allocation7 + $0x50] sm:$0xff]
        %v1267 = vld [vmem:[#allocation7 + $0x58] sm:$0xff]
        %v1268 = vld [vmem:[#allocation7 + $0x60] sm:$0xff]
        %v1269 = vld [vmem:[#allocation7 + $0x68] sm:$0xff]
        %v1270 = vld [vmem:[#allocation7 + $0x70] sm:$0xff]
        %v1271 = vld [vmem:[#allocation7 + $0x78] sm:$0xff]
        %v1272 = vld [vmem:[#allocation7 + $0x80] sm:$0xff]
        %v1273 = vld [vmem:[#allocation7 + $0x88] sm:$0xff]
        %v1274 = vld [vmem:[#allocation7 + $0x90] sm:$0xff]
        %v1275 = vld [vmem:[#allocation7 + $0x98] sm:$0xff]
        %v1276 = vld [vmem:[#allocation7 + $0xa0] sm:$0xff]
        %v1277 = vld [vmem:[#allocation7 + $0xa8] sm:$0xff]
        %v1278 = vld [vmem:[#allocation7 + $0xb0] sm:$0xff]
        %v1279 = vld [vmem:[#allocation7 + $0xb8] sm:$0xff]
        %v1280 = vld [vmem:[#allocation7 + $0xc0] sm:$0xff]
        %v1281 = vld [vmem:[#allocation7 + $0xc8] sm:$0xff]
        %v1282 = vld [vmem:[#allocation7 + $0xd0] sm:$0xff]
        %v1283 = vld [vmem:[#allocation7 + $0xd8] sm:$0xff]
        %v1284 = vld [vmem:[#allocation7 + $0xe0] sm:$0xff]
        %v1285 = vld [vmem:[#allocation7 + $0xe8] sm:$0xff]
        %v1286 = vld [vmem:[#allocation7 + $0xf0] sm:$0xff]
        %v1287 = vld [vmem:[#allocation7 + $0xf8] sm:$0xff]
        %v1320 = vunpack.c.l.b16 %v1256
        %v1321 = vunpack.c.h.b16 %v1256
        %v1322 = vunpack.c.l.b16 %v1257
        %v1323 = vunpack.c.h.b16 %v1257
        %v1324 = vunpack.c.l.b16 %v1258
        %v1325 = vunpack.c.h.b16 %v1258
        %v1326 = vunpack.c.l.b16 %v1259
        %v1327 = vunpack.c.h.b16 %v1259
        %v1328 = vunpack.c.l.b16 %v1260
        %v1329 = vunpack.c.h.b16 %v1260
        %v1330 = vunpack.c.l.b16 %v1261
        %v1331 = vunpack.c.h.b16 %v1261
        %v1332 = vunpack.c.l.b16 %v1262
        %v1333 = vunpack.c.h.b16 %v1262
        %v1334 = vunpack.c.l.b16 %v1263
        %v1335 = vunpack.c.h.b16 %v1263
        %v1336 = vunpack.c.l.b16 %v1264
        %v1337 = vunpack.c.h.b16 %v1264
        %v1338 = vunpack.c.l.b16 %v1265
        %v1339 = vunpack.c.h.b16 %v1265
        %v1340 = vunpack.c.l.b16 %v1266
        %v1341 = vunpack.c.h.b16 %v1266
        %v1342 = vunpack.c.l.b16 %v1267
        %v1343 = vunpack.c.h.b16 %v1267
        %v1344 = vunpack.c.l.b16 %v1268
        %v1345 = vunpack.c.h.b16 %v1268
        %v1346 = vunpack.c.l.b16 %v1269
        %v1347 = vunpack.c.h.b16 %v1269
        %v1348 = vunpack.c.l.b16 %v1270
        %v1349 = vunpack.c.h.b16 %v1270
        %v1350 = vunpack.c.l.b16 %v1271
        %v1351 = vunpack.c.h.b16 %v1271
        %v1352 = vunpack.c.l.b16 %v1272
        %v1353 = vunpack.c.h.b16 %v1272
        %v1354 = vunpack.c.l.b16 %v1273
        %v1355 = vunpack.c.h.b16 %v1273
        %v1356 = vunpack.c.l.b16 %v1274
        %v1357 = vunpack.c.h.b16 %v1274
        %v1358 = vunpack.c.l.b16 %v1275
        %v1359 = vunpack.c.h.b16 %v1275
        %v1360 = vunpack.c.l.b16 %v1276
        %v1361 = vunpack.c.h.b16 %v1276
        %v1362 = vunpack.c.l.b16 %v1277
        %v1363 = vunpack.c.h.b16 %v1277
        %v1364 = vunpack.c.l.b16 %v1278
        %v1365 = vunpack.c.h.b16 %v1278
        %v1366 = vunpack.c.l.b16 %v1279
        %v1367 = vunpack.c.h.b16 %v1279
        %v1368 = vunpack.c.l.b16 %v1280
        %v1369 = vunpack.c.h.b16 %v1280
        %v1370 = vunpack.c.l.b16 %v1281
        %v1371 = vunpack.c.h.b16 %v1281
        %v1372 = vunpack.c.l.b16 %v1282
        %v1373 = vunpack.c.h.b16 %v1282
        %v1374 = vunpack.c.l.b16 %v1283
        %v1375 = vunpack.c.h.b16 %v1283
        %v1376 = vunpack.c.l.b16 %v1284
        %v1377 = vunpack.c.h.b16 %v1284
        %v1378 = vunpack.c.l.b16 %v1285
        %v1379 = vunpack.c.h.b16 %v1285
        %v1380 = vunpack.c.l.b16 %v1286
        %v1381 = vunpack.c.h.b16 %v1286
        %v1382 = vunpack.c.l.b16 %v1287
        %v1383 = vunpack.c.h.b16 %v1287
        %v1384 = vpack.c.b16 %v1324, %v1320
        %v1385 = vpack.c.b16 %v1325, %v1321
        %v1386 = vpack.c.b16 %v1326, %v1322
        %v1387 = vpack.c.b16 %v1327, %v1323
        %v1388 = vpack.c.b16 %v1332, %v1328
        %v1389 = vpack.c.b16 %v1333, %v1329
        %v1390 = vpack.c.b16 %v1334, %v1330
        %v1391 = vpack.c.b16 %v1335, %v1331
        %v1392 = vpack.c.b16 %v1340, %v1336
        %v1393 = vpack.c.b16 %v1341, %v1337
        %v1394 = vpack.c.b16 %v1342, %v1338
        %v1395 = vpack.c.b16 %v1343, %v1339
        %v1396 = vpack.c.b16 %v1348, %v1344
        %v1397 = vpack.c.b16 %v1349, %v1345
        %v1398 = vpack.c.b16 %v1350, %v1346
        %v1399 = vpack.c.b16 %v1351, %v1347
        %v1400 = vpack.c.b16 %v1356, %v1352
        %v1401 = vpack.c.b16 %v1357, %v1353
        %v1402 = vpack.c.b16 %v1358, %v1354
        %v1403 = vpack.c.b16 %v1359, %v1355
        %v1404 = vpack.c.b16 %v1364, %v1360
        %v1405 = vpack.c.b16 %v1365, %v1361
        %v1406 = vpack.c.b16 %v1366, %v1362
        %v1407 = vpack.c.b16 %v1367, %v1363
        %v1408 = vpack.c.b16 %v1372, %v1368
        %v1409 = vpack.c.b16 %v1373, %v1369
        %v1410 = vpack.c.b16 %v1374, %v1370
        %v1411 = vpack.c.b16 %v1375, %v1371
        %v1412 = vpack.c.b16 %v1380, %v1376
        %v1413 = vpack.c.b16 %v1381, %v1377
        %v1414 = vpack.c.b16 %v1382, %v1378
        %v1415 = vpack.c.b16 %v1383, %v1379
        %1448 = vmatprep.subr.bf16.mxu0 %v1413
        %1449 = vmatpush1.bf16.msra.mxu0 %v1412
        %1450 = vmatprep.subr.bf16.mxu0 %v1409
        %1451 = vmatpush1.bf16.msra.mxu0 %v1408
        %1452 = vmatprep.subr.bf16.mxu0 %v1405
        %1453 = vmatpush1.bf16.msra.mxu0 %v1404
        %1454 = vmatprep.subr.bf16.mxu0 %v1401
        %1455 = vmatpush1.bf16.msra.mxu0 %v1400
        %1456 = vmatprep.subr.bf16.mxu0 %v1397
        %1457 = vmatpush1.bf16.msra.mxu0 %v1396
        %1458 = vmatprep.subr.bf16.mxu0 %v1393
        %1459 = vmatpush1.bf16.msra.mxu0 %v1392
        %1460 = vmatprep.subr.bf16.mxu0 %v1389
        %1461 = vmatpush1.bf16.msra.mxu0 %v1388
        %1462 = vmatprep.subr.bf16.mxu0 %v1385
        %1463 = vmatpush1.bf16.msra.mxu0 %v1384
        %1464 = vmatprep.subr.bf16.mxu0 0
        %1465 = vmatpush2.bf16.msra.mxu0 0
        %1466 = vmatprep.subr.bf16.mxu0 0
        %1467 = vmatpush2.bf16.msra.mxu0 0
        %1468 = vmatprep.subr.bf16.mxu0 0
        %1469 = vmatpush2.bf16.msra.mxu0 0
        %1470 = vmatprep.subr.bf16.mxu0 0
        %1471 = vmatpush2.bf16.msra.mxu0 0
        %1472 = vmatprep.subr.bf16.mxu0 0
        %1473 = vmatpush2.bf16.msra.mxu0 0
        %1474 = vmatprep.subr.bf16.mxu0 0
        %1475 = vmatpush2.bf16.msra.mxu0 0
        %1476 = vmatprep.subr.bf16.mxu0 0
        %1477 = vmatpush2.bf16.msra.mxu0 0
        %1478 = vmatprep.subr.bf16.mxu0 0
        %1479 = vmatpush2.bf16.msra.mxu0 0
        %1480 = vmatprep.mubr.bf16.mxu0 0
        %1481 = vmatmul.mubr.bf16.gmra.mxu0 %v647
        %v1482 = vpop.f32.mrf.mxu0
        %v1483 = vadd.f32 0.0, %v1482
        %v1484 = vpop.f32.mrf.mxu0
        %v1485 = vadd.f32 0.0, %v1484
        %v1486 = vpop.f32.mrf.mxu0
        %v1487 = vadd.f32 0.0, %v1486
        %v1488 = vpop.f32.mrf.mxu0
        %v1489 = vadd.f32 0.0, %v1488
        %1490 = vmatprep.mubr.bf16.mxu0 0
        %1491 = vmatmul.mubr.bf16.gmra.mxu0 %v648
        %v1492 = vpop.f32.mrf.mxu0
        %v1493 = vadd.f32 0.0, %v1492
        %v1494 = vpop.f32.mrf.mxu0
        %v1495 = vadd.f32 0.0, %v1494
        %v1496 = vpop.f32.mrf.mxu0
        %v1497 = vadd.f32 0.0, %v1496
        %v1498 = vpop.f32.mrf.mxu0
        %v1499 = vadd.f32 0.0, %v1498
        %1500 = vmatprep.mubr.bf16.mxu0 0
        %1501 = vmatmul.mubr.bf16.gmra.mxu0 %v649
        %v1502 = vpop.f32.mrf.mxu0
        %v1503 = vadd.f32 0.0, %v1502
        %v1504 = vpop.f32.mrf.mxu0
        %v1505 = vadd.f32 0.0, %v1504
        %v1506 = vpop.f32.mrf.mxu0
        %v1507 = vadd.f32 0.0, %v1506
        %v1508 = vpop.f32.mrf.mxu0
        %v1509 = vadd.f32 0.0, %v1508
        %1510 = vmatprep.mubr.bf16.mxu0 0
        %1511 = vmatmul.mubr.bf16.gmra.mxu0 %v650
        %v1512 = vpop.f32.mrf.mxu0
        %v1513 = vadd.f32 0.0, %v1512
        %v1514 = vpop.f32.mrf.mxu0
        %v1515 = vadd.f32 0.0, %v1514
        %v1516 = vpop.f32.mrf.mxu0
        %v1517 = vadd.f32 0.0, %v1516
        %v1518 = vpop.f32.mrf.mxu0
        %v1519 = vadd.f32 0.0, %v1518
        %1520 = vmatprep.mubr.bf16.mxu0 0
        %1521 = vmatmul.mubr.bf16.gmra.mxu0 %v651
        %v1522 = vpop.f32.mrf.mxu0
        %v1523 = vadd.f32 0.0, %v1522
        %v1524 = vpop.f32.mrf.mxu0
        %v1525 = vadd.f32 0.0, %v1524
        %v1526 = vpop.f32.mrf.mxu0
        %v1527 = vadd.f32 0.0, %v1526
        %v1528 = vpop.f32.mrf.mxu0
        %v1529 = vadd.f32 0.0, %v1528
        %1530 = vmatprep.mubr.bf16.mxu0 0
        %1531 = vmatmul.mubr.bf16.gmra.mxu0 %v652
        %v1532 = vpop.f32.mrf.mxu0
        %v1533 = vadd.f32 0.0, %v1532
        %v1534 = vpop.f32.mrf.mxu0
        %v1535 = vadd.f32 0.0, %v1534
        %v1536 = vpop.f32.mrf.mxu0
        %v1537 = vadd.f32 0.0, %v1536
        %v1538 = vpop.f32.mrf.mxu0
        %v1539 = vadd.f32 0.0, %v1538
        %1540 = vmatprep.mubr.bf16.mxu0 0
        %1541 = vmatmul.mubr.bf16.gmra.mxu0 %v653
        %v1542 = vpop.f32.mrf.mxu0
        %v1543 = vadd.f32 0.0, %v1542
        %v1544 = vpop.f32.mrf.mxu0
        %v1545 = vadd.f32 0.0, %v1544
        %v1546 = vpop.f32.mrf.mxu0
        %v1547 = vadd.f32 0.0, %v1546
        %v1548 = vpop.f32.mrf.mxu0
        %v1549 = vadd.f32 0.0, %v1548
        %1550 = vmatprep.mubr.bf16.mxu0 0
        %1551 = vmatmul.mubr.bf16.gmra.mxu0 %v654
        %v1552 = vpop.f32.mrf.mxu0
        %v1553 = vadd.f32 0.0, %v1552
        %v1554 = vpop.f32.mrf.mxu0
        %v1555 = vadd.f32 0.0, %v1554
        %v1556 = vpop.f32.mrf.mxu0
        %v1557 = vadd.f32 0.0, %v1556
        %v1558 = vpop.f32.mrf.mxu0
        %v1559 = vadd.f32 0.0, %v1558
        %1560 = vdwg.mxu0
        %1561 = vmatprep.subr.bf16.mxu0 %v1415
        %1562 = vmatpush1.bf16.msra.mxu0 %v1414
        %1563 = vmatprep.subr.bf16.mxu0 %v1411
        %1564 = vmatpush1.bf16.msra.mxu0 %v1410
        %1565 = vmatprep.subr.bf16.mxu0 %v1407
        %1566 = vmatpush1.bf16.msra.mxu0 %v1406
        %1567 = vmatprep.subr.bf16.mxu0 %v1403
        %1568 = vmatpush1.bf16.msra.mxu0 %v1402
        %1569 = vmatprep.subr.bf16.mxu0 %v1399
        %1570 = vmatpush1.bf16.msra.mxu0 %v1398
        %1571 = vmatprep.subr.bf16.mxu0 %v1395
        %1572 = vmatpush1.bf16.msra.mxu0 %v1394
        %1573 = vmatprep.subr.bf16.mxu0 %v1391
        %1574 = vmatpush1.bf16.msra.mxu0 %v1390
        %1575 = vmatprep.subr.bf16.mxu0 %v1387
        %1576 = vmatpush1.bf16.msra.mxu0 %v1386
        %1577 = vmatprep.subr.bf16.mxu0 0
        %1578 = vmatpush2.bf16.msra.mxu0 0
        %1579 = vmatprep.subr.bf16.mxu0 0
        %1580 = vmatpush2.bf16.msra.mxu0 0
        %1581 = vmatprep.subr.bf16.mxu0 0
        %1582 = vmatpush2.bf16.msra.mxu0 0
        %1583 = vmatprep.subr.bf16.mxu0 0
        %1584 = vmatpush2.bf16.msra.mxu0 0
        %1585 = vmatprep.subr.bf16.mxu0 0
        %1586 = vmatpush2.bf16.msra.mxu0 0
        %1587 = vmatprep.subr.bf16.mxu0 0
        %1588 = vmatpush2.bf16.msra.mxu0 0
        %1589 = vmatprep.subr.bf16.mxu0 0
        %1590 = vmatpush2.bf16.msra.mxu0 0
        %1591 = vmatprep.subr.bf16.mxu0 0
        %1592 = vmatpush2.bf16.msra.mxu0 0
        %1593 = vmatprep.mubr.bf16.mxu0 0
        %1594 = vmatmul.mubr.bf16.gmra.mxu0 %v647
        %v1595 = vpop.f32.mrf.mxu0
        %v1596 = vadd.f32 0.0, %v1595
        %v1597 = vpop.f32.mrf.mxu0
        %v1598 = vadd.f32 0.0, %v1597
        %v1599 = vpop.f32.mrf.mxu0
        %v1600 = vadd.f32 0.0, %v1599
        %v1601 = vpop.f32.mrf.mxu0
        %v1602 = vadd.f32 0.0, %v1601
        %1603 = vmatprep.mubr.bf16.mxu0 0
        %1604 = vmatmul.mubr.bf16.gmra.mxu0 %v648
        %v1605 = vpop.f32.mrf.mxu0
        %v1606 = vadd.f32 0.0, %v1605
        %v1607 = vpop.f32.mrf.mxu0
        %v1608 = vadd.f32 0.0, %v1607
        %v1609 = vpop.f32.mrf.mxu0
        %v1610 = vadd.f32 0.0, %v1609
        %v1611 = vpop.f32.mrf.mxu0
        %v1612 = vadd.f32 0.0, %v1611
        %1613 = vmatprep.mubr.bf16.mxu0 0
        %1614 = vmatmul.mubr.bf16.gmra.mxu0 %v649
        %v1615 = vpop.f32.mrf.mxu0
        %v1616 = vadd.f32 0.0, %v1615
        %v1617 = vpop.f32.mrf.mxu0
        %v1618 = vadd.f32 0.0, %v1617
        %v1619 = vpop.f32.mrf.mxu0
        %v1620 = vadd.f32 0.0, %v1619
        %v1621 = vpop.f32.mrf.mxu0
        %v1622 = vadd.f32 0.0, %v1621
        %1623 = vmatprep.mubr.bf16.mxu0 0
        %1624 = vmatmul.mubr.bf16.gmra.mxu0 %v650
        %v1625 = vpop.f32.mrf.mxu0
        %v1626 = vadd.f32 0.0, %v1625
        %v1627 = vpop.f32.mrf.mxu0
        %v1628 = vadd.f32 0.0, %v1627
        %v1629 = vpop.f32.mrf.mxu0
        %v1630 = vadd.f32 0.0, %v1629
        %v1631 = vpop.f32.mrf.mxu0
        %v1632 = vadd.f32 0.0, %v1631
        %1633 = vmatprep.mubr.bf16.mxu0 0
        %1634 = vmatmul.mubr.bf16.gmra.mxu0 %v651
        %v1635 = vpop.f32.mrf.mxu0
        %v1636 = vadd.f32 0.0, %v1635
        %v1637 = vpop.f32.mrf.mxu0
        %v1638 = vadd.f32 0.0, %v1637
        %v1639 = vpop.f32.mrf.mxu0
        %v1640 = vadd.f32 0.0, %v1639
        %v1641 = vpop.f32.mrf.mxu0
        %v1642 = vadd.f32 0.0, %v1641
        %1643 = vmatprep.mubr.bf16.mxu0 0
        %1644 = vmatmul.mubr.bf16.gmra.mxu0 %v652
        %v1645 = vpop.f32.mrf.mxu0
        %v1646 = vadd.f32 0.0, %v1645
        %v1647 = vpop.f32.mrf.mxu0
        %v1648 = vadd.f32 0.0, %v1647
        %v1649 = vpop.f32.mrf.mxu0
        %v1650 = vadd.f32 0.0, %v1649
        %v1651 = vpop.f32.mrf.mxu0
        %v1652 = vadd.f32 0.0, %v1651
        %1653 = vmatprep.mubr.bf16.mxu0 0
        %1654 = vmatmul.mubr.bf16.gmra.mxu0 %v653
        %v1655 = vpop.f32.mrf.mxu0
        %v1656 = vadd.f32 0.0, %v1655
        %v1657 = vpop.f32.mrf.mxu0
        %v1658 = vadd.f32 0.0, %v1657
        %v1659 = vpop.f32.mrf.mxu0
        %v1660 = vadd.f32 0.0, %v1659
        %v1661 = vpop.f32.mrf.mxu0
        %v1662 = vadd.f32 0.0, %v1661
        %1663 = vmatprep.mubr.bf16.mxu0 0
        %1664 = vmatmul.mubr.bf16.gmra.mxu0 %v654
        %v1665 = vpop.f32.mrf.mxu0
        %v1666 = vadd.f32 0.0, %v1665
        %v1667 = vpop.f32.mrf.mxu0
        %v1668 = vadd.f32 0.0, %v1667
        %v1669 = vpop.f32.mrf.mxu0
        %v1670 = vadd.f32 0.0, %v1669
        %v1671 = vpop.f32.mrf.mxu0
        %v1672 = vadd.f32 0.0, %v1671
        %1673 = vdwg.mxu0
        %v1674 = vrot.slane %v1485, 1
        %v1675 = vrot.slane %v1489, 1
        %v1676 = vrot.slane %v1495, 1
        %v1677 = vrot.slane %v1499, 1
        %v1678 = vrot.slane %v1505, 1
        %v1679 = vrot.slane %v1509, 1
        %v1680 = vrot.slane %v1515, 1
        %v1681 = vrot.slane %v1519, 1
        %v1682 = vrot.slane %v1525, 1
        %v1683 = vrot.slane %v1529, 1
        %v1684 = vrot.slane %v1535, 1
        %v1685 = vrot.slane %v1539, 1
        %v1686 = vrot.slane %v1545, 1
        %v1687 = vrot.slane %v1549, 1
        %v1688 = vrot.slane %v1555, 1
        %v1689 = vrot.slane %v1559, 1
        %v1690 = vsel %vm1017, %v1688, %v1689
        %v1691 = vsel %vm1017, %v1687, %v1688
        %v1692 = vsel %vm1017, %v1686, %v1687
        %v1693 = vsel %vm1017, %v1685, %v1686
        %v1694 = vsel %vm1017, %v1684, %v1685
        %v1695 = vsel %vm1017, %v1683, %v1684
        %v1696 = vsel %vm1017, %v1682, %v1683
        %v1697 = vsel %vm1017, %v1681, %v1682
        %v1698 = vsel %vm1017, %v1680, %v1681
        %v1699 = vsel %vm1017, %v1679, %v1680
        %v1700 = vsel %vm1017, %v1678, %v1679
        %v1701 = vsel %vm1017, %v1677, %v1678
        %v1702 = vsel %vm1017, %v1676, %v1677
        %v1703 = vsel %vm1017, %v1675, %v1676
        %v1704 = vsel %vm1017, %v1674, %v1675
        %v1705 = vsel %vm1017, %v1689, %v1674
        %v1706 = vadd.f32 %v1483, %v1704
        %v1707 = vadd.f32 %v1487, %v1703
        %v1708 = vadd.f32 %v1493, %v1702
        %v1709 = vadd.f32 %v1497, %v1701
        %v1710 = vadd.f32 %v1503, %v1700
        %v1711 = vadd.f32 %v1507, %v1699
        %v1712 = vadd.f32 %v1513, %v1698
        %v1713 = vadd.f32 %v1517, %v1697
        %v1714 = vadd.f32 %v1523, %v1696
        %v1715 = vadd.f32 %v1527, %v1695
        %v1716 = vadd.f32 %v1533, %v1694
        %v1717 = vadd.f32 %v1537, %v1693
        %v1718 = vadd.f32 %v1543, %v1692
        %v1719 = vadd.f32 %v1547, %v1691
        %v1720 = vadd.f32 %v1553, %v1690
        %v1721 = vadd.f32 %v1557, %v1705
        %v1722 = vrot.slane %v1596, 2
        %v1723 = vrot.slane %v1600, 2
        %v1724 = vrot.slane %v1606, 2
        %v1725 = vrot.slane %v1610, 2
        %v1726 = vrot.slane %v1616, 2
        %v1727 = vrot.slane %v1620, 2
        %v1728 = vrot.slane %v1626, 2
        %v1729 = vrot.slane %v1630, 2
        %v1730 = vrot.slane %v1636, 2
        %v1731 = vrot.slane %v1640, 2
        %v1732 = vrot.slane %v1646, 2
        %v1733 = vrot.slane %v1650, 2
        %v1734 = vrot.slane %v1656, 2
        %v1735 = vrot.slane %v1660, 2
        %v1736 = vrot.slane %v1666, 2
        %v1737 = vrot.slane %v1670, 2
        %v1738 = vsel %vm1066, %v1736, %v1737
        %v1739 = vsel %vm1066, %v1735, %v1736
        %v1740 = vsel %vm1066, %v1734, %v1735
        %v1741 = vsel %vm1066, %v1733, %v1734
        %v1742 = vsel %vm1066, %v1732, %v1733
        %v1743 = vsel %vm1066, %v1731, %v1732
        %v1744 = vsel %vm1066, %v1730, %v1731
        %v1745 = vsel %vm1066, %v1729, %v1730
        %v1746 = vsel %vm1066, %v1728, %v1729
        %v1747 = vsel %vm1066, %v1727, %v1728
        %v1748 = vsel %vm1066, %v1726, %v1727
        %v1749 = vsel %vm1066, %v1725, %v1726
        %v1750 = vsel %vm1066, %v1724, %v1725
        %v1751 = vsel %vm1066, %v1723, %v1724
        %v1752 = vsel %vm1066, %v1722, %v1723
        %v1753 = vsel %vm1066, %v1737, %v1722
        %v1754 = vadd.f32 %v1706, %v1752
        %v1755 = vadd.f32 %v1707, %v1751
        %v1756 = vadd.f32 %v1708, %v1750
        %v1757 = vadd.f32 %v1709, %v1749
        %v1758 = vadd.f32 %v1710, %v1748
        %v1759 = vadd.f32 %v1711, %v1747
        %v1760 = vadd.f32 %v1712, %v1746
        %v1761 = vadd.f32 %v1713, %v1745
        %v1762 = vadd.f32 %v1714, %v1744
        %v1763 = vadd.f32 %v1715, %v1743
        %v1764 = vadd.f32 %v1716, %v1742
        %v1765 = vadd.f32 %v1717, %v1741
        %v1766 = vadd.f32 %v1718, %v1740
        %v1767 = vadd.f32 %v1719, %v1739
        %v1768 = vadd.f32 %v1720, %v1738
        %v1769 = vadd.f32 %v1721, %v1753
        %v1770 = vrot.slane %v1598, 3
        %v1771 = vrot.slane %v1602, 3
        %v1772 = vrot.slane %v1608, 3
        %v1773 = vrot.slane %v1612, 3
        %v1774 = vrot.slane %v1618, 3
        %v1775 = vrot.slane %v1622, 3
        %v1776 = vrot.slane %v1628, 3
        %v1777 = vrot.slane %v1632, 3
        %v1778 = vrot.slane %v1638, 3
        %v1779 = vrot.slane %v1642, 3
        %v1780 = vrot.slane %v1648, 3
        %v1781 = vrot.slane %v1652, 3
        %v1782 = vrot.slane %v1658, 3
        %v1783 = vrot.slane %v1662, 3
        %v1784 = vrot.slane %v1668, 3
        %v1785 = vrot.slane %v1672, 3
        %vm1786 = vcmp.lt.s32.totalorder %v375, 5
        %v1787 = vsel %vm1786, %v1784, %v1785
        %v1788 = vsel %vm1786, %v1783, %v1784
        %v1789 = vsel %vm1786, %v1782, %v1783
        %v1790 = vsel %vm1786, %v1781, %v1782
        %v1791 = vsel %vm1786, %v1780, %v1781
        %v1792 = vsel %vm1786, %v1779, %v1780
        %v1793 = vsel %vm1786, %v1778, %v1779
        %v1794 = vsel %vm1786, %v1777, %v1778
        %v1795 = vsel %vm1786, %v1776, %v1777
        %v1796 = vsel %vm1786, %v1775, %v1776
        %v1797 = vsel %vm1786, %v1774, %v1775
        %v1798 = vsel %vm1786, %v1773, %v1774
        %v1799 = vsel %vm1786, %v1772, %v1773
        %v1800 = vsel %vm1786, %v1771, %v1772
        %v1801 = vsel %vm1786, %v1770, %v1771
        %v1802 = vsel %vm1786, %v1785, %v1770
        %v1803 = vadd.f32 %v1754, %v1801
        %v1804 = vadd.f32 %v1755, %v1800
        %v1805 = vadd.f32 %v1756, %v1799
        %v1806 = vadd.f32 %v1757, %v1798
        %v1807 = vadd.f32 %v1758, %v1797
        %v1808 = vadd.f32 %v1759, %v1796
        %v1809 = vadd.f32 %v1760, %v1795
        %v1810 = vadd.f32 %v1761, %v1794
        %v1811 = vadd.f32 %v1762, %v1793
        %v1812 = vadd.f32 %v1763, %v1792
        %v1813 = vadd.f32 %v1764, %v1791
        %v1814 = vadd.f32 %v1765, %v1790
        %v1815 = vadd.f32 %v1766, %v1789
        %v1816 = vadd.f32 %v1767, %v1788
        %v1817 = vadd.f32 %v1768, %v1787
        %v1818 = vadd.f32 %v1769, %v1802
        %v1819 = vld [vmem:[%s4 + $0x1] sm:$0x1]
        %v1820 = vlaneseq
        %v1821 = vshrl.u32 %v1820, 7
        %v1822 = vsub.s32 0, %v1821
        %v1823 = vrot.slane %v1819, %v1822
        %v1824 = vadd.f32 %v1803, %v1823
        %v1825 = vadd.f32 %v1804, %v1823
        %v1826 = vadd.f32 %v1805, %v1823
        %v1827 = vadd.f32 %v1806, %v1823
        %v1828 = vadd.f32 %v1807, %v1823
        %v1829 = vadd.f32 %v1808, %v1823
        %v1830 = vadd.f32 %v1809, %v1823
        %v1831 = vadd.f32 %v1810, %v1823
        %v1832 = vadd.f32 %v1811, %v1823
        %v1833 = vadd.f32 %v1812, %v1823
        %v1834 = vadd.f32 %v1813, %v1823
        %v1835 = vadd.f32 %v1814, %v1823
        %v1836 = vadd.f32 %v1815, %v1823
        %v1837 = vadd.f32 %v1816, %v1823
        %v1838 = vadd.f32 %v1817, %v1823
        %v1839 = vadd.f32 %v1818, %v1823
        %v1840 = vmax.f32 %v1824, 0.0
        %v1841 = vmax.f32 %v1825, 0.0
        %v1842 = vmax.f32 %v1826, 0.0
        %v1843 = vmax.f32 %v1827, 0.0
        %v1844 = vmax.f32 %v1828, 0.0
        %v1845 = vmax.f32 %v1829, 0.0
        %v1846 = vmax.f32 %v1830, 0.0
        %v1847 = vmax.f32 %v1831, 0.0
        %v1848 = vmax.f32 %v1832, 0.0
        %v1849 = vmax.f32 %v1833, 0.0
        %v1850 = vmax.f32 %v1834, 0.0
        %v1851 = vmax.f32 %v1835, 0.0
        %v1852 = vmax.f32 %v1836, 0.0
        %v1853 = vmax.f32 %v1837, 0.0
        %v1854 = vmax.f32 %v1838, 0.0
        %v1855 = vmax.f32 %v1839, 0.0
        %vm1856 = vcmp.lt.s32.totalorder %v567, 13
        %vm1857 = vcmp.lt.s32.totalorder %v568, 13
        %vm1858 = vcmp.lt.s32.totalorder %v569, 13
        %vm1859 = vcmp.lt.s32.totalorder %v570, 13
        %vm1860 = vcmp.lt.s32.totalorder %v571, 13
        %vm1861 = vcmp.lt.s32.totalorder %v572, 13
        %vm1862 = vcmp.lt.s32.totalorder %v573, 13
        %vm1863 = vcmp.lt.s32.totalorder %v574, 13
        %vm1864 = vcmp.lt.s32.totalorder %v575, 13
        %vm1865 = vcmp.lt.s32.totalorder %v576, 13
        %vm1866 = vcmp.lt.s32.totalorder %v577, 13
        %vm1867 = vcmp.lt.s32.totalorder %v578, 13
        %vm1868 = vcmp.lt.s32.totalorder %v579, 13
        %vm1869 = vcmp.lt.s32.totalorder %v580, 13
        %vm1870 = vcmp.lt.s32.totalorder %v581, 13
        %vm1871 = vcmp.lt.s32.totalorder %v582, 13
        %v1872 = vsel %vm1856, 1, 0
        %v1873 = vsel %vm1857, 1, 0
        %v1874 = vsel %vm1858, 1, 0
        %v1875 = vsel %vm1859, 1, 0
        %v1876 = vsel %vm1860, 1, 0
        %v1877 = vsel %vm1861, 1, 0
        %v1878 = vsel %vm1862, 1, 0
        %v1879 = vsel %vm1863, 1, 0
        %v1880 = vsel %vm1864, 1, 0
        %v1881 = vsel %vm1865, 1, 0
        %v1882 = vsel %vm1866, 1, 0
        %v1883 = vsel %vm1867, 1, 0
        %v1884 = vsel %vm1868, 1, 0
        %v1885 = vsel %vm1869, 1, 0
        %v1886 = vsel %vm1870, 1, 0
        %v1887 = vsel %vm1871, 1, 0
        %vm1888 = vcmp.eq.s32.totalorder %v1872, 1
        %vm1889 = vcmp.eq.s32.totalorder %v1873, 1
        %vm1890 = vcmp.eq.s32.totalorder %v1874, 1
        %vm1891 = vcmp.eq.s32.totalorder %v1875, 1
        %vm1892 = vcmp.eq.s32.totalorder %v1876, 1
        %vm1893 = vcmp.eq.s32.totalorder %v1877, 1
        %vm1894 = vcmp.eq.s32.totalorder %v1878, 1
        %vm1895 = vcmp.eq.s32.totalorder %v1879, 1
        %vm1896 = vcmp.eq.s32.totalorder %v1880, 1
        %vm1897 = vcmp.eq.s32.totalorder %v1881, 1
        %vm1898 = vcmp.eq.s32.totalorder %v1882, 1
        %vm1899 = vcmp.eq.s32.totalorder %v1883, 1
        %vm1900 = vcmp.eq.s32.totalorder %v1884, 1
        %vm1901 = vcmp.eq.s32.totalorder %v1885, 1
        %vm1902 = vcmp.eq.s32.totalorder %v1886, 1
        %vm1903 = vcmp.eq.s32.totalorder %v1887, 1
        %v1904 = vsel %vm1888, %v1840, 0.0
        %v1905 = vsel %vm1889, %v1841, 0.0
        %v1906 = vsel %vm1890, %v1842, 0.0
        %v1907 = vsel %vm1891, %v1843, 0.0
        %v1908 = vsel %vm1892, %v1844, 0.0
        %v1909 = vsel %vm1893, %v1845, 0.0
        %v1910 = vsel %vm1894, %v1846, 0.0
        %v1911 = vsel %vm1895, %v1847, 0.0
        %v1912 = vsel %vm1896, %v1848, 0.0
        %v1913 = vsel %vm1897, %v1849, 0.0
        %v1914 = vsel %vm1898, %v1850, 0.0
        %v1915 = vsel %vm1899, %v1851, 0.0
        %v1916 = vsel %vm1900, %v1852, 0.0
        %v1917 = vsel %vm1901, %v1853, 0.0
        %v1918 = vsel %vm1902, %v1854, 0.0
        %v1919 = vsel %vm1903, %v1855, 0.0
        %v1920 = vmax.f32 %v1904, %v1905
        %v1921 = vrot.slane %v1920, 4
        %v1922 = vmax.f32 %v1920, %v1921
        %v1923 = vrot.slane %v1922, 2
        %v1924 = vmax.f32 %v1922, %v1923
        %v1925 = vrot.slane %v1924, 1
        %v1926 = vmax.f32 %v1924, %v1925
        %v1927 = vmax.f32 %v1906, %v1907
        %v1928 = vrot.slane %v1927, 4
        %v1929 = vmax.f32 %v1927, %v1928
        %v1930 = vrot.slane %v1929, 2
        %v1931 = vmax.f32 %v1929, %v1930
        %v1932 = vrot.slane %v1931, 1
        %v1933 = vmax.f32 %v1931, %v1932
        %v1934 = vmax.f32 %v1908, %v1909
        %v1935 = vrot.slane %v1934, 4
        %v1936 = vmax.f32 %v1934, %v1935
        %v1937 = vrot.slane %v1936, 2
        %v1938 = vmax.f32 %v1936, %v1937
        %v1939 = vrot.slane %v1938, 1
        %v1940 = vmax.f32 %v1938, %v1939
        %v1941 = vmax.f32 %v1910, %v1911
        %v1942 = vrot.slane %v1941, 4
        %v1943 = vmax.f32 %v1941, %v1942
        %v1944 = vrot.slane %v1943, 2
        %v1945 = vmax.f32 %v1943, %v1944
        %v1946 = vrot.slane %v1945, 1
        %v1947 = vmax.f32 %v1945, %v1946
        %v1948 = vmax.f32 %v1912, %v1913
        %v1949 = vrot.slane %v1948, 4
        %v1950 = vmax.f32 %v1948, %v1949
        %v1951 = vrot.slane %v1950, 2
        %v1952 = vmax.f32 %v1950, %v1951
        %v1953 = vrot.slane %v1952, 1
        %v1954 = vmax.f32 %v1952, %v1953
        %v1955 = vmax.f32 %v1914, %v1915
        %v1956 = vrot.slane %v1955, 4
        %v1957 = vmax.f32 %v1955, %v1956
        %v1958 = vrot.slane %v1957, 2
        %v1959 = vmax.f32 %v1957, %v1958
        %v1960 = vrot.slane %v1959, 1
        %v1961 = vmax.f32 %v1959, %v1960
        %v1962 = vmax.f32 %v1916, %v1917
        %v1963 = vrot.slane %v1962, 4
        %v1964 = vmax.f32 %v1962, %v1963
        %v1965 = vrot.slane %v1964, 2
        %v1966 = vmax.f32 %v1964, %v1965
        %v1967 = vrot.slane %v1966, 1
        %v1968 = vmax.f32 %v1966, %v1967
        %v1969 = vmax.f32 %v1918, %v1919
        %v1970 = vrot.slane %v1969, 4
        %v1971 = vmax.f32 %v1969, %v1970
        %v1972 = vrot.slane %v1971, 2
        %v1973 = vmax.f32 %v1971, %v1972
        %v1974 = vrot.slane %v1973, 1
        %v1975 = vmax.f32 %v1973, %v1974
        %v1976 = vld [vmem:[#allocation8] sm:$0xff]
        %v1977 = vld [vmem:[#allocation8 + $0x8] sm:$0xff]
        %v1978 = vld [vmem:[#allocation8 + $0x10] sm:$0xf]
        %v1979 = vld [vmem:[#allocation8 + $0x14] sm:$0xff]
        %v1980 = vld [vmem:[#allocation8 + $0x1c] sm:$0xff]
        %v1981 = vld [vmem:[#allocation8 + $0x24] sm:$0xf]
        %v1982 = vld [vmem:[#allocation8 + $0x28] sm:$0xff]
        %v1983 = vld [vmem:[#allocation8 + $0x30] sm:$0xff]
        %v1984 = vld [vmem:[#allocation8 + $0x38] sm:$0xf]
        %v1985 = vld [vmem:[#allocation8 + $0x3c] sm:$0xff]
        %v1986 = vld [vmem:[#allocation8 + $0x44] sm:$0xff]
        %v1987 = vld [vmem:[#allocation8 + $0x4c] sm:$0xf]
        %v1988 = vld [vmem:[#allocation8 + $0x50] sm:$0xff]
        %v1989 = vld [vmem:[#allocation8 + $0x58] sm:$0xff]
        %v1990 = vld [vmem:[#allocation8 + $0x60] sm:$0xf]
        %v1991 = vld [vmem:[#allocation8 + $0x64] sm:$0xff]
        %v1992 = vld [vmem:[#allocation8 + $0x6c] sm:$0xff]
        %v1993 = vld [vmem:[#allocation8 + $0x74] sm:$0xf]
        %v1994 = vld [vmem:[#allocation8 + $0x78] sm:$0xff]
        %v1995 = vld [vmem:[#allocation8 + $0x80] sm:$0xff]
        %v1996 = vld [vmem:[#allocation8 + $0x88] sm:$0xf]
        %v1997 = vld [vmem:[#allocation8 + $0x8c] sm:$0xff]
        %v1998 = vld [vmem:[#allocation8 + $0x94] sm:$0xff]
        %v1999 = vld [vmem:[#allocation8 + $0x9c] sm:$0xf]
        %v2000 = vld [vmem:[#allocation8 + $0xa0] sm:$0xff]
        %v2001 = vld [vmem:[#allocation8 + $0xa8] sm:$0xff]
        %v2002 = vld [vmem:[#allocation8 + $0xb0] sm:$0xf]
        %v2003 = vld [vmem:[#allocation8 + $0xb4] sm:$0xff]
        %v2004 = vld [vmem:[#allocation8 + $0xbc] sm:$0xff]
        %v2005 = vld [vmem:[#allocation8 + $0xc4] sm:$0xf]
        %v2006 = vld [vmem:[#allocation8 + $0xc8] sm:$0xff]
        %v2007 = vld [vmem:[#allocation8 + $0xd0] sm:$0xff]
        %v2008 = vld [vmem:[#allocation8 + $0xd8] sm:$0xf]
        %v2009 = vld [vmem:[#allocation8 + $0xdc] sm:$0xff]
        %v2010 = vld [vmem:[#allocation8 + $0xe4] sm:$0xff]
        %v2011 = vld [vmem:[#allocation8 + $0xec] sm:$0xf]
        %v2012 = vld [vmem:[#allocation8 + $0xf0] sm:$0xff]
        %v2013 = vld [vmem:[#allocation8 + $0xf8] sm:$0xff]
        %v2014 = vld [vmem:[#allocation8 + $0x100] sm:$0xf]
        %v2015 = vld [vmem:[#allocation8 + $0x104] sm:$0xff]
        %v2016 = vld [vmem:[#allocation8 + $0x10c] sm:$0xff]
        %v2017 = vld [vmem:[#allocation8 + $0x114] sm:$0xf]
        %v2018 = vld [vmem:[#allocation8 + $0x118] sm:$0xff]
        %v2019 = vld [vmem:[#allocation8 + $0x120] sm:$0xff]
        %v2020 = vld [vmem:[#allocation8 + $0x128] sm:$0xf]
        %v2021 = vld [vmem:[#allocation8 + $0x12c] sm:$0xff]
        %v2022 = vld [vmem:[#allocation8 + $0x134] sm:$0xff]
        %v2023 = vld [vmem:[#allocation8 + $0x13c] sm:$0xf]
        %v2072 = vunpack.c.l.b16 %v1976
        %v2073 = vunpack.c.h.b16 %v1976
        %v2074 = vunpack.c.l.b16 %v1977
        %v2075 = vunpack.c.h.b16 %v1977
        %v2076 = vunpack.c.l.b16 %v1978
        %v2077 = vunpack.c.l.b16 %v1979
        %v2078 = vunpack.c.h.b16 %v1979
        %v2079 = vunpack.c.l.b16 %v1980
        %v2080 = vunpack.c.h.b16 %v1980
        %v2081 = vunpack.c.l.b16 %v1981
        %v2082 = vunpack.c.l.b16 %v1982
        %v2083 = vunpack.c.h.b16 %v1982
        %v2084 = vunpack.c.l.b16 %v1983
        %v2085 = vunpack.c.h.b16 %v1983
        %v2086 = vunpack.c.l.b16 %v1984
        %v2087 = vunpack.c.l.b16 %v1985
        %v2088 = vunpack.c.h.b16 %v1985
        %v2089 = vunpack.c.l.b16 %v1986
        %v2090 = vunpack.c.h.b16 %v1986
        %v2091 = vunpack.c.l.b16 %v1987
        %v2092 = vunpack.c.l.b16 %v1988
        %v2093 = vunpack.c.h.b16 %v1988
        %v2094 = vunpack.c.l.b16 %v1989
        %v2095 = vunpack.c.h.b16 %v1989
        %v2096 = vunpack.c.l.b16 %v1990
        %v2097 = vunpack.c.l.b16 %v1991
        %v2098 = vunpack.c.h.b16 %v1991
        %v2099 = vunpack.c.l.b16 %v1992
        %v2100 = vunpack.c.h.b16 %v1992
        %v2101 = vunpack.c.l.b16 %v1993
        %v2102 = vunpack.c.l.b16 %v1994
        %v2103 = vunpack.c.h.b16 %v1994
        %v2104 = vunpack.c.l.b16 %v1995
        %v2105 = vunpack.c.h.b16 %v1995
        %v2106 = vunpack.c.l.b16 %v1996
        %v2107 = vunpack.c.l.b16 %v1997
        %v2108 = vunpack.c.h.b16 %v1997
        %v2109 = vunpack.c.l.b16 %v1998
        %v2110 = vunpack.c.h.b16 %v1998
        %v2111 = vunpack.c.l.b16 %v1999
        %v2112 = vunpack.c.l.b16 %v2000
        %v2113 = vunpack.c.h.b16 %v2000
        %v2114 = vunpack.c.l.b16 %v2001
        %v2115 = vunpack.c.h.b16 %v2001
        %v2116 = vunpack.c.l.b16 %v2002
        %v2117 = vunpack.c.l.b16 %v2003
        %v2118 = vunpack.c.h.b16 %v2003
        %v2119 = vunpack.c.l.b16 %v2004
        %v2120 = vunpack.c.h.b16 %v2004
        %v2121 = vunpack.c.l.b16 %v2005
        %v2122 = vunpack.c.l.b16 %v2006
        %v2123 = vunpack.c.h.b16 %v2006
        %v2124 = vunpack.c.l.b16 %v2007
        %v2125 = vunpack.c.h.b16 %v2007
        %v2126 = vunpack.c.l.b16 %v2008
        %v2127 = vunpack.c.l.b16 %v2009
        %v2128 = vunpack.c.h.b16 %v2009
        %v2129 = vunpack.c.l.b16 %v2010
        %v2130 = vunpack.c.h.b16 %v2010
        %v2131 = vunpack.c.l.b16 %v2011
        %v2132 = vunpack.c.l.b16 %v2012
        %v2133 = vunpack.c.h.b16 %v2012
        %v2134 = vunpack.c.l.b16 %v2013
        %v2135 = vunpack.c.h.b16 %v2013
        %v2136 = vunpack.c.l.b16 %v2014
        %v2137 = vunpack.c.l.b16 %v2015
        %v2138 = vunpack.c.h.b16 %v2015
        %v2139 = vunpack.c.l.b16 %v2016
        %v2140 = vunpack.c.h.b16 %v2016
        %v2141 = vunpack.c.l.b16 %v2017
        %v2142 = vunpack.c.l.b16 %v2018
        %v2143 = vunpack.c.h.b16 %v2018
        %v2144 = vunpack.c.l.b16 %v2019
        %v2145 = vunpack.c.h.b16 %v2019
        %v2146 = vunpack.c.l.b16 %v2020
        %v2147 = vunpack.c.l.b16 %v2021
        %v2148 = vunpack.c.h.b16 %v2021
        %v2149 = vunpack.c.l.b16 %v2022
        %v2150 = vunpack.c.h.b16 %v2022
        %v2151 = vunpack.c.l.b16 %v2023
        %v2152 = vpack.c.b16 %v2077, %v2072
        %v2153 = vpack.c.b16 %v2078, %v2073
        %v2154 = vpack.c.b16 %v2079, %v2074
        %v2155 = vpack.c.b16 %v2080, %v2075
        %v2156 = vpack.c.b16 %v2081, %v2076
        %v2157 = vpack.c.b16 %v2087, %v2082
        %v2158 = vpack.c.b16 %v2088, %v2083
        %v2159 = vpack.c.b16 %v2089, %v2084
        %v2160 = vpack.c.b16 %v2090, %v2085
        %v2161 = vpack.c.b16 %v2091, %v2086
        %v2162 = vpack.c.b16 %v2097, %v2092
        %v2163 = vpack.c.b16 %v2098, %v2093
        %v2164 = vpack.c.b16 %v2099, %v2094
        %v2165 = vpack.c.b16 %v2100, %v2095
        %v2166 = vpack.c.b16 %v2101, %v2096
        %v2167 = vpack.c.b16 %v2107, %v2102
        %v2168 = vpack.c.b16 %v2108, %v2103
        %v2169 = vpack.c.b16 %v2109, %v2104
        %v2170 = vpack.c.b16 %v2110, %v2105
        %v2171 = vpack.c.b16 %v2111, %v2106
        %v2172 = vpack.c.b16 %v2117, %v2112
        %v2173 = vpack.c.b16 %v2118, %v2113
        %v2174 = vpack.c.b16 %v2119, %v2114
        %v2175 = vpack.c.b16 %v2120, %v2115
        %v2176 = vpack.c.b16 %v2121, %v2116
        %v2177 = vpack.c.b16 %v2127, %v2122
        %v2178 = vpack.c.b16 %v2128, %v2123
        %v2179 = vpack.c.b16 %v2129, %v2124
        %v2180 = vpack.c.b16 %v2130, %v2125
        %v2181 = vpack.c.b16 %v2131, %v2126
        %v2182 = vpack.c.b16 %v2137, %v2132
        %v2183 = vpack.c.b16 %v2138, %v2133
        %v2184 = vpack.c.b16 %v2139, %v2134
        %v2185 = vpack.c.b16 %v2140, %v2135
        %v2186 = vpack.c.b16 %v2141, %v2136
        %v2187 = vpack.c.b16 %v2147, %v2142
        %v2188 = vpack.c.b16 %v2148, %v2143
        %v2189 = vpack.c.b16 %v2149, %v2144
        %v2190 = vpack.c.b16 %v2150, %v2145
        %v2191 = vpack.c.b16 %v2151, %v2146
        %2232 = vmatprep.subr.bf16.mxu0 %v2188
        %2233 = vmatpush1.bf16.msra.mxu0 %v2187
        %2234 = vmatprep.subr.bf16.mxu0 %v2183
        %2235 = vmatpush1.bf16.msra.mxu0 %v2182
        %2236 = vmatprep.subr.bf16.mxu0 %v2178
        %2237 = vmatpush1.bf16.msra.mxu0 %v2177
        %2238 = vmatprep.subr.bf16.mxu0 %v2173
        %2239 = vmatpush1.bf16.msra.mxu0 %v2172
        %2240 = vmatprep.subr.bf16.mxu0 %v2168
        %2241 = vmatpush1.bf16.msra.mxu0 %v2167
        %2242 = vmatprep.subr.bf16.mxu0 %v2163
        %2243 = vmatpush1.bf16.msra.mxu0 %v2162
        %2244 = vmatprep.subr.bf16.mxu0 %v2158
        %2245 = vmatpush1.bf16.msra.mxu0 %v2157
        %2246 = vmatprep.subr.bf16.mxu0 %v2153
        %2247 = vmatpush1.bf16.msra.mxu0 %v2152
        %2248 = vmatprep.subr.bf16.mxu0 0
        %2249 = vmatpush2.bf16.msra.mxu0 0
        %2250 = vmatprep.subr.bf16.mxu0 0
        %2251 = vmatpush2.bf16.msra.mxu0 0
        %2252 = vmatprep.subr.bf16.mxu0 0
        %2253 = vmatpush2.bf16.msra.mxu0 0
        %2254 = vmatprep.subr.bf16.mxu0 0
        %2255 = vmatpush2.bf16.msra.mxu0 0
        %2256 = vmatprep.subr.bf16.mxu0 0
        %2257 = vmatpush2.bf16.msra.mxu0 0
        %2258 = vmatprep.subr.bf16.mxu0 0
        %2259 = vmatpush2.bf16.msra.mxu0 0
        %2260 = vmatprep.subr.bf16.mxu0 0
        %2261 = vmatpush2.bf16.msra.mxu0 0
        %2262 = vmatprep.subr.bf16.mxu0 0
        %2263 = vmatpush2.bf16.msra.mxu0 0
        %2264 = vmatprep.mubr.bf16.mxu0 0
        %2265 = vmatmul.mubr.bf16.gmra.mxu0 %v647
        %v2266 = vpop.f32.mrf.mxu0
        %v2267 = vadd.f32 0.0, %v2266
        %v2268 = vpop.f32.mrf.mxu0
        %v2269 = vadd.f32 0.0, %v2268
        %v2270 = vpop.f32.mrf.mxu0
        %v2271 = vadd.f32 0.0, %v2270
        %v2272 = vpop.f32.mrf.mxu0
        %v2273 = vadd.f32 0.0, %v2272
        %2274 = vmatprep.mubr.bf16.mxu0 0
        %2275 = vmatmul.mubr.bf16.gmra.mxu0 %v648
        %v2276 = vpop.f32.mrf.mxu0
        %v2277 = vadd.f32 0.0, %v2276
        %v2278 = vpop.f32.mrf.mxu0
        %v2279 = vadd.f32 0.0, %v2278
        %v2280 = vpop.f32.mrf.mxu0
        %v2281 = vadd.f32 0.0, %v2280
        %v2282 = vpop.f32.mrf.mxu0
        %v2283 = vadd.f32 0.0, %v2282
        %2284 = vmatprep.mubr.bf16.mxu0 0
        %2285 = vmatmul.mubr.bf16.gmra.mxu0 %v649
        %v2286 = vpop.f32.mrf.mxu0
        %v2287 = vadd.f32 0.0, %v2286
        %v2288 = vpop.f32.mrf.mxu0
        %v2289 = vadd.f32 0.0, %v2288
        %v2290 = vpop.f32.mrf.mxu0
        %v2291 = vadd.f32 0.0, %v2290
        %v2292 = vpop.f32.mrf.mxu0
        %v2293 = vadd.f32 0.0, %v2292
        %2294 = vmatprep.mubr.bf16.mxu0 0
        %2295 = vmatmul.mubr.bf16.gmra.mxu0 %v650
        %v2296 = vpop.f32.mrf.mxu0
        %v2297 = vadd.f32 0.0, %v2296
        %v2298 = vpop.f32.mrf.mxu0
        %v2299 = vadd.f32 0.0, %v2298
        %v2300 = vpop.f32.mrf.mxu0
        %v2301 = vadd.f32 0.0, %v2300
        %v2302 = vpop.f32.mrf.mxu0
        %v2303 = vadd.f32 0.0, %v2302
        %2304 = vmatprep.mubr.bf16.mxu0 0
        %2305 = vmatmul.mubr.bf16.gmra.mxu0 %v651
        %v2306 = vpop.f32.mrf.mxu0
        %v2307 = vadd.f32 0.0, %v2306
        %v2308 = vpop.f32.mrf.mxu0
        %v2309 = vadd.f32 0.0, %v2308
        %v2310 = vpop.f32.mrf.mxu0
        %v2311 = vadd.f32 0.0, %v2310
        %v2312 = vpop.f32.mrf.mxu0
        %v2313 = vadd.f32 0.0, %v2312
        %2314 = vmatprep.mubr.bf16.mxu0 0
        %2315 = vmatmul.mubr.bf16.gmra.mxu0 %v652
        %v2316 = vpop.f32.mrf.mxu0
        %v2317 = vadd.f32 0.0, %v2316
        %v2318 = vpop.f32.mrf.mxu0
        %v2319 = vadd.f32 0.0, %v2318
        %v2320 = vpop.f32.mrf.mxu0
        %v2321 = vadd.f32 0.0, %v2320
        %v2322 = vpop.f32.mrf.mxu0
        %v2323 = vadd.f32 0.0, %v2322
        %2324 = vmatprep.mubr.bf16.mxu0 0
        %2325 = vmatmul.mubr.bf16.gmra.mxu0 %v653
        %v2326 = vpop.f32.mrf.mxu0
        %v2327 = vadd.f32 0.0, %v2326
        %v2328 = vpop.f32.mrf.mxu0
        %v2329 = vadd.f32 0.0, %v2328
        %v2330 = vpop.f32.mrf.mxu0
        %v2331 = vadd.f32 0.0, %v2330
        %v2332 = vpop.f32.mrf.mxu0
        %v2333 = vadd.f32 0.0, %v2332
        %2334 = vmatprep.mubr.bf16.mxu0 0
        %2335 = vmatmul.mubr.bf16.gmra.mxu0 %v654
        %v2336 = vpop.f32.mrf.mxu0
        %v2337 = vadd.f32 0.0, %v2336
        %v2338 = vpop.f32.mrf.mxu0
        %v2339 = vadd.f32 0.0, %v2338
        %v2340 = vpop.f32.mrf.mxu0
        %v2341 = vadd.f32 0.0, %v2340
        %v2342 = vpop.f32.mrf.mxu0
        %v2343 = vadd.f32 0.0, %v2342
        %2344 = vdwg.mxu0
        %2345 = vmatprep.subr.bf16.mxu0 %v2190
        %2346 = vmatpush1.bf16.msra.mxu0 %v2189
        %2347 = vmatprep.subr.bf16.mxu0 %v2185
        %2348 = vmatpush1.bf16.msra.mxu0 %v2184
        %2349 = vmatprep.subr.bf16.mxu0 %v2180
        %2350 = vmatpush1.bf16.msra.mxu0 %v2179
        %2351 = vmatprep.subr.bf16.mxu0 %v2175
        %2352 = vmatpush1.bf16.msra.mxu0 %v2174
        %2353 = vmatprep.subr.bf16.mxu0 %v2170
        %2354 = vmatpush1.bf16.msra.mxu0 %v2169
        %2355 = vmatprep.subr.bf16.mxu0 %v2165
        %2356 = vmatpush1.bf16.msra.mxu0 %v2164
        %2357 = vmatprep.subr.bf16.mxu0 %v2160
        %2358 = vmatpush1.bf16.msra.mxu0 %v2159
        %2359 = vmatprep.subr.bf16.mxu0 %v2155
        %2360 = vmatpush1.bf16.msra.mxu0 %v2154
        %2361 = vmatprep.subr.bf16.mxu0 0
        %2362 = vmatpush2.bf16.msra.mxu0 0
        %2363 = vmatprep.subr.bf16.mxu0 0
        %2364 = vmatpush2.bf16.msra.mxu0 0
        %2365 = vmatprep.subr.bf16.mxu0 0
        %2366 = vmatpush2.bf16.msra.mxu0 0
        %2367 = vmatprep.subr.bf16.mxu0 0
        %2368 = vmatpush2.bf16.msra.mxu0 0
        %2369 = vmatprep.subr.bf16.mxu0 0
        %2370 = vmatpush2.bf16.msra.mxu0 0
        %2371 = vmatprep.subr.bf16.mxu0 0
        %2372 = vmatpush2.bf16.msra.mxu0 0
        %2373 = vmatprep.subr.bf16.mxu0 0
        %2374 = vmatpush2.bf16.msra.mxu0 0
        %2375 = vmatprep.subr.bf16.mxu0 0
        %2376 = vmatpush2.bf16.msra.mxu0 0
        %2377 = vmatprep.mubr.bf16.mxu0 0
        %2378 = vmatmul.mubr.bf16.gmra.mxu0 %v647
        %v2379 = vpop.f32.mrf.mxu0
        %v2380 = vadd.f32 0.0, %v2379
        %v2381 = vpop.f32.mrf.mxu0
        %v2382 = vadd.f32 0.0, %v2381
        %v2383 = vpop.f32.mrf.mxu0
        %v2384 = vadd.f32 0.0, %v2383
        %v2385 = vpop.f32.mrf.mxu0
        %v2386 = vadd.f32 0.0, %v2385
        %2387 = vmatprep.mubr.bf16.mxu0 0
        %2388 = vmatmul.mubr.bf16.gmra.mxu0 %v648
        %v2389 = vpop.f32.mrf.mxu0
        %v2390 = vadd.f32 0.0, %v2389
        %v2391 = vpop.f32.mrf.mxu0
        %v2392 = vadd.f32 0.0, %v2391
        %v2393 = vpop.f32.mrf.mxu0
        %v2394 = vadd.f32 0.0, %v2393
        %v2395 = vpop.f32.mrf.mxu0
        %v2396 = vadd.f32 0.0, %v2395
        %2397 = vmatprep.mubr.bf16.mxu0 0
        %2398 = vmatmul.mubr.bf16.gmra.mxu0 %v649
        %v2399 = vpop.f32.mrf.mxu0
        %v2400 = vadd.f32 0.0, %v2399
        %v2401 = vpop.f32.mrf.mxu0
        %v2402 = vadd.f32 0.0, %v2401
        %v2403 = vpop.f32.mrf.mxu0
        %v2404 = vadd.f32 0.0, %v2403
        %v2405 = vpop.f32.mrf.mxu0
        %v2406 = vadd.f32 0.0, %v2405
        %2407 = vmatprep.mubr.bf16.mxu0 0
        %2408 = vmatmul.mubr.bf16.gmra.mxu0 %v650
        %v2409 = vpop.f32.mrf.mxu0
        %v2410 = vadd.f32 0.0, %v2409
        %v2411 = vpop.f32.mrf.mxu0
        %v2412 = vadd.f32 0.0, %v2411
        %v2413 = vpop.f32.mrf.mxu0
        %v2414 = vadd.f32 0.0, %v2413
        %v2415 = vpop.f32.mrf.mxu0
        %v2416 = vadd.f32 0.0, %v2415
        %2417 = vmatprep.mubr.bf16.mxu0 0
        %2418 = vmatmul.mubr.bf16.gmra.mxu0 %v651
        %v2419 = vpop.f32.mrf.mxu0
        %v2420 = vadd.f32 0.0, %v2419
        %v2421 = vpop.f32.mrf.mxu0
        %v2422 = vadd.f32 0.0, %v2421
        %v2423 = vpop.f32.mrf.mxu0
        %v2424 = vadd.f32 0.0, %v2423
        %v2425 = vpop.f32.mrf.mxu0
        %v2426 = vadd.f32 0.0, %v2425
        %2427 = vmatprep.mubr.bf16.mxu0 0
        %2428 = vmatmul.mubr.bf16.gmra.mxu0 %v652
        %v2429 = vpop.f32.mrf.mxu0
        %v2430 = vadd.f32 0.0, %v2429
        %v2431 = vpop.f32.mrf.mxu0
        %v2432 = vadd.f32 0.0, %v2431
        %v2433 = vpop.f32.mrf.mxu0
        %v2434 = vadd.f32 0.0, %v2433
        %v2435 = vpop.f32.mrf.mxu0
        %v2436 = vadd.f32 0.0, %v2435
        %2437 = vmatprep.mubr.bf16.mxu0 0
        %2438 = vmatmul.mubr.bf16.gmra.mxu0 %v653
        %v2439 = vpop.f32.mrf.mxu0
        %v2440 = vadd.f32 0.0, %v2439
        %v2441 = vpop.f32.mrf.mxu0
        %v2442 = vadd.f32 0.0, %v2441
        %v2443 = vpop.f32.mrf.mxu0
        %v2444 = vadd.f32 0.0, %v2443
        %v2445 = vpop.f32.mrf.mxu0
        %v2446 = vadd.f32 0.0, %v2445
        %2447 = vmatprep.mubr.bf16.mxu0 0
        %2448 = vmatmul.mubr.bf16.gmra.mxu0 %v654
        %v2449 = vpop.f32.mrf.mxu0
        %v2450 = vadd.f32 0.0, %v2449
        %v2451 = vpop.f32.mrf.mxu0
        %v2452 = vadd.f32 0.0, %v2451
        %v2453 = vpop.f32.mrf.mxu0
        %v2454 = vadd.f32 0.0, %v2453
        %v2455 = vpop.f32.mrf.mxu0
        %v2456 = vadd.f32 0.0, %v2455
        %2457 = vdwg.mxu0
        %2458 = vmatprep.subr.bf16.mxu0 0
        %2459 = vmatpush1.bf16.msra.mxu0 %v2191
        %2460 = vmatprep.subr.bf16.mxu0 0
        %2461 = vmatpush1.bf16.msra.mxu0 %v2186
        %2462 = vmatprep.subr.bf16.mxu0 0
        %2463 = vmatpush1.bf16.msra.mxu0 %v2181
        %2464 = vmatprep.subr.bf16.mxu0 0
        %2465 = vmatpush1.bf16.msra.mxu0 %v2176
        %2466 = vmatprep.subr.bf16.mxu0 0
        %2467 = vmatpush1.bf16.msra.mxu0 %v2171
        %2468 = vmatprep.subr.bf16.mxu0 0
        %2469 = vmatpush1.bf16.msra.mxu0 %v2166
        %2470 = vmatprep.subr.bf16.mxu0 0
        %2471 = vmatpush1.bf16.msra.mxu0 %v2161
        %2472 = vmatprep.subr.bf16.mxu0 0
        %2473 = vmatpush1.bf16.msra.mxu0 %v2156
        %2474 = vmatprep.subr.bf16.mxu0 0
        %2475 = vmatpush2.bf16.msra.mxu0 0
        %2476 = vmatprep.subr.bf16.mxu0 0
        %2477 = vmatpush2.bf16.msra.mxu0 0
        %2478 = vmatprep.subr.bf16.mxu0 0
        %2479 = vmatpush2.bf16.msra.mxu0 0
        %2480 = vmatprep.subr.bf16.mxu0 0
        %2481 = vmatpush2.bf16.msra.mxu0 0
        %2482 = vmatprep.subr.bf16.mxu0 0
        %2483 = vmatpush2.bf16.msra.mxu0 0
        %2484 = vmatprep.subr.bf16.mxu0 0
        %2485 = vmatpush2.bf16.msra.mxu0 0
        %2486 = vmatprep.subr.bf16.mxu0 0
        %2487 = vmatpush2.bf16.msra.mxu0 0
        %2488 = vmatprep.subr.bf16.mxu0 0
        %2489 = vmatpush2.bf16.msra.mxu0 0
        %2490 = vmatprep.mubr.bf16.mxu0 0
        %2491 = vmatmul.mubr.bf16.gmra.mxu0 %v647
        %v2492 = vpop.f32.mrf.mxu0
        %v2493 = vadd.f32 0.0, %v2492
        %v2494 = vpop.f32.mrf.mxu0
        %v2495 = vpop.f32.mrf.mxu0
        %v2496 = vadd.f32 0.0, %v2495
        %v2497 = vpop.f32.mrf.mxu0
        %2498 = vmatprep.mubr.bf16.mxu0 0
        %2499 = vmatmul.mubr.bf16.gmra.mxu0 %v648
        %v2500 = vpop.f32.mrf.mxu0
        %v2501 = vadd.f32 0.0, %v2500
        %v2502 = vpop.f32.mrf.mxu0
        %v2503 = vpop.f32.mrf.mxu0
        %v2504 = vadd.f32 0.0, %v2503
        %v2505 = vpop.f32.mrf.mxu0
        %2506 = vmatprep.mubr.bf16.mxu0 0
        %2507 = vmatmul.mubr.bf16.gmra.mxu0 %v649
        %v2508 = vpop.f32.mrf.mxu0
        %v2509 = vadd.f32 0.0, %v2508
        %v2510 = vpop.f32.mrf.mxu0
        %v2511 = vpop.f32.mrf.mxu0
        %v2512 = vadd.f32 0.0, %v2511
        %v2513 = vpop.f32.mrf.mxu0
        %2514 = vmatprep.mubr.bf16.mxu0 0
        %2515 = vmatmul.mubr.bf16.gmra.mxu0 %v650
        %v2516 = vpop.f32.mrf.mxu0
        %v2517 = vadd.f32 0.0, %v2516
        %v2518 = vpop.f32.mrf.mxu0
        %v2519 = vpop.f32.mrf.mxu0
        %v2520 = vadd.f32 0.0, %v2519
        %v2521 = vpop.f32.mrf.mxu0
        %2522 = vmatprep.mubr.bf16.mxu0 0
        %2523 = vmatmul.mubr.bf16.gmra.mxu0 %v651
        %v2524 = vpop.f32.mrf.mxu0
        %v2525 = vadd.f32 0.0, %v2524
        %v2526 = vpop.f32.mrf.mxu0
        %v2527 = vpop.f32.mrf.mxu0
        %v2528 = vadd.f32 0.0, %v2527
        %v2529 = vpop.f32.mrf.mxu0
        %2530 = vmatprep.mubr.bf16.mxu0 0
        %2531 = vmatmul.mubr.bf16.gmra.mxu0 %v652
        %v2532 = vpop.f32.mrf.mxu0
        %v2533 = vadd.f32 0.0, %v2532
        %v2534 = vpop.f32.mrf.mxu0
        %v2535 = vpop.f32.mrf.mxu0
        %v2536 = vadd.f32 0.0, %v2535
        %v2537 = vpop.f32.mrf.mxu0
        %2538 = vmatprep.mubr.bf16.mxu0 0
        %2539 = vmatmul.mubr.bf16.gmra.mxu0 %v653
        %v2540 = vpop.f32.mrf.mxu0
        %v2541 = vadd.f32 0.0, %v2540
        %v2542 = vpop.f32.mrf.mxu0
        %v2543 = vpop.f32.mrf.mxu0
        %v2544 = vadd.f32 0.0, %v2543
        %v2545 = vpop.f32.mrf.mxu0
        %2546 = vmatprep.mubr.bf16.mxu0 0
        %2547 = vmatmul.mubr.bf16.gmra.mxu0 %v654
        %v2548 = vpop.f32.mrf.mxu0
        %v2549 = vadd.f32 0.0, %v2548
        %v2550 = vpop.f32.mrf.mxu0
        %v2551 = vpop.f32.mrf.mxu0
        %v2552 = vadd.f32 0.0, %v2551
        %v2553 = vpop.f32.mrf.mxu0
        %2554 = vdwg.mxu0
        %v2555 = vrot.slane %v2269, 1
        %v2556 = vrot.slane %v2273, 1
        %v2557 = vrot.slane %v2279, 1
        %v2558 = vrot.slane %v2283, 1
        %v2559 = vrot.slane %v2289, 1
        %v2560 = vrot.slane %v2293, 1
        %v2561 = vrot.slane %v2299, 1
        %v2562 = vrot.slane %v2303, 1
        %v2563 = vrot.slane %v2309, 1
        %v2564 = vrot.slane %v2313, 1
        %v2565 = vrot.slane %v2319, 1
        %v2566 = vrot.slane %v2323, 1
        %v2567 = vrot.slane %v2329, 1
        %v2568 = vrot.slane %v2333, 1
        %v2569 = vrot.slane %v2339, 1
        %v2570 = vrot.slane %v2343, 1
        %v2571 = vsel %vm1017, %v2569, %v2570
        %v2572 = vsel %vm1017, %v2568, %v2569
        %v2573 = vsel %vm1017, %v2567, %v2568
        %v2574 = vsel %vm1017, %v2566, %v2567
        %v2575 = vsel %vm1017, %v2565, %v2566
        %v2576 = vsel %vm1017, %v2564, %v2565
        %v2577 = vsel %vm1017, %v2563, %v2564
        %v2578 = vsel %vm1017, %v2562, %v2563
        %v2579 = vsel %vm1017, %v2561, %v2562
        %v2580 = vsel %vm1017, %v2560, %v2561
        %v2581 = vsel %vm1017, %v2559, %v2560
        %v2582 = vsel %vm1017, %v2558, %v2559
        %v2583 = vsel %vm1017, %v2557, %v2558
        %v2584 = vsel %vm1017, %v2556, %v2557
        %v2585 = vsel %vm1017, %v2555, %v2556
        %v2586 = vsel %vm1017, %v2570, %v2555
        %v2587 = vadd.f32 %v2267, %v2585
        %v2588 = vadd.f32 %v2271, %v2584
        %v2589 = vadd.f32 %v2277, %v2583
        %v2590 = vadd.f32 %v2281, %v2582
        %v2591 = vadd.f32 %v2287, %v2581
        %v2592 = vadd.f32 %v2291, %v2580
        %v2593 = vadd.f32 %v2297, %v2579
        %v2594 = vadd.f32 %v2301, %v2578
        %v2595 = vadd.f32 %v2307, %v2577
        %v2596 = vadd.f32 %v2311, %v2576
        %v2597 = vadd.f32 %v2317, %v2575
        %v2598 = vadd.f32 %v2321, %v2574
        %v2599 = vadd.f32 %v2327, %v2573
        %v2600 = vadd.f32 %v2331, %v2572
        %v2601 = vadd.f32 %v2337, %v2571
        %v2602 = vadd.f32 %v2341, %v2586
        %v2603 = vrot.slane %v2380, 2
        %v2604 = vrot.slane %v2384, 2
        %v2605 = vrot.slane %v2390, 2
        %v2606 = vrot.slane %v2394, 2
        %v2607 = vrot.slane %v2400, 2
        %v2608 = vrot.slane %v2404, 2
        %v2609 = vrot.slane %v2410, 2
        %v2610 = vrot.slane %v2414, 2
        %v2611 = vrot.slane %v2420, 2
        %v2612 = vrot.slane %v2424, 2
        %v2613 = vrot.slane %v2430, 2
        %v2614 = vrot.slane %v2434, 2
        %v2615 = vrot.slane %v2440, 2
        %v2616 = vrot.slane %v2444, 2
        %v2617 = vrot.slane %v2450, 2
        %v2618 = vrot.slane %v2454, 2
        %v2619 = vsel %vm1066, %v2617, %v2618
        %v2620 = vsel %vm1066, %v2616, %v2617
        %v2621 = vsel %vm1066, %v2615, %v2616
        %v2622 = vsel %vm1066, %v2614, %v2615
        %v2623 = vsel %vm1066, %v2613, %v2614
        %v2624 = vsel %vm1066, %v2612, %v2613
        %v2625 = vsel %vm1066, %v2611, %v2612
        %v2626 = vsel %vm1066, %v2610, %v2611
        %v2627 = vsel %vm1066, %v2609, %v2610
        %v2628 = vsel %vm1066, %v2608, %v2609
        %v2629 = vsel %vm1066, %v2607, %v2608
        %v2630 = vsel %vm1066, %v2606, %v2607
        %v2631 = vsel %vm1066, %v2605, %v2606
        %v2632 = vsel %vm1066, %v2604, %v2605
        %v2633 = vsel %vm1066, %v2603, %v2604
        %v2634 = vsel %vm1066, %v2618, %v2603
        %v2635 = vadd.f32 %v2587, %v2633
        %v2636 = vadd.f32 %v2588, %v2632
        %v2637 = vadd.f32 %v2589, %v2631
        %v2638 = vadd.f32 %v2590, %v2630
        %v2639 = vadd.f32 %v2591, %v2629
        %v2640 = vadd.f32 %v2592, %v2628
        %v2641 = vadd.f32 %v2593, %v2627
        %v2642 = vadd.f32 %v2594, %v2626
        %v2643 = vadd.f32 %v2595, %v2625
        %v2644 = vadd.f32 %v2596, %v2624
        %v2645 = vadd.f32 %v2597, %v2623
        %v2646 = vadd.f32 %v2598, %v2622
        %v2647 = vadd.f32 %v2599, %v2621
        %v2648 = vadd.f32 %v2600, %v2620
        %v2649 = vadd.f32 %v2601, %v2619
        %v2650 = vadd.f32 %v2602, %v2634
        %v2651 = vrot.slane %v2382, 3
        %v2652 = vrot.slane %v2386, 3
        %v2653 = vrot.slane %v2392, 3
        %v2654 = vrot.slane %v2396, 3
        %v2655 = vrot.slane %v2402, 3
        %v2656 = vrot.slane %v2406, 3
        %v2657 = vrot.slane %v2412, 3
        %v2658 = vrot.slane %v2416, 3
        %v2659 = vrot.slane %v2422, 3
        %v2660 = vrot.slane %v2426, 3
        %v2661 = vrot.slane %v2432, 3
        %v2662 = vrot.slane %v2436, 3
        %v2663 = vrot.slane %v2442, 3
        %v2664 = vrot.slane %v2446, 3
        %v2665 = vrot.slane %v2452, 3
        %v2666 = vrot.slane %v2456, 3
        %v2667 = vsel %vm1786, %v2665, %v2666
        %v2668 = vsel %vm1786, %v2664, %v2665
        %v2669 = vsel %vm1786, %v2663, %v2664
        %v2670 = vsel %vm1786, %v2662, %v2663
        %v2671 = vsel %vm1786, %v2661, %v2662
        %v2672 = vsel %vm1786, %v2660, %v2661
        %v2673 = vsel %vm1786, %v2659, %v2660
        %v2674 = vsel %vm1786, %v2658, %v2659
        %v2675 = vsel %vm1786, %v2657, %v2658
        %v2676 = vsel %vm1786, %v2656, %v2657
        %v2677 = vsel %vm1786, %v2655, %v2656
        %v2678 = vsel %vm1786, %v2654, %v2655
        %v2679 = vsel %vm1786, %v2653, %v2654
        %v2680 = vsel %vm1786, %v2652, %v2653
        %v2681 = vsel %vm1786, %v2651, %v2652
        %v2682 = vsel %vm1786, %v2666, %v2651
        %v2683 = vadd.f32 %v2635, %v2681
        %v2684 = vadd.f32 %v2636, %v2680
        %v2685 = vadd.f32 %v2637, %v2679
        %v2686 = vadd.f32 %v2638, %v2678
        %v2687 = vadd.f32 %v2639, %v2677
        %v2688 = vadd.f32 %v2640, %v2676
        %v2689 = vadd.f32 %v2641, %v2675
        %v2690 = vadd.f32 %v2642, %v2674
        %v2691 = vadd.f32 %v2643, %v2673
        %v2692 = vadd.f32 %v2644, %v2672
        %v2693 = vadd.f32 %v2645, %v2671
        %v2694 = vadd.f32 %v2646, %v2670
        %v2695 = vadd.f32 %v2647, %v2669
        %v2696 = vadd.f32 %v2648, %v2668
        %v2697 = vadd.f32 %v2649, %v2667
        %v2698 = vadd.f32 %v2650, %v2682
        %v2699 = vrot.slane %v2493, 4
        %v2700 = vrot.slane %v2496, 4
        %v2701 = vrot.slane %v2501, 4
        %v2702 = vrot.slane %v2504, 4
        %v2703 = vrot.slane %v2509, 4
        %v2704 = vrot.slane %v2512, 4
        %v2705 = vrot.slane %v2517, 4
        %v2706 = vrot.slane %v2520, 4
        %v2707 = vrot.slane %v2525, 4
        %v2708 = vrot.slane %v2528, 4
        %v2709 = vrot.slane %v2533, 4
        %v2710 = vrot.slane %v2536, 4
        %v2711 = vrot.slane %v2541, 4
        %v2712 = vrot.slane %v2544, 4
        %v2713 = vrot.slane %v2549, 4
        %v2714 = vrot.slane %v2552, 4
        %vm2715 = vcmp.lt.s32.totalorder %v375, 4
        %v2716 = vsel %vm2715, %v2713, %v2714
        %v2717 = vsel %vm2715, %v2712, %v2713
        %v2718 = vsel %vm2715, %v2711, %v2712
        %v2719 = vsel %vm2715, %v2710, %v2711
        %v2720 = vsel %vm2715, %v2709, %v2710
        %v2721 = vsel %vm2715, %v2708, %v2709
        %v2722 = vsel %vm2715, %v2707, %v2708
        %v2723 = vsel %vm2715, %v2706, %v2707
        %v2724 = vsel %vm2715, %v2705, %v2706
        %v2725 = vsel %vm2715, %v2704, %v2705
        %v2726 = vsel %vm2715, %v2703, %v2704
        %v2727 = vsel %vm2715, %v2702, %v2703
        %v2728 = vsel %vm2715, %v2701, %v2702
        %v2729 = vsel %vm2715, %v2700, %v2701
        %v2730 = vsel %vm2715, %v2699, %v2700
        %v2731 = vsel %vm2715, %v2714, %v2699
        %v2732 = vadd.f32 %v2683, %v2730
        %v2733 = vadd.f32 %v2684, %v2729
        %v2734 = vadd.f32 %v2685, %v2728
        %v2735 = vadd.f32 %v2686, %v2727
        %v2736 = vadd.f32 %v2687, %v2726
        %v2737 = vadd.f32 %v2688, %v2725
        %v2738 = vadd.f32 %v2689, %v2724
        %v2739 = vadd.f32 %v2690, %v2723
        %v2740 = vadd.f32 %v2691, %v2722
        %v2741 = vadd.f32 %v2692, %v2721
        %v2742 = vadd.f32 %v2693, %v2720
        %v2743 = vadd.f32 %v2694, %v2719
        %v2744 = vadd.f32 %v2695, %v2718
        %v2745 = vadd.f32 %v2696, %v2717
        %v2746 = vadd.f32 %v2697, %v2716
        %v2747 = vadd.f32 %v2698, %v2731
        %v2748 = vld [vmem:[%s4 + $0x2] sm:$0x1]
        %v2749 = vlaneseq
        %v2750 = vshrl.u32 %v2749, 7
        %v2751 = vsub.s32 0, %v2750
        %v2752 = vrot.slane %v2748, %v2751
        %v2753 = vadd.f32 %v2732, %v2752
        %v2754 = vadd.f32 %v2733, %v2752
        %v2755 = vadd.f32 %v2734, %v2752
        %v2756 = vadd.f32 %v2735, %v2752
        %v2757 = vadd.f32 %v2736, %v2752
        %v2758 = vadd.f32 %v2737, %v2752
        %v2759 = vadd.f32 %v2738, %v2752
        %v2760 = vadd.f32 %v2739, %v2752
        %v2761 = vadd.f32 %v2740, %v2752
        %v2762 = vadd.f32 %v2741, %v2752
        %v2763 = vadd.f32 %v2742, %v2752
        %v2764 = vadd.f32 %v2743, %v2752
        %v2765 = vadd.f32 %v2744, %v2752
        %v2766 = vadd.f32 %v2745, %v2752
        %v2767 = vadd.f32 %v2746, %v2752
        %v2768 = vadd.f32 %v2747, %v2752
        %v2769 = vmax.f32 %v2753, 0.0
        %v2770 = vmax.f32 %v2754, 0.0
        %v2771 = vmax.f32 %v2755, 0.0
        %v2772 = vmax.f32 %v2756, 0.0
        %v2773 = vmax.f32 %v2757, 0.0
        %v2774 = vmax.f32 %v2758, 0.0
        %v2775 = vmax.f32 %v2759, 0.0
        %v2776 = vmax.f32 %v2760, 0.0
        %v2777 = vmax.f32 %v2761, 0.0
        %v2778 = vmax.f32 %v2762, 0.0
        %v2779 = vmax.f32 %v2763, 0.0
        %v2780 = vmax.f32 %v2764, 0.0
        %v2781 = vmax.f32 %v2765, 0.0
        %v2782 = vmax.f32 %v2766, 0.0
        %v2783 = vmax.f32 %v2767, 0.0
        %v2784 = vmax.f32 %v2768, 0.0
        %vm2785 = vcmp.lt.s32.totalorder %v567, 12
        %vm2786 = vcmp.lt.s32.totalorder %v568, 12
        %vm2787 = vcmp.lt.s32.totalorder %v569, 12
        %vm2788 = vcmp.lt.s32.totalorder %v570, 12
        %vm2789 = vcmp.lt.s32.totalorder %v571, 12
        %vm2790 = vcmp.lt.s32.totalorder %v572, 12
        %vm2791 = vcmp.lt.s32.totalorder %v573, 12
        %vm2792 = vcmp.lt.s32.totalorder %v574, 12
        %vm2793 = vcmp.lt.s32.totalorder %v575, 12
        %vm2794 = vcmp.lt.s32.totalorder %v576, 12
        %vm2795 = vcmp.lt.s32.totalorder %v577, 12
        %vm2796 = vcmp.lt.s32.totalorder %v578, 12
        %vm2797 = vcmp.lt.s32.totalorder %v579, 12
        %vm2798 = vcmp.lt.s32.totalorder %v580, 12
        %vm2799 = vcmp.lt.s32.totalorder %v581, 12
        %vm2800 = vcmp.lt.s32.totalorder %v582, 12
        %v2801 = vsel %vm2785, 1, 0
        %v2802 = vsel %vm2786, 1, 0
        %v2803 = vsel %vm2787, 1, 0
        %v2804 = vsel %vm2788, 1, 0
        %v2805 = vsel %vm2789, 1, 0
        %v2806 = vsel %vm2790, 1, 0
        %v2807 = vsel %vm2791, 1, 0
        %v2808 = vsel %vm2792, 1, 0
        %v2809 = vsel %vm2793, 1, 0
        %v2810 = vsel %vm2794, 1, 0
        %v2811 = vsel %vm2795, 1, 0
        %v2812 = vsel %vm2796, 1, 0
        %v2813 = vsel %vm2797, 1, 0
        %v2814 = vsel %vm2798, 1, 0
        %v2815 = vsel %vm2799, 1, 0
        %v2816 = vsel %vm2800, 1, 0
        %vm2817 = vcmp.eq.s32.totalorder %v2801, 1
        %vm2818 = vcmp.eq.s32.totalorder %v2802, 1
        %vm2819 = vcmp.eq.s32.totalorder %v2803, 1
        %vm2820 = vcmp.eq.s32.totalorder %v2804, 1
        %vm2821 = vcmp.eq.s32.totalorder %v2805, 1
        %vm2822 = vcmp.eq.s32.totalorder %v2806, 1
        %vm2823 = vcmp.eq.s32.totalorder %v2807, 1
        %vm2824 = vcmp.eq.s32.totalorder %v2808, 1
        %vm2825 = vcmp.eq.s32.totalorder %v2809, 1
        %vm2826 = vcmp.eq.s32.totalorder %v2810, 1
        %vm2827 = vcmp.eq.s32.totalorder %v2811, 1
        %vm2828 = vcmp.eq.s32.totalorder %v2812, 1
        %vm2829 = vcmp.eq.s32.totalorder %v2813, 1
        %vm2830 = vcmp.eq.s32.totalorder %v2814, 1
        %vm2831 = vcmp.eq.s32.totalorder %v2815, 1
        %vm2832 = vcmp.eq.s32.totalorder %v2816, 1
        %v2833 = vsel %vm2817, %v2769, 0.0
        %v2834 = vsel %vm2818, %v2770, 0.0
        %v2835 = vsel %vm2819, %v2771, 0.0
        %v2836 = vsel %vm2820, %v2772, 0.0
        %v2837 = vsel %vm2821, %v2773, 0.0
        %v2838 = vsel %vm2822, %v2774, 0.0
        %v2839 = vsel %vm2823, %v2775, 0.0
        %v2840 = vsel %vm2824, %v2776, 0.0
        %v2841 = vsel %vm2825, %v2777, 0.0
        %v2842 = vsel %vm2826, %v2778, 0.0
        %v2843 = vsel %vm2827, %v2779, 0.0
        %v2844 = vsel %vm2828, %v2780, 0.0
        %v2845 = vsel %vm2829, %v2781, 0.0
        %v2846 = vsel %vm2830, %v2782, 0.0
        %v2847 = vsel %vm2831, %v2783, 0.0
        %v2848 = vsel %vm2832, %v2784, 0.0
        %v2849 = vmax.f32 %v2833, %v2834
        %v2850 = vrot.slane %v2849, 4
        %v2851 = vmax.f32 %v2849, %v2850
        %v2852 = vrot.slane %v2851, 2
        %v2853 = vmax.f32 %v2851, %v2852
        %v2854 = vrot.slane %v2853, 1
        %v2855 = vmax.f32 %v2853, %v2854
        %v2856 = vmax.f32 %v2835, %v2836
        %v2857 = vrot.slane %v2856, 4
        %v2858 = vmax.f32 %v2856, %v2857
        %v2859 = vrot.slane %v2858, 2
        %v2860 = vmax.f32 %v2858, %v2859
        %v2861 = vrot.slane %v2860, 1
        %v2862 = vmax.f32 %v2860, %v2861
        %v2863 = vmax.f32 %v2837, %v2838
        %v2864 = vrot.slane %v2863, 4
        %v2865 = vmax.f32 %v2863, %v2864
        %v2866 = vrot.slane %v2865, 2
        %v2867 = vmax.f32 %v2865, %v2866
        %v2868 = vrot.slane %v2867, 1
        %v2869 = vmax.f32 %v2867, %v2868
        %v2870 = vmax.f32 %v2839, %v2840
        %v2871 = vrot.slane %v2870, 4
        %v2872 = vmax.f32 %v2870, %v2871
        %v2873 = vrot.slane %v2872, 2
        %v2874 = vmax.f32 %v2872, %v2873
        %v2875 = vrot.slane %v2874, 1
        %v2876 = vmax.f32 %v2874, %v2875
        %v2877 = vmax.f32 %v2841, %v2842
        %v2878 = vrot.slane %v2877, 4
        %v2879 = vmax.f32 %v2877, %v2878
        %v2880 = vrot.slane %v2879, 2
        %v2881 = vmax.f32 %v2879, %v2880
        %v2882 = vrot.slane %v2881, 1
        %v2883 = vmax.f32 %v2881, %v2882
        %v2884 = vmax.f32 %v2843, %v2844
        %v2885 = vrot.slane %v2884, 4
        %v2886 = vmax.f32 %v2884, %v2885
        %v2887 = vrot.slane %v2886, 2
        %v2888 = vmax.f32 %v2886, %v2887
        %v2889 = vrot.slane %v2888, 1
        %v2890 = vmax.f32 %v2888, %v2889
        %v2891 = vmax.f32 %v2845, %v2846
        %v2892 = vrot.slane %v2891, 4
        %v2893 = vmax.f32 %v2891, %v2892
        %v2894 = vrot.slane %v2893, 2
        %v2895 = vmax.f32 %v2893, %v2894
        %v2896 = vrot.slane %v2895, 1
        %v2897 = vmax.f32 %v2895, %v2896
        %v2898 = vmax.f32 %v2847, %v2848
        %v2899 = vrot.slane %v2898, 4
        %v2900 = vmax.f32 %v2898, %v2899
        %v2901 = vrot.slane %v2900, 2
        %v2902 = vmax.f32 %v2900, %v2901
        %v2903 = vrot.slane %v2902, 1
        %v2904 = vmax.f32 %v2902, %v2903
        %vm2913 = vcmask 1041409
        %v2914 = vsel %vm2913, %v1213, %v1206
        %vm2915 = vcmask 1042434
        %v2916 = vsel %vm2915, %v1220, %v2914
        %vm2917 = vcmask 1043459
        %v2918 = vsel %vm2917, %v1227, %v2916
        %vm2919 = vcmask 1044484
        %v2920 = vsel %vm2919, %v1234, %v2918
        %vm2921 = vcmask 1045509
        %v2922 = vsel %vm2921, %v1241, %v2920
        %vm2923 = vcmask 1046534
        %v2924 = vsel %vm2923, %v1248, %v2922
        %vm2925 = vcmask 1047559
        %v2926 = vsel %vm2925, %v1255, %v2924
        %v2936 = vsel %vm2913, %v1933, %v1926
        %v2937 = vsel %vm2915, %v1940, %v2936
        %v2938 = vsel %vm2917, %v1947, %v2937
        %v2939 = vsel %vm2919, %v1954, %v2938
        %v2940 = vsel %vm2921, %v1961, %v2939
        %v2941 = vsel %vm2923, %v1968, %v2940
        %v2942 = vsel %vm2925, %v1975, %v2941
        %v2952 = vsel %vm2913, %v2862, %v2855
        %v2953 = vsel %vm2915, %v2869, %v2952
        %v2954 = vsel %vm2917, %v2876, %v2953
        %v2955 = vsel %vm2919, %v2883, %v2954
        %v2956 = vsel %vm2921, %v2890, %v2955
        %v2957 = vsel %vm2923, %v2897, %v2956
        %v2958 = vsel %vm2925, %v2904, %v2957
        %v2960 = vld [vmem:[%s6] sm:$0x1]
        %v2961 = vpack.c.bf16 %v2926, %v2926
        %v2962 = vpack.c.bf16 %v2942, %v2942
        %v2963 = vpack.c.bf16 %v2958, %v2958
        %v2964 = vld [vmem:[#allocation10] sm:$0xf]
        %v2965 = vld [vmem:[#allocation10 + $0x4] sm:$0xf]
        %v2966 = vld [vmem:[#allocation10 + $0x8] sm:$0xf]
        %v2967 = vld [vmem:[#allocation10 + $0xc] sm:$0xf]
        %v2968 = vld [vmem:[#allocation10 + $0x10] sm:$0xf]
        %v2969 = vld [vmem:[#allocation10 + $0x14] sm:$0xf]
        %v2970 = vld [vmem:[#allocation10 + $0x18] sm:$0xf]
        %v2971 = vld [vmem:[#allocation10 + $0x1c] sm:$0xf]
        %v2972 = vld [vmem:[#allocation10 + $0x20] sm:$0xf]
        %v2973 = vld [vmem:[#allocation10 + $0x24] sm:$0xf]
        %v2974 = vld [vmem:[#allocation10 + $0x28] sm:$0xf]
        %v2975 = vld [vmem:[#allocation10 + $0x2c] sm:$0xf]
        %v2976 = vld [vmem:[#allocation10 + $0x30] sm:$0xf]
        %v2977 = vld [vmem:[#allocation10 + $0x34] sm:$0xf]
        %v2978 = vld [vmem:[#allocation10 + $0x38] sm:$0xf]
        %v2979 = vld [vmem:[#allocation10 + $0x3c] sm:$0xf]
        %v2980 = vld [vmem:[#allocation10 + $0x40] sm:$0xf]
        %v2981 = vld [vmem:[#allocation10 + $0x44] sm:$0xf]
        %v2982 = vld [vmem:[#allocation10 + $0x48] sm:$0xf]
        %v2983 = vld [vmem:[#allocation10 + $0x4c] sm:$0xf]
        %v2984 = vld [vmem:[#allocation10 + $0x50] sm:$0xf]
        %v2985 = vld [vmem:[#allocation10 + $0x54] sm:$0xf]
        %v2986 = vld [vmem:[#allocation10 + $0x58] sm:$0xf]
        %v2987 = vld [vmem:[#allocation10 + $0x5c] sm:$0xf]
        %v2988 = vld [vmem:[#allocation10 + $0x60] sm:$0xf]
        %v2989 = vld [vmem:[#allocation10 + $0x64] sm:$0xf]
        %v2990 = vld [vmem:[#allocation10 + $0x68] sm:$0xf]
        %v2991 = vld [vmem:[#allocation10 + $0x6c] sm:$0xf]
        %v2992 = vld [vmem:[#allocation10 + $0x70] sm:$0xf]
        %v2993 = vld [vmem:[#allocation10 + $0x74] sm:$0xf]
        %v2994 = vld [vmem:[#allocation10 + $0x78] sm:$0xf]
        %v2995 = vld [vmem:[#allocation10 + $0x7c] sm:$0xf]
        %v2996 = vld [vmem:[#allocation10 + $0x80] sm:$0xf]
        %v2997 = vld [vmem:[#allocation10 + $0x84] sm:$0xf]
        %v2998 = vld [vmem:[#allocation10 + $0x88] sm:$0xf]
        %v2999 = vld [vmem:[#allocation10 + $0x8c] sm:$0xf]
        %v3000 = vld [vmem:[#allocation10 + $0x90] sm:$0xf]
        %v3001 = vld [vmem:[#allocation10 + $0x94] sm:$0xf]
        %v3002 = vld [vmem:[#allocation10 + $0x98] sm:$0xf]
        %v3003 = vld [vmem:[#allocation10 + $0x9c] sm:$0xf]
        %v3004 = vld [vmem:[#allocation10 + $0xa0] sm:$0xf]
        %v3005 = vld [vmem:[#allocation10 + $0xa4] sm:$0xf]
        %v3006 = vld [vmem:[#allocation10 + $0xa8] sm:$0xf]
        %v3007 = vld [vmem:[#allocation10 + $0xac] sm:$0xf]
        %v3008 = vld [vmem:[#allocation10 + $0xb0] sm:$0xf]
        %v3009 = vld [vmem:[#allocation10 + $0xb4] sm:$0xf]
        %v3010 = vld [vmem:[#allocation10 + $0xb8] sm:$0xf]
        %v3011 = vld [vmem:[#allocation10 + $0xbc] sm:$0xf]
        %v3060 = vunpack.c.l.b16 %v2964
        %v3061 = vunpack.c.l.b16 %v2965
        %v3062 = vunpack.c.l.b16 %v2966
        %v3063 = vunpack.c.l.b16 %v2967
        %v3064 = vunpack.c.l.b16 %v2968
        %v3065 = vunpack.c.l.b16 %v2969
        %v3066 = vunpack.c.l.b16 %v2970
        %v3067 = vunpack.c.l.b16 %v2971
        %v3068 = vunpack.c.l.b16 %v2972
        %v3069 = vunpack.c.l.b16 %v2973
        %v3070 = vunpack.c.l.b16 %v2974
        %v3071 = vunpack.c.l.b16 %v2975
        %v3072 = vunpack.c.l.b16 %v2976
        %v3073 = vunpack.c.l.b16 %v2977
        %v3074 = vunpack.c.l.b16 %v2978
        %v3075 = vunpack.c.l.b16 %v2979
        %v3076 = vunpack.c.l.b16 %v2980
        %v3077 = vunpack.c.l.b16 %v2981
        %v3078 = vunpack.c.l.b16 %v2982
        %v3079 = vunpack.c.l.b16 %v2983
        %v3080 = vunpack.c.l.b16 %v2984
        %v3081 = vunpack.c.l.b16 %v2985
        %v3082 = vunpack.c.l.b16 %v2986
        %v3083 = vunpack.c.l.b16 %v2987
        %v3084 = vunpack.c.l.b16 %v2988
        %v3085 = vunpack.c.l.b16 %v2989
        %v3086 = vunpack.c.l.b16 %v2990
        %v3087 = vunpack.c.l.b16 %v2991
        %v3088 = vunpack.c.l.b16 %v2992
        %v3089 = vunpack.c.l.b16 %v2993
        %v3090 = vunpack.c.l.b16 %v2994
        %v3091 = vunpack.c.l.b16 %v2995
        %v3092 = vunpack.c.l.b16 %v2996
        %v3093 = vunpack.c.l.b16 %v2997
        %v3094 = vunpack.c.l.b16 %v2998
        %v3095 = vunpack.c.l.b16 %v2999
        %v3096 = vunpack.c.l.b16 %v3000
        %v3097 = vunpack.c.l.b16 %v3001
        %v3098 = vunpack.c.l.b16 %v3002
        %v3099 = vunpack.c.l.b16 %v3003
        %v3100 = vunpack.c.l.b16 %v3004
        %v3101 = vunpack.c.l.b16 %v3005
        %v3102 = vunpack.c.l.b16 %v3006
        %v3103 = vunpack.c.l.b16 %v3007
        %v3104 = vunpack.c.l.b16 %v3008
        %v3105 = vunpack.c.l.b16 %v3009
        %v3106 = vunpack.c.l.b16 %v3010
        %v3107 = vunpack.c.l.b16 %v3011
        %v3108 = vpack.c.b16 %v3061, %v3060
        %v3109 = vpack.c.b16 %v3063, %v3062
        %v3110 = vpack.c.b16 %v3065, %v3064
        %v3111 = vpack.c.b16 %v3067, %v3066
        %v3112 = vpack.c.b16 %v3069, %v3068
        %v3113 = vpack.c.b16 %v3071, %v3070
        %v3114 = vpack.c.b16 %v3073, %v3072
        %v3115 = vpack.c.b16 %v3075, %v3074
        %v3116 = vpack.c.b16 %v3077, %v3076
        %v3117 = vpack.c.b16 %v3079, %v3078
        %v3118 = vpack.c.b16 %v3081, %v3080
        %v3119 = vpack.c.b16 %v3083, %v3082
        %v3120 = vpack.c.b16 %v3085, %v3084
        %v3121 = vpack.c.b16 %v3087, %v3086
        %v3122 = vpack.c.b16 %v3089, %v3088
        %v3123 = vpack.c.b16 %v3091, %v3090
        %v3124 = vpack.c.b16 %v3093, %v3092
        %v3125 = vpack.c.b16 %v3095, %v3094
        %v3126 = vpack.c.b16 %v3097, %v3096
        %v3127 = vpack.c.b16 %v3099, %v3098
        %v3128 = vpack.c.b16 %v3101, %v3100
        %v3129 = vpack.c.b16 %v3103, %v3102
        %v3130 = vpack.c.b16 %v3105, %v3104
        %v3131 = vpack.c.b16 %v3107, %v3106
        %3156 = vmatprep.subr.bf16.mxu0 0
        %3157 = vmatpush1.bf16.msra.mxu0 %v3115
        %3158 = vmatprep.subr.bf16.mxu0 0
        %3159 = vmatpush1.bf16.msra.mxu0 %v3114
        %3160 = vmatprep.subr.bf16.mxu0 0
        %3161 = vmatpush1.bf16.msra.mxu0 %v3113
        %3162 = vmatprep.subr.bf16.mxu0 0
        %3163 = vmatpush1.bf16.msra.mxu0 %v3112
        %3164 = vmatprep.subr.bf16.mxu0 0
        %3165 = vmatpush1.bf16.msra.mxu0 %v3111
        %3166 = vmatprep.subr.bf16.mxu0 0
        %3167 = vmatpush1.bf16.msra.mxu0 %v3110
        %3168 = vmatprep.subr.bf16.mxu0 0
        %3169 = vmatpush1.bf16.msra.mxu0 %v3109
        %3170 = vmatprep.subr.bf16.mxu0 0
        %3171 = vmatpush1.bf16.msra.mxu0 %v3108
        %3172 = vmatprep.subr.bf16.mxu0 0
        %3173 = vmatpush2.bf16.msra.mxu0 %v3123
        %3174 = vmatprep.subr.bf16.mxu0 0
        %3175 = vmatpush2.bf16.msra.mxu0 %v3122
        %3176 = vmatprep.subr.bf16.mxu0 0
        %3177 = vmatpush2.bf16.msra.mxu0 %v3121
        %3178 = vmatprep.subr.bf16.mxu0 0
        %3179 = vmatpush2.bf16.msra.mxu0 %v3120
        %3180 = vmatprep.subr.bf16.mxu0 0
        %3181 = vmatpush2.bf16.msra.mxu0 %v3119
        %3182 = vmatprep.subr.bf16.mxu0 0
        %3183 = vmatpush2.bf16.msra.mxu0 %v3118
        %3184 = vmatprep.subr.bf16.mxu0 0
        %3185 = vmatpush2.bf16.msra.mxu0 %v3117
        %3186 = vmatprep.subr.bf16.mxu0 0
        %3187 = vmatpush2.bf16.msra.mxu0 %v3116
        %3188 = vmatprep.mubr.bf16.mxu0 %v2962
        %3189 = vmatmul.mubr.bf16.gmra.mxu0 %v2961
        %v3190 = vpop.f32.mrf.mxu0
        %v3191 = vadd.f32 0.0, %v3190
        %v3192 = vpop.f32.mrf.mxu0
        %v3193 = vpop.f32.mrf.mxu0
        %v3194 = vpop.f32.mrf.mxu0
        %3195 = vdwg.mxu0
        %3196 = vmatprep.subr.bf16.mxu0 0
        %3197 = vmatpush1.bf16.msra.mxu0 %v3131
        %3198 = vmatprep.subr.bf16.mxu0 0
        %3199 = vmatpush1.bf16.msra.mxu0 %v3130
        %3200 = vmatprep.subr.bf16.mxu0 0
        %3201 = vmatpush1.bf16.msra.mxu0 %v3129
        %3202 = vmatprep.subr.bf16.mxu0 0
        %3203 = vmatpush1.bf16.msra.mxu0 %v3128
        %3204 = vmatprep.subr.bf16.mxu0 0
        %3205 = vmatpush1.bf16.msra.mxu0 %v3127
        %3206 = vmatprep.subr.bf16.mxu0 0
        %3207 = vmatpush1.bf16.msra.mxu0 %v3126
        %3208 = vmatprep.subr.bf16.mxu0 0
        %3209 = vmatpush1.bf16.msra.mxu0 %v3125
        %3210 = vmatprep.subr.bf16.mxu0 0
        %3211 = vmatpush1.bf16.msra.mxu0 %v3124
        %3212 = vmatprep.subr.bf16.mxu0 0
        %3213 = vmatpush2.bf16.msra.mxu0 0
        %3214 = vmatprep.subr.bf16.mxu0 0
        %3215 = vmatpush2.bf16.msra.mxu0 0
        %3216 = vmatprep.subr.bf16.mxu0 0
        %3217 = vmatpush2.bf16.msra.mxu0 0
        %3218 = vmatprep.subr.bf16.mxu0 0
        %3219 = vmatpush2.bf16.msra.mxu0 0
        %3220 = vmatprep.subr.bf16.mxu0 0
        %3221 = vmatpush2.bf16.msra.mxu0 0
        %3222 = vmatprep.subr.bf16.mxu0 0
        %3223 = vmatpush2.bf16.msra.mxu0 0
        %3224 = vmatprep.subr.bf16.mxu0 0
        %3225 = vmatpush2.bf16.msra.mxu0 0
        %3226 = vmatprep.subr.bf16.mxu0 0
        %3227 = vmatpush2.bf16.msra.mxu0 0
        %3228 = vmatprep.mubr.bf16.mxu0 0
        %3229 = vmatmul.mubr.bf16.gmra.mxu0 %v2963
        %v3230 = vpop.f32.mrf.mxu0
        %v3231 = vadd.f32 %v3191, %v3230
        %v3232 = vpop.f32.mrf.mxu0
        %v3233 = vpop.f32.mrf.mxu0
        %v3234 = vpop.f32.mrf.mxu0
        %3235 = vdwg.mxu0
        %v3237 = vlaneseq
        %v3238 = vshrl.u32 %v3237, 7
        %v3239 = vsub.s32 0, %v3238
        %v3240 = vrot.slane %v2960, %v3239
        %v3242 = vadd.f32 %v3240, %v3231
        %3243 = vst [vmem:[%s355] sm:$0xff] %v3242
        %s3244 = sand.u32 %s186, 1
        %s3245 = scalar_lea.sflag [#allocation4], %s3244
        %s3246 = sand.u32 %s186, 1
        %s3247 = smul.addr %s3246, 8
        %s3248 = scalar_lea.vmem [#allocation11], %s3247
        // Predicated region
        $region69: #{tpu_custom_call.1} parent=47 // pred_check
          %p3249 = pneg %p196
        $region70: #{tpu_custom_call.1} parent=47 // pred_check_branch
          %3251 = sbr.rel (%p3249) target = $region72
        $region71: #{tpu_custom_call.1} parent=47 // pred_region
          %s3253 = ssub.s32 128, 128
          %3254 = vsyncadd %s3245, %s3253
          %s3255 = smul.addr %s26, 128
          %s3256 = scalar_lea.hbm %s7, %s3255
          %s3258 = sshll.u32 %s3248, 4
          %s3259 = int_to_ptr.vmem [resolvable:$true] %s3258
          %3261 = dma.vmem_to_hbm [thread:$0]  %s3259, 128, %s3256, %s3245
        $region72: #{tpu_custom_call.1} parent=47 // pred_fallthru
          _
      $region48: #{tpu_custom_call.1} parent=5 // pred_fallthru
        _
      %p3262 = scmp.le.s32.totalorder 2, %s21
      // Predicated region
      $region73: #{tpu_custom_call.1} parent=5 // pred_check
        %p3263 = pneg %p3262
      $region74: #{tpu_custom_call.1} parent=5 // pred_check_branch
        %3265 = sbr.rel (%p3263) target = $region76
      $region75: #{tpu_custom_call.1} parent=5 // pred_region
        %s3266 = ssub.s32 %s21, 2
        // Predicated region
        $region77: #{tpu_custom_call.1} parent=75 // pred_check
          %p3267 = pneg %p202
        $region78: #{tpu_custom_call.1} parent=75 // pred_check_branch
          %3269 = sbr.rel (%p3267) target = $region80
        $region79: #{tpu_custom_call.1} parent=75 // pred_region
          %s3270 = sand.u32 %s187, 1
          %s3271 = scalar_lea.sflag [#allocation4], %s3270
          %s3272 = sand.u32 %s187, 1
          %s3273 = smul.addr %s3272, 8
          %s3274 = scalar_lea.vmem [#allocation11], %s3273
          %3275 = dma.done %s3271, 128
        $region80: #{tpu_custom_call.1} parent=75 // pred_fallthru
          _
      $region76: #{tpu_custom_call.1} parent=5 // pred_fallthru
        _
    $region6: #{tpu_custom_call.1} parent=1 // loop_footer
      %s25 = sadd.s32 1, %s21
    $region7: #{tpu_custom_call.1} parent=1 // loop_footer_branch
      %20 = sbr.rel target = $region3
    $region8: #{tpu_custom_call.1} parent=1 // loop_exit
      _
    %3276 = vsyncpa [#allocation3], 1
    %s3277 = scalar_lea.sflag [#allocation3], 1
    %3278 = vsyncpa %s3277, 1
    %3279 = vsyncpa [#allocation6], 1
    %3280 = vsyncpa [#allocation9], 1
    %3281 = vsyncpa [#allocation4], 1
    %s3282 = scalar_lea.sflag [#allocation4], 1
    %3283 = vsyncpa %s3282, 1

</llo_original>
